<compile_context>
chip_gen: v7x
topology: tpu7x:2x2x1
jax: 0.10.0
libtpu: 0.0.40
codegen_flags: <defaults>
</compile_context>

<pallas_src>
import functools

import jax
import jax.numpy as jnp
import numpy as np
from jax.experimental import pallas as pl
from jax.experimental.pallas import tpu as pltpu

INPUT = 256
HIDDEN = 128
T = 7
NCLASS = 36
NPAD = 128          # output columns padded to a full lane group
NCHAIN = 2          # independent half-tile chains interleaved per grid step


def _cdiv(a, b):
    return (a + b - 1) // b


def _round_up(x, m):
    return ((x + m - 1) // m) * m


def _default_bf16_gates():
    """bf16 EUP nonlinearities only on parts with a bf16 VPU/EUP path."""
    try:
        kind = jax.devices()[0].device_kind.lower()
    except Exception:  # pragma: no cover - no device info
        return False
    return ("v6" in kind) or ("v7" in kind) or ("7x" in kind)


def decoder_kernel(x_ref,
                   wih0_ref, whh0_ref, b0_ref,
                   w1_ref, b1_ref,
                   wout_ref, bout_ref,
                   out_ref, *, gate_dtype):
    """Full 2-layer LSTM over T=7 steps + fused, lane-dense output projection.

    x_ref:    (tb, 256)   f32
    wih0_ref: (256, 512)  bf16   (W_ih layer0, transposed; gate order i,f,g,o)
    whh0_ref: (128, 512)  bf16
    b0_ref:   (1, 512)    f32    (= b_ih0 + b_hh0)
    w1_ref:   (256, 512)  bf16   (= [W_ih1; W_hh1] transposed, row-concat)
    b1_ref:   (1, 512)    f32    (= b_ih1 + b_hh1)
    wout_ref: (128, 128)  bf16   (W_out transposed, zero-padded 36 -> 128 cols)
    bout_ref: (1, 128)    f32    (zero-padded)
    out_ref:  (T, tb, 128) f32   (t-major; wrapper transposes/slices to (B,7,36))
    """
    f32 = jnp.float32
    bf16 = jnp.bfloat16
    tb = x_ref.shape[0]
    hb = tb // NCHAIN            # tile is a multiple of 16 -> hb multiple of 8

    wih0 = wih0_ref[...]
    whh0 = whh0_ref[...]
    w1 = w1_ref[...]
    wout = wout_ref[...]

    x = x_ref[...].astype(bf16)
    # Input drive to layer 0 is identical at every timestep -> one hoisted
    # K=256 matmul over the full tile, then split per half-chain.
    xg_all = jnp.dot(x, wih0, preferred_element_type=f32) + b0_ref[...]
    xg = [xg_all[p * hb:(p + 1) * hb] for p in range(NCHAIN)]

    # Hoisted bias broadcast (JAX does not CSE broadcast_in_dim).
    b1_b = jnp.broadcast_to(b1_ref[...], (hb, 4 * HIDDEN))

    def cell(gates, c):
        # Nonlinearities in gate_dtype (bf16 on v6e/v7x halves EUP time);
        # c-state accumulation stays f32. Returns h already cast to bf16,
        # which is reused for the next step's matmuls and the output proj.
        g4 = gates.astype(gate_dtype)
        i = jax.nn.sigmoid(g4[:, 0 * HIDDEN:1 * HIDDEN])
        f = jax.nn.sigmoid(g4[:, 1 * HIDDEN:2 * HIDDEN])
        g = jnp.tanh(g4[:, 2 * HIDDEN:3 * HIDDEN])
        o = jax.nn.sigmoid(g4[:, 3 * HIDDEN:4 * HIDDEN])
        c_new = f.astype(f32) * c + i.astype(f32) * g.astype(f32)
        h_bf = (o * jnp.tanh(c_new.astype(gate_dtype))).astype(bf16)
        return h_bf, c_new

    # Two independent chains -> MXU work of one chain overlaps EUP/VPU work of
    # the other inside the same unrolled basic block.
    h0b = [jnp.zeros((hb, HIDDEN), bf16) for _ in range(NCHAIN)]
    c0 = [jnp.zeros((hb, HIDDEN), f32) for _ in range(NCHAIN)]
    h1b = [jnp.zeros((hb, HIDDEN), bf16) for _ in range(NCHAIN)]
    c1 = [jnp.zeros((hb, HIDDEN), f32) for _ in range(NCHAIN)]
    h1_steps = [[] for _ in range(NCHAIN)]

    # T=7 is tiny and static -> unrolled Python loop.
    for _ in range(T):
        for p in range(NCHAIN):
            # Layer 0: recurrent part only (input part hoisted above).
            g0 = xg[p] + jnp.dot(h0b[p], whh0, preferred_element_type=f32)
            h0b[p], c0[p] = cell(g0, c0[p])

            # Layer 1: K-fused matmul over [h0; h1] (K=256 fills MXU depth).
            h_cat = jnp.concatenate([h0b[p], h1b[p]], axis=-1)
            g1 = jnp.dot(h_cat, w1, preferred_element_type=f32) + b1_b
            h1b[p], c1[p] = cell(g1, c1[p])
            h1_steps[p].append(h1b[p])   # already bf16

    # Deferred output projection: one (T*tb, 128) @ (128, 128) matmul and one
    # unmasked, lane-dense slab store (extra 92 zero columns sliced off in the
    # wrapper).
    h_all = jnp.concatenate(
        [h1_steps[p][t] for t in range(T) for p in range(NCHAIN)], axis=0)
    y_all = jnp.dot(h_all, wout, preferred_element_type=f32) + bout_ref[...]
    out_ref[...] = y_all.reshape(T, tb, NPAD).astype(out_ref.dtype)


def decoder_forward(x, kernel_params, *, tile_b=256, min_blocks=2,
                    bf16_gates=None):
    """x: any shape with total elements divisible by 256 (PyTorch reshapes to
    (-1, 1, 256)). Returns (B, 7, 36) float32."""
    x = jnp.asarray(x, jnp.float32).reshape(-1, INPUT)
    B = x.shape[0]

    # Padding-aware, megacore-friendly tiling: >= min_blocks grid steps, tile a
    # multiple of 16 so each of the two in-kernel half-chains is sublane
    # aligned; padding is at most 15 rows instead of up to a full tile.
    n_blocks = max(min_blocks, _cdiv(B, tile_b))
    tile = _round_up(_cdiv(B, n_blocks), 2 * 8)
    b_pad = _round_up(B, tile)
    if b_pad != B:
        x = jnp.pad(x, ((0, b_pad - B), (0, 0)))
    grid = (b_pad // tile,)

    if bf16_gates is None:
        bf16_gates = _default_bf16_gates()
    gate_dtype = jnp.bfloat16 if bf16_gates else jnp.float32

    (wih0, whh0, b0, w1, b1, wout, bout) = kernel_params
    kernel = functools.partial(decoder_kernel, gate_dtype=gate_dtype)

    out = pl.pallas_call(
        kernel,
        out_shape=jax.ShapeDtypeStruct((T, b_pad, NPAD), jnp.float32),
        grid_spec=pltpu.PrefetchScalarGridSpec(
            num_scalar_prefetch=0,
            grid=grid,
            in_specs=[
                pl.BlockSpec((tile, INPUT), lambda b: (b, 0)),
                pl.BlockSpec((INPUT, 4 * HIDDEN), lambda b: (0, 0)),
                pl.BlockSpec((HIDDEN, 4 * HIDDEN), lambda b: (0, 0)),
                pl.BlockSpec((1, 4 * HIDDEN), lambda b: (0, 0)),
                pl.BlockSpec((INPUT, 4 * HIDDEN), lambda b: (0, 0)),
                pl.BlockSpec((1, 4 * HIDDEN), lambda b: (0, 0)),
                pl.BlockSpec((HIDDEN, NPAD), lambda b: (0, 0)),
                pl.BlockSpec((1, NPAD), lambda b: (0, 0)),
            ],
            out_specs=pl.BlockSpec((T, tile, NPAD), lambda b: (0, b, 0)),
        ),
        compiler_params=pltpu.CompilerParams(
            dimension_semantics=("parallel",)),
    )(x, wih0, whh0, b0, w1, b1, wout, bout)

    # (T, b_pad, 128) -> (B, 7, 36); layout plumbing outside the kernel
    # (slice first so the transpose only touches the 36 real columns).
    return jnp.transpose(out[:, :B, :NCLASS], (1, 0, 2))


def init_params(key):
    """Canonical f32 parameters with the PyTorch module's shapes.

    nn.LSTM(256,128,num_layers=2): per layer W_ih (512,in), W_hh (512,128),
    b_ih (512,), b_hh (512,). nn.Linear(128,36): W (36,128), b (36,).
    """
    k = 1.0 / np.sqrt(HIDDEN)
    keys = jax.random.split(key, 10)
    u = lambda kk, shape: jax.random.uniform(kk, shape, jnp.float32, -k, k)

    wih0 = u(keys[0], (4 * HIDDEN, INPUT))
    whh0 = u(keys[1], (4 * HIDDEN, HIDDEN))
    bih0 = u(keys[2], (4 * HIDDEN,))
    bhh0 = u(keys[3], (4 * HIDDEN,))
    wih1 = u(keys[4], (4 * HIDDEN, HIDDEN))
    whh1 = u(keys[5], (4 * HIDDEN, HIDDEN))
    bih1 = u(keys[6], (4 * HIDDEN,))
    bhh1 = u(keys[7], (4 * HIDDEN,))
    wout = u(keys[8], (NCLASS, HIDDEN))
    bout = u(keys[9], (NCLASS,))
    return (wih0, whh0, bih0, bhh0, wih1, whh1, bih1, bhh1, wout, bout)


def pack_params(p):
    """f32 canonical params -> kernel layout (transposed, bf16, layer-1 fused,
    output weights zero-padded to 128 lane-dense columns)."""
    (wih0, whh0, bih0, bhh0, wih1, whh1, bih1, bhh1, wout, bout) = p
    bf = lambda a: a.astype(jnp.bfloat16)
    wout_p = jnp.pad(wout.T, ((0, 0), (0, NPAD - NCLASS)))        # (128, 128)
    bout_p = jnp.pad(bout[None, :], ((0, 0), (0, NPAD - NCLASS))) # (1, 128)
    return (
        bf(wih0.T),                                        # (256, 512)
        bf(whh0.T),                                        # (128, 512)
        (bih0 + bhh0)[None, :],                            # (1, 512) f32
        bf(jnp.concatenate([wih1.T, whh1.T], axis=0)),     # (256, 512)
        (bih1 + bhh1)[None, :],                            # (1, 512) f32
        bf(wout_p),                                        # (128, 128)
        bout_p,                                            # (1, 128) f32
    )


def decoder_reference(x, p):
    """Pure-JAX f32 reference replicating the PyTorch forward exactly."""
    (wih0, whh0, bih0, bhh0, wih1, whh1, bih1, bhh1, wout, bout) = p
    x = jnp.asarray(x, jnp.float32).reshape(-1, INPUT)
    B = x.shape[0]
    h0 = jnp.zeros((B, HIDDEN), jnp.float32)
    c0 = jnp.zeros((B, HIDDEN), jnp.float32)
    h1 = jnp.zeros((B, HIDDEN), jnp.float32)
    c1 = jnp.zeros((B, HIDDEN), jnp.float32)

    def cell(gates, c):
        i = jax.nn.sigmoid(gates[:, 0 * HIDDEN:1 * HIDDEN])
        f = jax.nn.sigmoid(gates[:, 1 * HIDDEN:2 * HIDDEN])
        g = jnp.tanh(gates[:, 2 * HIDDEN:3 * HIDDEN])
        o = jax.nn.sigmoid(gates[:, 3 * HIDDEN:4 * HIDDEN])
        c = f * c + i * g
        return o * jnp.tanh(c), c

    outs = []
    for _ in range(T):
        g0 = x @ wih0.T + h0 @ whh0.T + bih0 + bhh0
        h0, c0 = cell(g0, c0)
        g1 = h0 @ wih1.T + h1 @ whh1.T + bih1 + bhh1
        h1, c1 = cell(g1, c1)
        outs.append(h1 @ wout.T + bout)
    return jnp.stack(outs, axis=1)  # (B, 7, 36)


if __name__ == "__main__":
    key = jax.random.PRNGKey(0)
    pkey, xkey = jax.random.split(key)
    params_f32 = init_params(pkey)
    kparams = pack_params(params_f32)

    B = 32  # small test batch; wrapper picks a balanced >=2-block tiling
    x = jax.random.normal(xkey, (B, INPUT), jnp.float32)

    out = decoder_forward(x, kparams)
    out = jax.block_until_ready(out)
    assert out.shape == (B, T, NCLASS)

    ref = decoder_reference(x, params_f32)
    # bf16 MXU operands (+ bf16 EUP nonlinearities on v6e/v7x) -> relaxed
    # tolerance vs. the f32 reference.
    np.testing.assert_allclose(np.asarray(out), np.asarray(ref),
                               rtol=5e-2, atol=5e-2)
    print("KERNEL_OK")
</pallas_src>

<mosaic_0001>
module attributes {stable_mosaic.version = 11 : i64} {
  func.func @decoder_kernel(%arg0: i32, %arg1: memref<16x256xf32, #tpu.memory_space<vmem>>, %arg2: memref<256x512xbf16, #tpu.memory_space<vmem>>, %arg3: memref<128x512xbf16, #tpu.memory_space<vmem>>, %arg4: memref<1x512xf32, #tpu.memory_space<vmem>>, %arg5: memref<256x512xbf16, #tpu.memory_space<vmem>>, %arg6: memref<1x512xf32, #tpu.memory_space<vmem>>, %arg7: memref<128x128xbf16, #tpu.memory_space<vmem>>, %arg8: memref<1x128xf32, #tpu.memory_space<vmem>>, %arg9: memref<7x16x128xf32, #tpu.memory_space<vmem>>) attributes {dimension_semantics = [#tpu.dimension_semantics<parallel>], iteration_bounds = array<i64: 2>, scalar_prefetch = 0 : i64, scratch_operands = 0 : i64, tpu.core_type = #tpu.core_type<tc>, window_params = [{transform_indices = @transform_0, window_bounds = array<i64: 16, 256>}, {pipeline_mode = #tpu.pipeline_mode<synchronous>, transform_indices = @transform_1, window_bounds = array<i64: 256, 512>}, {pipeline_mode = #tpu.pipeline_mode<synchronous>, transform_indices = @transform_2, window_bounds = array<i64: 128, 512>}, {pipeline_mode = #tpu.pipeline_mode<synchronous>, transform_indices = @transform_3, window_bounds = array<i64: 1, 512>}, {pipeline_mode = #tpu.pipeline_mode<synchronous>, transform_indices = @transform_4, window_bounds = array<i64: 256, 512>}, {pipeline_mode = #tpu.pipeline_mode<synchronous>, transform_indices = @transform_5, window_bounds = array<i64: 1, 512>}, {pipeline_mode = #tpu.pipeline_mode<synchronous>, transform_indices = @transform_6, window_bounds = array<i64: 128, 128>}, {pipeline_mode = #tpu.pipeline_mode<synchronous>, transform_indices = @transform_7, window_bounds = array<i64: 1, 128>}, {transform_indices = @transform_8, window_bounds = array<i64: 7, 16, 128>}]} {
    %c0 = arith.constant 0 : index
    %c0_0 = arith.constant 0 : index
    %0 = vector.load %arg2[%c0, %c0_0] : memref<256x512xbf16, #tpu.memory_space<vmem>>, vector<256x512xbf16>
    %c0_1 = arith.constant 0 : index
    %c0_2 = arith.constant 0 : index
    %1 = vector.load %arg3[%c0_1, %c0_2] : memref<128x512xbf16, #tpu.memory_space<vmem>>, vector<128x512xbf16>
    %c0_3 = arith.constant 0 : index
    %c0_4 = arith.constant 0 : index
    %2 = vector.load %arg5[%c0_3, %c0_4] : memref<256x512xbf16, #tpu.memory_space<vmem>>, vector<256x512xbf16>
    %c0_5 = arith.constant 0 : index
    %c0_6 = arith.constant 0 : index
    %3 = vector.load %arg7[%c0_5, %c0_6] : memref<128x128xbf16, #tpu.memory_space<vmem>>, vector<128x128xbf16>
    %c0_7 = arith.constant 0 : index
    %c0_8 = arith.constant 0 : index
    %4 = vector.load %arg1[%c0_7, %c0_8] : memref<16x256xf32, #tpu.memory_space<vmem>>, vector<16x256xf32>
    %5 = arith.truncf %4 : vector<16x256xf32> to vector<16x256xbf16>
    %cst = arith.constant dense<0.000000e+00> : vector<16x512xf32>
    %6 = tpu.matmul %5, %0, %cst {dimension_numbers = #tpu.dot_dimension_numbers<[1], [0], [0], [1], [0, 0, 1, 1], [], []>} : vector<16x256xbf16>, vector<256x512xbf16>, vector<16x512xf32> -> vector<16x512xf32>
    %c0_9 = arith.constant 0 : index
    %c0_10 = arith.constant 0 : index
    %7 = vector.load %arg4[%c0_9, %c0_10] : memref<1x512xf32, #tpu.memory_space<vmem>>, vector<1x512xf32>
    %8 = vector.broadcast %7 : vector<1x512xf32> to vector<16x512xf32>
    %9 = arith.addf %6, %8 : vector<16x512xf32>
    %10 = vector.extract_strided_slice %9 {offsets = [0, 0], sizes = [8, 512], strides = [1, 1]} : vector<16x512xf32> to vector<8x512xf32>
    %11 = vector.extract_strided_slice %9 {offsets = [8, 0], sizes = [8, 512], strides = [1, 1]} : vector<16x512xf32> to vector<8x512xf32>
    %c0_11 = arith.constant 0 : index
    %c0_12 = arith.constant 0 : index
    %12 = vector.load %arg6[%c0_11, %c0_12] : memref<1x512xf32, #tpu.memory_space<vmem>>, vector<1x512xf32>
    %13 = vector.shape_cast %12 : vector<1x512xf32> to vector<1x512xf32>
    %14 = vector.broadcast %13 : vector<1x512xf32> to vector<8x512xf32>
    %cst_13 = arith.constant 0.000000e+00 : bf16
    %15 = vector.broadcast %cst_13 : bf16 to vector<8x128xbf16>
    %cst_14 = arith.constant 0.000000e+00 : bf16
    %16 = vector.broadcast %cst_14 : bf16 to vector<8x128xbf16>
    %cst_15 = arith.constant 0.000000e+00 : f32
    %17 = vector.broadcast %cst_15 : f32 to vector<8x128xf32>
    %cst_16 = arith.constant 0.000000e+00 : f32
    %18 = vector.broadcast %cst_16 : f32 to vector<8x128xf32>
    %cst_17 = arith.constant 0.000000e+00 : bf16
    %19 = vector.broadcast %cst_17 : bf16 to vector<8x128xbf16>
    %cst_18 = arith.constant 0.000000e+00 : bf16
    %20 = vector.broadcast %cst_18 : bf16 to vector<8x128xbf16>
    %cst_19 = arith.constant 0.000000e+00 : f32
    %21 = vector.broadcast %cst_19 : f32 to vector<8x128xf32>
    %cst_20 = arith.constant 0.000000e+00 : f32
    %22 = vector.broadcast %cst_20 : f32 to vector<8x128xf32>
    %cst_21 = arith.constant dense<0.000000e+00> : vector<8x512xf32>
    %23 = tpu.matmul %15, %1, %cst_21 {dimension_numbers = #tpu.dot_dimension_numbers<[1], [0], [0], [1], [0, 0, 1, 1], [], []>} : vector<8x128xbf16>, vector<128x512xbf16>, vector<8x512xf32> -> vector<8x512xf32>
    %24 = arith.addf %10, %23 : vector<8x512xf32>
    %25 = vector.extract_strided_slice %24 {offsets = [0, 0], sizes = [8, 128], strides = [1, 1]} : vector<8x512xf32> to vector<8x128xf32>
    %26 = arith.negf %25 : vector<8x128xf32>
    %27 = math.exp %26 : vector<8x128xf32>
    %cst_22 = arith.constant 1.000000e+00 : f32
    %28 = vector.broadcast %cst_22 : f32 to vector<8x128xf32>
    %29 = arith.addf %28, %27 : vector<8x128xf32>
    %30 = arith.divf %28, %29 : vector<8x128xf32>
    %31 = vector.extract_strided_slice %24 {offsets = [0, 128], sizes = [8, 128], strides = [1, 1]} : vector<8x512xf32> to vector<8x128xf32>
    %32 = arith.negf %31 : vector<8x128xf32>
    %33 = math.exp %32 : vector<8x128xf32>
    %cst_23 = arith.constant 1.000000e+00 : f32
    %34 = vector.broadcast %cst_23 : f32 to vector<8x128xf32>
    %35 = arith.addf %34, %33 : vector<8x128xf32>
    %36 = arith.divf %34, %35 : vector<8x128xf32>
    %37 = vector.extract_strided_slice %24 {offsets = [0, 256], sizes = [8, 128], strides = [1, 1]} : vector<8x512xf32> to vector<8x128xf32>
    %38 = math.tanh %37 : vector<8x128xf32>
    %39 = vector.extract_strided_slice %24 {offsets = [0, 384], sizes = [8, 128], strides = [1, 1]} : vector<8x512xf32> to vector<8x128xf32>
    %40 = arith.negf %39 : vector<8x128xf32>
    %41 = math.exp %40 : vector<8x128xf32>
    %cst_24 = arith.constant 1.000000e+00 : f32
    %42 = vector.broadcast %cst_24 : f32 to vector<8x128xf32>
    %43 = arith.addf %42, %41 : vector<8x128xf32>
    %44 = arith.divf %42, %43 : vector<8x128xf32>
    %45 = arith.mulf %36, %17 : vector<8x128xf32>
    %46 = arith.mulf %30, %38 : vector<8x128xf32>
    %47 = arith.addf %45, %46 : vector<8x128xf32>
    %48 = math.tanh %47 : vector<8x128xf32>
    %49 = arith.mulf %44, %48 : vector<8x128xf32>
    %50 = arith.truncf %49 : vector<8x128xf32> to vector<8x128xbf16>
    %51 = tpu.concatenate %50, %19 in 1 : vector<8x128xbf16>, vector<8x128xbf16> -> vector<8x256xbf16>
    %cst_25 = arith.constant dense<0.000000e+00> : vector<8x512xf32>
    %52 = tpu.matmul %51, %2, %cst_25 {dimension_numbers = #tpu.dot_dimension_numbers<[1], [0], [0], [1], [0, 0, 1, 1], [], []>} : vector<8x256xbf16>, vector<256x512xbf16>, vector<8x512xf32> -> vector<8x512xf32>
    %53 = arith.addf %52, %14 : vector<8x512xf32>
    %54 = vector.extract_strided_slice %53 {offsets = [0, 0], sizes = [8, 128], strides = [1, 1]} : vector<8x512xf32> to vector<8x128xf32>
    %55 = arith.negf %54 : vector<8x128xf32>
    %56 = math.exp %55 : vector<8x128xf32>
    %cst_26 = arith.constant 1.000000e+00 : f32
    %57 = vector.broadcast %cst_26 : f32 to vector<8x128xf32>
    %58 = arith.addf %57, %56 : vector<8x128xf32>
    %59 = arith.divf %57, %58 : vector<8x128xf32>
    %60 = vector.extract_strided_slice %53 {offsets = [0, 128], sizes = [8, 128], strides = [1, 1]} : vector<8x512xf32> to vector<8x128xf32>
    %61 = arith.negf %60 : vector<8x128xf32>
    %62 = math.exp %61 : vector<8x128xf32>
    %cst_27 = arith.constant 1.000000e+00 : f32
    %63 = vector.broadcast %cst_27 : f32 to vector<8x128xf32>
    %64 = arith.addf %63, %62 : vector<8x128xf32>
    %65 = arith.divf %63, %64 : vector<8x128xf32>
    %66 = vector.extract_strided_slice %53 {offsets = [0, 256], sizes = [8, 128], strides = [1, 1]} : vector<8x512xf32> to vector<8x128xf32>
    %67 = math.tanh %66 : vector<8x128xf32>
    %68 = vector.extract_strided_slice %53 {offsets = [0, 384], sizes = [8, 128], strides = [1, 1]} : vector<8x512xf32> to vector<8x128xf32>
    %69 = arith.negf %68 : vector<8x128xf32>
    %70 = math.exp %69 : vector<8x128xf32>
    %cst_28 = arith.constant 1.000000e+00 : f32
    %71 = vector.broadcast %cst_28 : f32 to vector<8x128xf32>
    %72 = arith.addf %71, %70 : vector<8x128xf32>
    %73 = arith.divf %71, %72 : vector<8x128xf32>
    %74 = arith.mulf %65, %21 : vector<8x128xf32>
    %75 = arith.mulf %59, %67 : vector<8x128xf32>
    %76 = arith.addf %74, %75 : vector<8x128xf32>
    %77 = math.tanh %76 : vector<8x128xf32>
    %78 = arith.mulf %73, %77 : vector<8x128xf32>
    %79 = arith.truncf %78 : vector<8x128xf32> to vector<8x128xbf16>
    %cst_29 = arith.constant dense<0.000000e+00> : vector<8x512xf32>
    %80 = tpu.matmul %16, %1, %cst_29 {dimension_numbers = #tpu.dot_dimension_numbers<[1], [0], [0], [1], [0, 0, 1, 1], [], []>} : vector<8x128xbf16>, vector<128x512xbf16>, vector<8x512xf32> -> vector<8x512xf32>
    %81 = arith.addf %11, %80 : vector<8x512xf32>
    %82 = vector.extract_strided_slice %81 {offsets = [0, 0], sizes = [8, 128], strides = [1, 1]} : vector<8x512xf32> to vector<8x128xf32>
    %83 = arith.negf %82 : vector<8x128xf32>
    %84 = math.exp %83 : vector<8x128xf32>
    %cst_30 = arith.constant 1.000000e+00 : f32
    %85 = vector.broadcast %cst_30 : f32 to vector<8x128xf32>
    %86 = arith.addf %85, %84 : vector<8x128xf32>
    %87 = arith.divf %85, %86 : vector<8x128xf32>
    %88 = vector.extract_strided_slice %81 {offsets = [0, 128], sizes = [8, 128], strides = [1, 1]} : vector<8x512xf32> to vector<8x128xf32>
    %89 = arith.negf %88 : vector<8x128xf32>
    %90 = math.exp %89 : vector<8x128xf32>
    %cst_31 = arith.constant 1.000000e+00 : f32
    %91 = vector.broadcast %cst_31 : f32 to vector<8x128xf32>
    %92 = arith.addf %91, %90 : vector<8x128xf32>
    %93 = arith.divf %91, %92 : vector<8x128xf32>
    %94 = vector.extract_strided_slice %81 {offsets = [0, 256], sizes = [8, 128], strides = [1, 1]} : vector<8x512xf32> to vector<8x128xf32>
    %95 = math.tanh %94 : vector<8x128xf32>
    %96 = vector.extract_strided_slice %81 {offsets = [0, 384], sizes = [8, 128], strides = [1, 1]} : vector<8x512xf32> to vector<8x128xf32>
    %97 = arith.negf %96 : vector<8x128xf32>
    %98 = math.exp %97 : vector<8x128xf32>
    %cst_32 = arith.constant 1.000000e+00 : f32
    %99 = vector.broadcast %cst_32 : f32 to vector<8x128xf32>
    %100 = arith.addf %99, %98 : vector<8x128xf32>
    %101 = arith.divf %99, %100 : vector<8x128xf32>
    %102 = arith.mulf %93, %18 : vector<8x128xf32>
    %103 = arith.mulf %87, %95 : vector<8x128xf32>
    %104 = arith.addf %102, %103 : vector<8x128xf32>
    %105 = math.tanh %104 : vector<8x128xf32>
    %106 = arith.mulf %101, %105 : vector<8x128xf32>
    %107 = arith.truncf %106 : vector<8x128xf32> to vector<8x128xbf16>
    %108 = tpu.concatenate %107, %20 in 1 : vector<8x128xbf16>, vector<8x128xbf16> -> vector<8x256xbf16>
    %cst_33 = arith.constant dense<0.000000e+00> : vector<8x512xf32>
    %109 = tpu.matmul %108, %2, %cst_33 {dimension_numbers = #tpu.dot_dimension_numbers<[1], [0], [0], [1], [0, 0, 1, 1], [], []>} : vector<8x256xbf16>, vector<256x512xbf16>, vector<8x512xf32> -> vector<8x512xf32>
    %110 = arith.addf %109, %14 : vector<8x512xf32>
    %111 = vector.extract_strided_slice %110 {offsets = [0, 0], sizes = [8, 128], strides = [1, 1]} : vector<8x512xf32> to vector<8x128xf32>
    %112 = arith.negf %111 : vector<8x128xf32>
    %113 = math.exp %112 : vector<8x128xf32>
    %cst_34 = arith.constant 1.000000e+00 : f32
    %114 = vector.broadcast %cst_34 : f32 to vector<8x128xf32>
    %115 = arith.addf %114, %113 : vector<8x128xf32>
    %116 = arith.divf %114, %115 : vector<8x128xf32>
    %117 = vector.extract_strided_slice %110 {offsets = [0, 128], sizes = [8, 128], strides = [1, 1]} : vector<8x512xf32> to vector<8x128xf32>
    %118 = arith.negf %117 : vector<8x128xf32>
    %119 = math.exp %118 : vector<8x128xf32>
    %cst_35 = arith.constant 1.000000e+00 : f32
    %120 = vector.broadcast %cst_35 : f32 to vector<8x128xf32>
    %121 = arith.addf %120, %119 : vector<8x128xf32>
    %122 = arith.divf %120, %121 : vector<8x128xf32>
    %123 = vector.extract_strided_slice %110 {offsets = [0, 256], sizes = [8, 128], strides = [1, 1]} : vector<8x512xf32> to vector<8x128xf32>
    %124 = math.tanh %123 : vector<8x128xf32>
    %125 = vector.extract_strided_slice %110 {offsets = [0, 384], sizes = [8, 128], strides = [1, 1]} : vector<8x512xf32> to vector<8x128xf32>
    %126 = arith.negf %125 : vector<8x128xf32>
    %127 = math.exp %126 : vector<8x128xf32>
    %cst_36 = arith.constant 1.000000e+00 : f32
    %128 = vector.broadcast %cst_36 : f32 to vector<8x128xf32>
    %129 = arith.addf %128, %127 : vector<8x128xf32>
    %130 = arith.divf %128, %129 : vector<8x128xf32>
    %131 = arith.mulf %122, %22 : vector<8x128xf32>
    %132 = arith.mulf %116, %124 : vector<8x128xf32>
    %133 = arith.addf %131, %132 : vector<8x128xf32>
    %134 = math.tanh %133 : vector<8x128xf32>
    %135 = arith.mulf %130, %134 : vector<8x128xf32>
    %136 = arith.truncf %135 : vector<8x128xf32> to vector<8x128xbf16>
    %cst_37 = arith.constant dense<0.000000e+00> : vector<8x512xf32>
    %137 = tpu.matmul %50, %1, %cst_37 {dimension_numbers = #tpu.dot_dimension_numbers<[1], [0], [0], [1], [0, 0, 1, 1], [], []>} : vector<8x128xbf16>, vector<128x512xbf16>, vector<8x512xf32> -> vector<8x512xf32>
    %138 = arith.addf %10, %137 : vector<8x512xf32>
    %139 = vector.extract_strided_slice %138 {offsets = [0, 0], sizes = [8, 128], strides = [1, 1]} : vector<8x512xf32> to vector<8x128xf32>
    %140 = arith.negf %139 : vector<8x128xf32>
    %141 = math.exp %140 : vector<8x128xf32>
    %cst_38 = arith.constant 1.000000e+00 : f32
    %142 = vector.broadcast %cst_38 : f32 to vector<8x128xf32>
    %143 = arith.addf %142, %141 : vector<8x128xf32>
    %144 = arith.divf %142, %143 : vector<8x128xf32>
    %145 = vector.extract_strided_slice %138 {offsets = [0, 128], sizes = [8, 128], strides = [1, 1]} : vector<8x512xf32> to vector<8x128xf32>
    %146 = arith.negf %145 : vector<8x128xf32>
    %147 = math.exp %146 : vector<8x128xf32>
    %cst_39 = arith.constant 1.000000e+00 : f32
    %148 = vector.broadcast %cst_39 : f32 to vector<8x128xf32>
    %149 = arith.addf %148, %147 : vector<8x128xf32>
    %150 = arith.divf %148, %149 : vector<8x128xf32>
    %151 = vector.extract_strided_slice %138 {offsets = [0, 256], sizes = [8, 128], strides = [1, 1]} : vector<8x512xf32> to vector<8x128xf32>
    %152 = math.tanh %151 : vector<8x128xf32>
    %153 = vector.extract_strided_slice %138 {offsets = [0, 384], sizes = [8, 128], strides = [1, 1]} : vector<8x512xf32> to vector<8x128xf32>
    %154 = arith.negf %153 : vector<8x128xf32>
    %155 = math.exp %154 : vector<8x128xf32>
    %cst_40 = arith.constant 1.000000e+00 : f32
    %156 = vector.broadcast %cst_40 : f32 to vector<8x128xf32>
    %157 = arith.addf %156, %155 : vector<8x128xf32>
    %158 = arith.divf %156, %157 : vector<8x128xf32>
    %159 = arith.mulf %150, %47 : vector<8x128xf32>
    %160 = arith.mulf %144, %152 : vector<8x128xf32>
    %161 = arith.addf %159, %160 : vector<8x128xf32>
    %162 = math.tanh %161 : vector<8x128xf32>
    %163 = arith.mulf %158, %162 : vector<8x128xf32>
    %164 = arith.truncf %163 : vector<8x128xf32> to vector<8x128xbf16>
    %165 = tpu.concatenate %164, %79 in 1 : vector<8x128xbf16>, vector<8x128xbf16> -> vector<8x256xbf16>
    %cst_41 = arith.constant dense<0.000000e+00> : vector<8x512xf32>
    %166 = tpu.matmul %165, %2, %cst_41 {dimension_numbers = #tpu.dot_dimension_numbers<[1], [0], [0], [1], [0, 0, 1, 1], [], []>} : vector<8x256xbf16>, vector<256x512xbf16>, vector<8x512xf32> -> vector<8x512xf32>
    %167 = arith.addf %166, %14 : vector<8x512xf32>
    %168 = vector.extract_strided_slice %167 {offsets = [0, 0], sizes = [8, 128], strides = [1, 1]} : vector<8x512xf32> to vector<8x128xf32>
    %169 = arith.negf %168 : vector<8x128xf32>
    %170 = math.exp %169 : vector<8x128xf32>
    %cst_42 = arith.constant 1.000000e+00 : f32
    %171 = vector.broadcast %cst_42 : f32 to vector<8x128xf32>
    %172 = arith.addf %171, %170 : vector<8x128xf32>
    %173 = arith.divf %171, %172 : vector<8x128xf32>
    %174 = vector.extract_strided_slice %167 {offsets = [0, 128], sizes = [8, 128], strides = [1, 1]} : vector<8x512xf32> to vector<8x128xf32>
    %175 = arith.negf %174 : vector<8x128xf32>
    %176 = math.exp %175 : vector<8x128xf32>
    %cst_43 = arith.constant 1.000000e+00 : f32
    %177 = vector.broadcast %cst_43 : f32 to vector<8x128xf32>
    %178 = arith.addf %177, %176 : vector<8x128xf32>
    %179 = arith.divf %177, %178 : vector<8x128xf32>
    %180 = vector.extract_strided_slice %167 {offsets = [0, 256], sizes = [8, 128], strides = [1, 1]} : vector<8x512xf32> to vector<8x128xf32>
    %181 = math.tanh %180 : vector<8x128xf32>
    %182 = vector.extract_strided_slice %167 {offsets = [0, 384], sizes = [8, 128], strides = [1, 1]} : vector<8x512xf32> to vector<8x128xf32>
    %183 = arith.negf %182 : vector<8x128xf32>
    %184 = math.exp %183 : vector<8x128xf32>
    %cst_44 = arith.constant 1.000000e+00 : f32
    %185 = vector.broadcast %cst_44 : f32 to vector<8x128xf32>
    %186 = arith.addf %185, %184 : vector<8x128xf32>
    %187 = arith.divf %185, %186 : vector<8x128xf32>
    %188 = arith.mulf %179, %76 : vector<8x128xf32>
    %189 = arith.mulf %173, %181 : vector<8x128xf32>
    %190 = arith.addf %188, %189 : vector<8x128xf32>
    %191 = math.tanh %190 : vector<8x128xf32>
    %192 = arith.mulf %187, %191 : vector<8x128xf32>
    %193 = arith.truncf %192 : vector<8x128xf32> to vector<8x128xbf16>
    %cst_45 = arith.constant dense<0.000000e+00> : vector<8x512xf32>
    %194 = tpu.matmul %107, %1, %cst_45 {dimension_numbers = #tpu.dot_dimension_numbers<[1], [0], [0], [1], [0, 0, 1, 1], [], []>} : vector<8x128xbf16>, vector<128x512xbf16>, vector<8x512xf32> -> vector<8x512xf32>
    %195 = arith.addf %11, %194 : vector<8x512xf32>
    %196 = vector.extract_strided_slice %195 {offsets = [0, 0], sizes = [8, 128], strides = [1, 1]} : vector<8x512xf32> to vector<8x128xf32>
    %197 = arith.negf %196 : vector<8x128xf32>
    %198 = math.exp %197 : vector<8x128xf32>
    %cst_46 = arith.constant 1.000000e+00 : f32
    %199 = vector.broadcast %cst_46 : f32 to vector<8x128xf32>
    %200 = arith.addf %199, %198 : vector<8x128xf32>
    %201 = arith.divf %199, %200 : vector<8x128xf32>
    %202 = vector.extract_strided_slice %195 {offsets = [0, 128], sizes = [8, 128], strides = [1, 1]} : vector<8x512xf32> to vector<8x128xf32>
    %203 = arith.negf %202 : vector<8x128xf32>
    %204 = math.exp %203 : vector<8x128xf32>
    %cst_47 = arith.constant 1.000000e+00 : f32
    %205 = vector.broadcast %cst_47 : f32 to vector<8x128xf32>
    %206 = arith.addf %205, %204 : vector<8x128xf32>
    %207 = arith.divf %205, %206 : vector<8x128xf32>
    %208 = vector.extract_strided_slice %195 {offsets = [0, 256], sizes = [8, 128], strides = [1, 1]} : vector<8x512xf32> to vector<8x128xf32>
    %209 = math.tanh %208 : vector<8x128xf32>
    %210 = vector.extract_strided_slice %195 {offsets = [0, 384], sizes = [8, 128], strides = [1, 1]} : vector<8x512xf32> to vector<8x128xf32>
    %211 = arith.negf %210 : vector<8x128xf32>
    %212 = math.exp %211 : vector<8x128xf32>
    %cst_48 = arith.constant 1.000000e+00 : f32
    %213 = vector.broadcast %cst_48 : f32 to vector<8x128xf32>
    %214 = arith.addf %213, %212 : vector<8x128xf32>
    %215 = arith.divf %213, %214 : vector<8x128xf32>
    %216 = arith.mulf %207, %104 : vector<8x128xf32>
    %217 = arith.mulf %201, %209 : vector<8x128xf32>
    %218 = arith.addf %216, %217 : vector<8x128xf32>
    %219 = math.tanh %218 : vector<8x128xf32>
    %220 = arith.mulf %215, %219 : vector<8x128xf32>
    %221 = arith.truncf %220 : vector<8x128xf32> to vector<8x128xbf16>
    %222 = tpu.concatenate %221, %136 in 1 : vector<8x128xbf16>, vector<8x128xbf16> -> vector<8x256xbf16>
    %cst_49 = arith.constant dense<0.000000e+00> : vector<8x512xf32>
    %223 = tpu.matmul %222, %2, %cst_49 {dimension_numbers = #tpu.dot_dimension_numbers<[1], [0], [0], [1], [0, 0, 1, 1], [], []>} : vector<8x256xbf16>, vector<256x512xbf16>, vector<8x512xf32> -> vector<8x512xf32>
    %224 = arith.addf %223, %14 : vector<8x512xf32>
    %225 = vector.extract_strided_slice %224 {offsets = [0, 0], sizes = [8, 128], strides = [1, 1]} : vector<8x512xf32> to vector<8x128xf32>
    %226 = arith.negf %225 : vector<8x128xf32>
    %227 = math.exp %226 : vector<8x128xf32>
    %cst_50 = arith.constant 1.000000e+00 : f32
    %228 = vector.broadcast %cst_50 : f32 to vector<8x128xf32>
    %229 = arith.addf %228, %227 : vector<8x128xf32>
    %230 = arith.divf %228, %229 : vector<8x128xf32>
    %231 = vector.extract_strided_slice %224 {offsets = [0, 128], sizes = [8, 128], strides = [1, 1]} : vector<8x512xf32> to vector<8x128xf32>
    %232 = arith.negf %231 : vector<8x128xf32>
    %233 = math.exp %232 : vector<8x128xf32>
    %cst_51 = arith.constant 1.000000e+00 : f32
    %234 = vector.broadcast %cst_51 : f32 to vector<8x128xf32>
    %235 = arith.addf %234, %233 : vector<8x128xf32>
    %236 = arith.divf %234, %235 : vector<8x128xf32>
    %237 = vector.extract_strided_slice %224 {offsets = [0, 256], sizes = [8, 128], strides = [1, 1]} : vector<8x512xf32> to vector<8x128xf32>
    %238 = math.tanh %237 : vector<8x128xf32>
    %239 = vector.extract_strided_slice %224 {offsets = [0, 384], sizes = [8, 128], strides = [1, 1]} : vector<8x512xf32> to vector<8x128xf32>
    %240 = arith.negf %239 : vector<8x128xf32>
    %241 = math.exp %240 : vector<8x128xf32>
    %cst_52 = arith.constant 1.000000e+00 : f32
    %242 = vector.broadcast %cst_52 : f32 to vector<8x128xf32>
    %243 = arith.addf %242, %241 : vector<8x128xf32>
    %244 = arith.divf %242, %243 : vector<8x128xf32>
    %245 = arith.mulf %236, %133 : vector<8x128xf32>
    %246 = arith.mulf %230, %238 : vector<8x128xf32>
    %247 = arith.addf %245, %246 : vector<8x128xf32>
    %248 = math.tanh %247 : vector<8x128xf32>
    %249 = arith.mulf %244, %248 : vector<8x128xf32>
    %250 = arith.truncf %249 : vector<8x128xf32> to vector<8x128xbf16>
    %cst_53 = arith.constant dense<0.000000e+00> : vector<8x512xf32>
    %251 = tpu.matmul %164, %1, %cst_53 {dimension_numbers = #tpu.dot_dimension_numbers<[1], [0], [0], [1], [0, 0, 1, 1], [], []>} : vector<8x128xbf16>, vector<128x512xbf16>, vector<8x512xf32> -> vector<8x512xf32>
    %252 = arith.addf %10, %251 : vector<8x512xf32>
    %253 = vector.extract_strided_slice %252 {offsets = [0, 0], sizes = [8, 128], strides = [1, 1]} : vector<8x512xf32> to vector<8x128xf32>
    %254 = arith.negf %253 : vector<8x128xf32>
    %255 = math.exp %254 : vector<8x128xf32>
    %cst_54 = arith.constant 1.000000e+00 : f32
    %256 = vector.broadcast %cst_54 : f32 to vector<8x128xf32>
    %257 = arith.addf %256, %255 : vector<8x128xf32>
    %258 = arith.divf %256, %257 : vector<8x128xf32>
    %259 = vector.extract_strided_slice %252 {offsets = [0, 128], sizes = [8, 128], strides = [1, 1]} : vector<8x512xf32> to vector<8x128xf32>
    %260 = arith.negf %259 : vector<8x128xf32>
    %261 = math.exp %260 : vector<8x128xf32>
    %cst_55 = arith.constant 1.000000e+00 : f32
    %262 = vector.broadcast %cst_55 : f32 to vector<8x128xf32>
    %263 = arith.addf %262, %261 : vector<8x128xf32>
    %264 = arith.divf %262, %263 : vector<8x128xf32>
    %265 = vector.extract_strided_slice %252 {offsets = [0, 256], sizes = [8, 128], strides = [1, 1]} : vector<8x512xf32> to vector<8x128xf32>
    %266 = math.tanh %265 : vector<8x128xf32>
    %267 = vector.extract_strided_slice %252 {offsets = [0, 384], sizes = [8, 128], strides = [1, 1]} : vector<8x512xf32> to vector<8x128xf32>
    %268 = arith.negf %267 : vector<8x128xf32>
    %269 = math.exp %268 : vector<8x128xf32>
    %cst_56 = arith.constant 1.000000e+00 : f32
    %270 = vector.broadcast %cst_56 : f32 to vector<8x128xf32>
    %271 = arith.addf %270, %269 : vector<8x128xf32>
    %272 = arith.divf %270, %271 : vector<8x128xf32>
    %273 = arith.mulf %264, %161 : vector<8x128xf32>
    %274 = arith.mulf %258, %266 : vector<8x128xf32>
    %275 = arith.addf %273, %274 : vector<8x128xf32>
    %276 = math.tanh %275 : vector<8x128xf32>
    %277 = arith.mulf %272, %276 : vector<8x128xf32>
    %278 = arith.truncf %277 : vector<8x128xf32> to vector<8x128xbf16>
    %279 = tpu.concatenate %278, %193 in 1 : vector<8x128xbf16>, vector<8x128xbf16> -> vector<8x256xbf16>
    %cst_57 = arith.constant dense<0.000000e+00> : vector<8x512xf32>
    %280 = tpu.matmul %279, %2, %cst_57 {dimension_numbers = #tpu.dot_dimension_numbers<[1], [0], [0], [1], [0, 0, 1, 1], [], []>} : vector<8x256xbf16>, vector<256x512xbf16>, vector<8x512xf32> -> vector<8x512xf32>
    %281 = arith.addf %280, %14 : vector<8x512xf32>
    %282 = vector.extract_strided_slice %281 {offsets = [0, 0], sizes = [8, 128], strides = [1, 1]} : vector<8x512xf32> to vector<8x128xf32>
    %283 = arith.negf %282 : vector<8x128xf32>
    %284 = math.exp %283 : vector<8x128xf32>
    %cst_58 = arith.constant 1.000000e+00 : f32
    %285 = vector.broadcast %cst_58 : f32 to vector<8x128xf32>
    %286 = arith.addf %285, %284 : vector<8x128xf32>
    %287 = arith.divf %285, %286 : vector<8x128xf32>
    %288 = vector.extract_strided_slice %281 {offsets = [0, 128], sizes = [8, 128], strides = [1, 1]} : vector<8x512xf32> to vector<8x128xf32>
    %289 = arith.negf %288 : vector<8x128xf32>
    %290 = math.exp %289 : vector<8x128xf32>
    %cst_59 = arith.constant 1.000000e+00 : f32
    %291 = vector.broadcast %cst_59 : f32 to vector<8x128xf32>
    %292 = arith.addf %291, %290 : vector<8x128xf32>
    %293 = arith.divf %291, %292 : vector<8x128xf32>
    %294 = vector.extract_strided_slice %281 {offsets = [0, 256], sizes = [8, 128], strides = [1, 1]} : vector<8x512xf32> to vector<8x128xf32>
    %295 = math.tanh %294 : vector<8x128xf32>
    %296 = vector.extract_strided_slice %281 {offsets = [0, 384], sizes = [8, 128], strides = [1, 1]} : vector<8x512xf32> to vector<8x128xf32>
    %297 = arith.negf %296 : vector<8x128xf32>
    %298 = math.exp %297 : vector<8x128xf32>
    %cst_60 = arith.constant 1.000000e+00 : f32
    %299 = vector.broadcast %cst_60 : f32 to vector<8x128xf32>
    %300 = arith.addf %299, %298 : vector<8x128xf32>
    %301 = arith.divf %299, %300 : vector<8x128xf32>
    %302 = arith.mulf %293, %190 : vector<8x128xf32>
    %303 = arith.mulf %287, %295 : vector<8x128xf32>
    %304 = arith.addf %302, %303 : vector<8x128xf32>
    %305 = math.tanh %304 : vector<8x128xf32>
    %306 = arith.mulf %301, %305 : vector<8x128xf32>
    %307 = arith.truncf %306 : vector<8x128xf32> to vector<8x128xbf16>
    %cst_61 = arith.constant dense<0.000000e+00> : vector<8x512xf32>
    %308 = tpu.matmul %221, %1, %cst_61 {dimension_numbers = #tpu.dot_dimension_numbers<[1], [0], [0], [1], [0, 0, 1, 1], [], []>} : vector<8x128xbf16>, vector<128x512xbf16>, vector<8x512xf32> -> vector<8x512xf32>
    %309 = arith.addf %11, %308 : vector<8x512xf32>
    %310 = vector.extract_strided_slice %309 {offsets = [0, 0], sizes = [8, 128], strides = [1, 1]} : vector<8x512xf32> to vector<8x128xf32>
    %311 = arith.negf %310 : vector<8x128xf32>
    %312 = math.exp %311 : vector<8x128xf32>
    %cst_62 = arith.constant 1.000000e+00 : f32
    %313 = vector.broadcast %cst_62 : f32 to vector<8x128xf32>
    %314 = arith.addf %313, %312 : vector<8x128xf32>
    %315 = arith.divf %313, %314 : vector<8x128xf32>
    %316 = vector.extract_strided_slice %309 {offsets = [0, 128], sizes = [8, 128], strides = [1, 1]} : vector<8x512xf32> to vector<8x128xf32>
    %317 = arith.negf %316 : vector<8x128xf32>
    %318 = math.exp %317 : vector<8x128xf32>
    %cst_63 = arith.constant 1.000000e+00 : f32
    %319 = vector.broadcast %cst_63 : f32 to vector<8x128xf32>
    %320 = arith.addf %319, %318 : vector<8x128xf32>
    %321 = arith.divf %319, %320 : vector<8x128xf32>
    %322 = vector.extract_strided_slice %309 {offsets = [0, 256], sizes = [8, 128], strides = [1, 1]} : vector<8x512xf32> to vector<8x128xf32>
    %323 = math.tanh %322 : vector<8x128xf32>
    %324 = vector.extract_strided_slice %309 {offsets = [0, 384], sizes = [8, 128], strides = [1, 1]} : vector<8x512xf32> to vector<8x128xf32>
    %325 = arith.negf %324 : vector<8x128xf32>
    %326 = math.exp %325 : vector<8x128xf32>
    %cst_64 = arith.constant 1.000000e+00 : f32
    %327 = vector.broadcast %cst_64 : f32 to vector<8x128xf32>
    %328 = arith.addf %327, %326 : vector<8x128xf32>
    %329 = arith.divf %327, %328 : vector<8x128xf32>
    %330 = arith.mulf %321, %218 : vector<8x128xf32>
    %331 = arith.mulf %315, %323 : vector<8x128xf32>
    %332 = arith.addf %330, %331 : vector<8x128xf32>
    %333 = math.tanh %332 : vector<8x128xf32>
    %334 = arith.mulf %329, %333 : vector<8x128xf32>
    %335 = arith.truncf %334 : vector<8x128xf32> to vector<8x128xbf16>
    %336 = tpu.concatenate %335, %250 in 1 : vector<8x128xbf16>, vector<8x128xbf16> -> vector<8x256xbf16>
    %cst_65 = arith.constant dense<0.000000e+00> : vector<8x512xf32>
    %337 = tpu.matmul %336, %2, %cst_65 {dimension_numbers = #tpu.dot_dimension_numbers<[1], [0], [0], [1], [0, 0, 1, 1], [], []>} : vector<8x256xbf16>, vector<256x512xbf16>, vector<8x512xf32> -> vector<8x512xf32>
    %338 = arith.addf %337, %14 : vector<8x512xf32>
    %339 = vector.extract_strided_slice %338 {offsets = [0, 0], sizes = [8, 128], strides = [1, 1]} : vector<8x512xf32> to vector<8x128xf32>
    %340 = arith.negf %339 : vector<8x128xf32>
    %341 = math.exp %340 : vector<8x128xf32>
    %cst_66 = arith.constant 1.000000e+00 : f32
    %342 = vector.broadcast %cst_66 : f32 to vector<8x128xf32>
    %343 = arith.addf %342, %341 : vector<8x128xf32>
    %344 = arith.divf %342, %343 : vector<8x128xf32>
    %345 = vector.extract_strided_slice %338 {offsets = [0, 128], sizes = [8, 128], strides = [1, 1]} : vector<8x512xf32> to vector<8x128xf32>
    %346 = arith.negf %345 : vector<8x128xf32>
    %347 = math.exp %346 : vector<8x128xf32>
    %cst_67 = arith.constant 1.000000e+00 : f32
    %348 = vector.broadcast %cst_67 : f32 to vector<8x128xf32>
    %349 = arith.addf %348, %347 : vector<8x128xf32>
    %350 = arith.divf %348, %349 : vector<8x128xf32>
    %351 = vector.extract_strided_slice %338 {offsets = [0, 256], sizes = [8, 128], strides = [1, 1]} : vector<8x512xf32> to vector<8x128xf32>
    %352 = math.tanh %351 : vector<8x128xf32>
    %353 = vector.extract_strided_slice %338 {offsets = [0, 384], sizes = [8, 128], strides = [1, 1]} : vector<8x512xf32> to vector<8x128xf32>
    %354 = arith.negf %353 : vector<8x128xf32>
    %355 = math.exp %354 : vector<8x128xf32>
    %cst_68 = arith.constant 1.000000e+00 : f32
    %356 = vector.broadcast %cst_68 : f32 to vector<8x128xf32>
    %357 = arith.addf %356, %355 : vector<8x128xf32>
    %358 = arith.divf %356, %357 : vector<8x128xf32>
    %359 = arith.mulf %350, %247 : vector<8x128xf32>
    %360 = arith.mulf %344, %352 : vector<8x128xf32>
    %361 = arith.addf %359, %360 : vector<8x128xf32>
    %362 = math.tanh %361 : vector<8x128xf32>
    %363 = arith.mulf %358, %362 : vector<8x128xf32>
    %364 = arith.truncf %363 : vector<8x128xf32> to vector<8x128xbf16>
    %cst_69 = arith.constant dense<0.000000e+00> : vector<8x512xf32>
    %365 = tpu.matmul %278, %1, %cst_69 {dimension_numbers = #tpu.dot_dimension_numbers<[1], [0], [0], [1], [0, 0, 1, 1], [], []>} : vector<8x128xbf16>, vector<128x512xbf16>, vector<8x512xf32> -> vector<8x512xf32>
    %366 = arith.addf %10, %365 : vector<8x512xf32>
    %367 = vector.extract_strided_slice %366 {offsets = [0, 0], sizes = [8, 128], strides = [1, 1]} : vector<8x512xf32> to vector<8x128xf32>
    %368 = arith.negf %367 : vector<8x128xf32>
    %369 = math.exp %368 : vector<8x128xf32>
    %cst_70 = arith.constant 1.000000e+00 : f32
    %370 = vector.broadcast %cst_70 : f32 to vector<8x128xf32>
    %371 = arith.addf %370, %369 : vector<8x128xf32>
    %372 = arith.divf %370, %371 : vector<8x128xf32>
    %373 = vector.extract_strided_slice %366 {offsets = [0, 128], sizes = [8, 128], strides = [1, 1]} : vector<8x512xf32> to vector<8x128xf32>
    %374 = arith.negf %373 : vector<8x128xf32>
    %375 = math.exp %374 : vector<8x128xf32>
    %cst_71 = arith.constant 1.000000e+00 : f32
    %376 = vector.broadcast %cst_71 : f32 to vector<8x128xf32>
    %377 = arith.addf %376, %375 : vector<8x128xf32>
    %378 = arith.divf %376, %377 : vector<8x128xf32>
    %379 = vector.extract_strided_slice %366 {offsets = [0, 256], sizes = [8, 128], strides = [1, 1]} : vector<8x512xf32> to vector<8x128xf32>
    %380 = math.tanh %379 : vector<8x128xf32>
    %381 = vector.extract_strided_slice %366 {offsets = [0, 384], sizes = [8, 128], strides = [1, 1]} : vector<8x512xf32> to vector<8x128xf32>
    %382 = arith.negf %381 : vector<8x128xf32>
    %383 = math.exp %382 : vector<8x128xf32>
    %cst_72 = arith.constant 1.000000e+00 : f32
    %384 = vector.broadcast %cst_72 : f32 to vector<8x128xf32>
    %385 = arith.addf %384, %383 : vector<8x128xf32>
    %386 = arith.divf %384, %385 : vector<8x128xf32>
    %387 = arith.mulf %378, %275 : vector<8x128xf32>
    %388 = arith.mulf %372, %380 : vector<8x128xf32>
    %389 = arith.addf %387, %388 : vector<8x128xf32>
    %390 = math.tanh %389 : vector<8x128xf32>
    %391 = arith.mulf %386, %390 : vector<8x128xf32>
    %392 = arith.truncf %391 : vector<8x128xf32> to vector<8x128xbf16>
    %393 = tpu.concatenate %392, %307 in 1 : vector<8x128xbf16>, vector<8x128xbf16> -> vector<8x256xbf16>
    %cst_73 = arith.constant dense<0.000000e+00> : vector<8x512xf32>
    %394 = tpu.matmul %393, %2, %cst_73 {dimension_numbers = #tpu.dot_dimension_numbers<[1], [0], [0], [1], [0, 0, 1, 1], [], []>} : vector<8x256xbf16>, vector<256x512xbf16>, vector<8x512xf32> -> vector<8x512xf32>
    %395 = arith.addf %394, %14 : vector<8x512xf32>
    %396 = vector.extract_strided_slice %395 {offsets = [0, 0], sizes = [8, 128], strides = [1, 1]} : vector<8x512xf32> to vector<8x128xf32>
    %397 = arith.negf %396 : vector<8x128xf32>
    %398 = math.exp %397 : vector<8x128xf32>
    %cst_74 = arith.constant 1.000000e+00 : f32
    %399 = vector.broadcast %cst_74 : f32 to vector<8x128xf32>
    %400 = arith.addf %399, %398 : vector<8x128xf32>
    %401 = arith.divf %399, %400 : vector<8x128xf32>
    %402 = vector.extract_strided_slice %395 {offsets = [0, 128], sizes = [8, 128], strides = [1, 1]} : vector<8x512xf32> to vector<8x128xf32>
    %403 = arith.negf %402 : vector<8x128xf32>
    %404 = math.exp %403 : vector<8x128xf32>
    %cst_75 = arith.constant 1.000000e+00 : f32
    %405 = vector.broadcast %cst_75 : f32 to vector<8x128xf32>
    %406 = arith.addf %405, %404 : vector<8x128xf32>
    %407 = arith.divf %405, %406 : vector<8x128xf32>
    %408 = vector.extract_strided_slice %395 {offsets = [0, 256], sizes = [8, 128], strides = [1, 1]} : vector<8x512xf32> to vector<8x128xf32>
    %409 = math.tanh %408 : vector<8x128xf32>
    %410 = vector.extract_strided_slice %395 {offsets = [0, 384], sizes = [8, 128], strides = [1, 1]} : vector<8x512xf32> to vector<8x128xf32>
    %411 = arith.negf %410 : vector<8x128xf32>
    %412 = math.exp %411 : vector<8x128xf32>
    %cst_76 = arith.constant 1.000000e+00 : f32
    %413 = vector.broadcast %cst_76 : f32 to vector<8x128xf32>
    %414 = arith.addf %413, %412 : vector<8x128xf32>
    %415 = arith.divf %413, %414 : vector<8x128xf32>
    %416 = arith.mulf %407, %304 : vector<8x128xf32>
    %417 = arith.mulf %401, %409 : vector<8x128xf32>
    %418 = arith.addf %416, %417 : vector<8x128xf32>
    %419 = math.tanh %418 : vector<8x128xf32>
    %420 = arith.mulf %415, %419 : vector<8x128xf32>
    %421 = arith.truncf %420 : vector<8x128xf32> to vector<8x128xbf16>
    %cst_77 = arith.constant dense<0.000000e+00> : vector<8x512xf32>
    %422 = tpu.matmul %335, %1, %cst_77 {dimension_numbers = #tpu.dot_dimension_numbers<[1], [0], [0], [1], [0, 0, 1, 1], [], []>} : vector<8x128xbf16>, vector<128x512xbf16>, vector<8x512xf32> -> vector<8x512xf32>
    %423 = arith.addf %11, %422 : vector<8x512xf32>
    %424 = vector.extract_strided_slice %423 {offsets = [0, 0], sizes = [8, 128], strides = [1, 1]} : vector<8x512xf32> to vector<8x128xf32>
    %425 = arith.negf %424 : vector<8x128xf32>
    %426 = math.exp %425 : vector<8x128xf32>
    %cst_78 = arith.constant 1.000000e+00 : f32
    %427 = vector.broadcast %cst_78 : f32 to vector<8x128xf32>
    %428 = arith.addf %427, %426 : vector<8x128xf32>
    %429 = arith.divf %427, %428 : vector<8x128xf32>
    %430 = vector.extract_strided_slice %423 {offsets = [0, 128], sizes = [8, 128], strides = [1, 1]} : vector<8x512xf32> to vector<8x128xf32>
    %431 = arith.negf %430 : vector<8x128xf32>
    %432 = math.exp %431 : vector<8x128xf32>
    %cst_79 = arith.constant 1.000000e+00 : f32
    %433 = vector.broadcast %cst_79 : f32 to vector<8x128xf32>
    %434 = arith.addf %433, %432 : vector<8x128xf32>
    %435 = arith.divf %433, %434 : vector<8x128xf32>
    %436 = vector.extract_strided_slice %423 {offsets = [0, 256], sizes = [8, 128], strides = [1, 1]} : vector<8x512xf32> to vector<8x128xf32>
    %437 = math.tanh %436 : vector<8x128xf32>
    %438 = vector.extract_strided_slice %423 {offsets = [0, 384], sizes = [8, 128], strides = [1, 1]} : vector<8x512xf32> to vector<8x128xf32>
    %439 = arith.negf %438 : vector<8x128xf32>
    %440 = math.exp %439 : vector<8x128xf32>
    %cst_80 = arith.constant 1.000000e+00 : f32
    %441 = vector.broadcast %cst_80 : f32 to vector<8x128xf32>
    %442 = arith.addf %441, %440 : vector<8x128xf32>
    %443 = arith.divf %441, %442 : vector<8x128xf32>
    %444 = arith.mulf %435, %332 : vector<8x128xf32>
    %445 = arith.mulf %429, %437 : vector<8x128xf32>
    %446 = arith.addf %444, %445 : vector<8x128xf32>
    %447 = math.tanh %446 : vector<8x128xf32>
    %448 = arith.mulf %443, %447 : vector<8x128xf32>
    %449 = arith.truncf %448 : vector<8x128xf32> to vector<8x128xbf16>
    %450 = tpu.concatenate %449, %364 in 1 : vector<8x128xbf16>, vector<8x128xbf16> -> vector<8x256xbf16>
    %cst_81 = arith.constant dense<0.000000e+00> : vector<8x512xf32>
    %451 = tpu.matmul %450, %2, %cst_81 {dimension_numbers = #tpu.dot_dimension_numbers<[1], [0], [0], [1], [0, 0, 1, 1], [], []>} : vector<8x256xbf16>, vector<256x512xbf16>, vector<8x512xf32> -> vector<8x512xf32>
    %452 = arith.addf %451, %14 : vector<8x512xf32>
    %453 = vector.extract_strided_slice %452 {offsets = [0, 0], sizes = [8, 128], strides = [1, 1]} : vector<8x512xf32> to vector<8x128xf32>
    %454 = arith.negf %453 : vector<8x128xf32>
    %455 = math.exp %454 : vector<8x128xf32>
    %cst_82 = arith.constant 1.000000e+00 : f32
    %456 = vector.broadcast %cst_82 : f32 to vector<8x128xf32>
    %457 = arith.addf %456, %455 : vector<8x128xf32>
    %458 = arith.divf %456, %457 : vector<8x128xf32>
    %459 = vector.extract_strided_slice %452 {offsets = [0, 128], sizes = [8, 128], strides = [1, 1]} : vector<8x512xf32> to vector<8x128xf32>
    %460 = arith.negf %459 : vector<8x128xf32>
    %461 = math.exp %460 : vector<8x128xf32>
    %cst_83 = arith.constant 1.000000e+00 : f32
    %462 = vector.broadcast %cst_83 : f32 to vector<8x128xf32>
    %463 = arith.addf %462, %461 : vector<8x128xf32>
    %464 = arith.divf %462, %463 : vector<8x128xf32>
    %465 = vector.extract_strided_slice %452 {offsets = [0, 256], sizes = [8, 128], strides = [1, 1]} : vector<8x512xf32> to vector<8x128xf32>
    %466 = math.tanh %465 : vector<8x128xf32>
    %467 = vector.extract_strided_slice %452 {offsets = [0, 384], sizes = [8, 128], strides = [1, 1]} : vector<8x512xf32> to vector<8x128xf32>
    %468 = arith.negf %467 : vector<8x128xf32>
    %469 = math.exp %468 : vector<8x128xf32>
    %cst_84 = arith.constant 1.000000e+00 : f32
    %470 = vector.broadcast %cst_84 : f32 to vector<8x128xf32>
    %471 = arith.addf %470, %469 : vector<8x128xf32>
    %472 = arith.divf %470, %471 : vector<8x128xf32>
    %473 = arith.mulf %464, %361 : vector<8x128xf32>
    %474 = arith.mulf %458, %466 : vector<8x128xf32>
    %475 = arith.addf %473, %474 : vector<8x128xf32>
    %476 = math.tanh %475 : vector<8x128xf32>
    %477 = arith.mulf %472, %476 : vector<8x128xf32>
    %478 = arith.truncf %477 : vector<8x128xf32> to vector<8x128xbf16>
    %cst_85 = arith.constant dense<0.000000e+00> : vector<8x512xf32>
    %479 = tpu.matmul %392, %1, %cst_85 {dimension_numbers = #tpu.dot_dimension_numbers<[1], [0], [0], [1], [0, 0, 1, 1], [], []>} : vector<8x128xbf16>, vector<128x512xbf16>, vector<8x512xf32> -> vector<8x512xf32>
    %480 = arith.addf %10, %479 : vector<8x512xf32>
    %481 = vector.extract_strided_slice %480 {offsets = [0, 0], sizes = [8, 128], strides = [1, 1]} : vector<8x512xf32> to vector<8x128xf32>
    %482 = arith.negf %481 : vector<8x128xf32>
    %483 = math.exp %482 : vector<8x128xf32>
    %cst_86 = arith.constant 1.000000e+00 : f32
    %484 = vector.broadcast %cst_86 : f32 to vector<8x128xf32>
    %485 = arith.addf %484, %483 : vector<8x128xf32>
    %486 = arith.divf %484, %485 : vector<8x128xf32>
    %487 = vector.extract_strided_slice %480 {offsets = [0, 128], sizes = [8, 128], strides = [1, 1]} : vector<8x512xf32> to vector<8x128xf32>
    %488 = arith.negf %487 : vector<8x128xf32>
    %489 = math.exp %488 : vector<8x128xf32>
    %cst_87 = arith.constant 1.000000e+00 : f32
    %490 = vector.broadcast %cst_87 : f32 to vector<8x128xf32>
    %491 = arith.addf %490, %489 : vector<8x128xf32>
    %492 = arith.divf %490, %491 : vector<8x128xf32>
    %493 = vector.extract_strided_slice %480 {offsets = [0, 256], sizes = [8, 128], strides = [1, 1]} : vector<8x512xf32> to vector<8x128xf32>
    %494 = math.tanh %493 : vector<8x128xf32>
    %495 = vector.extract_strided_slice %480 {offsets = [0, 384], sizes = [8, 128], strides = [1, 1]} : vector<8x512xf32> to vector<8x128xf32>
    %496 = arith.negf %495 : vector<8x128xf32>
    %497 = math.exp %496 : vector<8x128xf32>
    %cst_88 = arith.constant 1.000000e+00 : f32
    %498 = vector.broadcast %cst_88 : f32 to vector<8x128xf32>
    %499 = arith.addf %498, %497 : vector<8x128xf32>
    %500 = arith.divf %498, %499 : vector<8x128xf32>
    %501 = arith.mulf %492, %389 : vector<8x128xf32>
    %502 = arith.mulf %486, %494 : vector<8x128xf32>
    %503 = arith.addf %501, %502 : vector<8x128xf32>
    %504 = math.tanh %503 : vector<8x128xf32>
    %505 = arith.mulf %500, %504 : vector<8x128xf32>
    %506 = arith.truncf %505 : vector<8x128xf32> to vector<8x128xbf16>
    %507 = tpu.concatenate %506, %421 in 1 : vector<8x128xbf16>, vector<8x128xbf16> -> vector<8x256xbf16>
    %cst_89 = arith.constant dense<0.000000e+00> : vector<8x512xf32>
    %508 = tpu.matmul %507, %2, %cst_89 {dimension_numbers = #tpu.dot_dimension_numbers<[1], [0], [0], [1], [0, 0, 1, 1], [], []>} : vector<8x256xbf16>, vector<256x512xbf16>, vector<8x512xf32> -> vector<8x512xf32>
    %509 = arith.addf %508, %14 : vector<8x512xf32>
    %510 = vector.extract_strided_slice %509 {offsets = [0, 0], sizes = [8, 128], strides = [1, 1]} : vector<8x512xf32> to vector<8x128xf32>
    %511 = arith.negf %510 : vector<8x128xf32>
    %512 = math.exp %511 : vector<8x128xf32>
    %cst_90 = arith.constant 1.000000e+00 : f32
    %513 = vector.broadcast %cst_90 : f32 to vector<8x128xf32>
    %514 = arith.addf %513, %512 : vector<8x128xf32>
    %515 = arith.divf %513, %514 : vector<8x128xf32>
    %516 = vector.extract_strided_slice %509 {offsets = [0, 128], sizes = [8, 128], strides = [1, 1]} : vector<8x512xf32> to vector<8x128xf32>
    %517 = arith.negf %516 : vector<8x128xf32>
    %518 = math.exp %517 : vector<8x128xf32>
    %cst_91 = arith.constant 1.000000e+00 : f32
    %519 = vector.broadcast %cst_91 : f32 to vector<8x128xf32>
    %520 = arith.addf %519, %518 : vector<8x128xf32>
    %521 = arith.divf %519, %520 : vector<8x128xf32>
    %522 = vector.extract_strided_slice %509 {offsets = [0, 256], sizes = [8, 128], strides = [1, 1]} : vector<8x512xf32> to vector<8x128xf32>
    %523 = math.tanh %522 : vector<8x128xf32>
    %524 = vector.extract_strided_slice %509 {offsets = [0, 384], sizes = [8, 128], strides = [1, 1]} : vector<8x512xf32> to vector<8x128xf32>
    %525 = arith.negf %524 : vector<8x128xf32>
    %526 = math.exp %525 : vector<8x128xf32>
    %cst_92 = arith.constant 1.000000e+00 : f32
    %527 = vector.broadcast %cst_92 : f32 to vector<8x128xf32>
    %528 = arith.addf %527, %526 : vector<8x128xf32>
    %529 = arith.divf %527, %528 : vector<8x128xf32>
    %530 = arith.mulf %521, %418 : vector<8x128xf32>
    %531 = arith.mulf %515, %523 : vector<8x128xf32>
    %532 = arith.addf %530, %531 : vector<8x128xf32>
    %533 = math.tanh %532 : vector<8x128xf32>
    %534 = arith.mulf %529, %533 : vector<8x128xf32>
    %535 = arith.truncf %534 : vector<8x128xf32> to vector<8x128xbf16>
    %cst_93 = arith.constant dense<0.000000e+00> : vector<8x512xf32>
    %536 = tpu.matmul %449, %1, %cst_93 {dimension_numbers = #tpu.dot_dimension_numbers<[1], [0], [0], [1], [0, 0, 1, 1], [], []>} : vector<8x128xbf16>, vector<128x512xbf16>, vector<8x512xf32> -> vector<8x512xf32>
    %537 = arith.addf %11, %536 : vector<8x512xf32>
    %538 = vector.extract_strided_slice %537 {offsets = [0, 0], sizes = [8, 128], strides = [1, 1]} : vector<8x512xf32> to vector<8x128xf32>
    %539 = arith.negf %538 : vector<8x128xf32>
    %540 = math.exp %539 : vector<8x128xf32>
    %cst_94 = arith.constant 1.000000e+00 : f32
    %541 = vector.broadcast %cst_94 : f32 to vector<8x128xf32>
    %542 = arith.addf %541, %540 : vector<8x128xf32>
    %543 = arith.divf %541, %542 : vector<8x128xf32>
    %544 = vector.extract_strided_slice %537 {offsets = [0, 128], sizes = [8, 128], strides = [1, 1]} : vector<8x512xf32> to vector<8x128xf32>
    %545 = arith.negf %544 : vector<8x128xf32>
    %546 = math.exp %545 : vector<8x128xf32>
    %cst_95 = arith.constant 1.000000e+00 : f32
    %547 = vector.broadcast %cst_95 : f32 to vector<8x128xf32>
    %548 = arith.addf %547, %546 : vector<8x128xf32>
    %549 = arith.divf %547, %548 : vector<8x128xf32>
    %550 = vector.extract_strided_slice %537 {offsets = [0, 256], sizes = [8, 128], strides = [1, 1]} : vector<8x512xf32> to vector<8x128xf32>
    %551 = math.tanh %550 : vector<8x128xf32>
    %552 = vector.extract_strided_slice %537 {offsets = [0, 384], sizes = [8, 128], strides = [1, 1]} : vector<8x512xf32> to vector<8x128xf32>
    %553 = arith.negf %552 : vector<8x128xf32>
    %554 = math.exp %553 : vector<8x128xf32>
    %cst_96 = arith.constant 1.000000e+00 : f32
    %555 = vector.broadcast %cst_96 : f32 to vector<8x128xf32>
    %556 = arith.addf %555, %554 : vector<8x128xf32>
    %557 = arith.divf %555, %556 : vector<8x128xf32>
    %558 = arith.mulf %549, %446 : vector<8x128xf32>
    %559 = arith.mulf %543, %551 : vector<8x128xf32>
    %560 = arith.addf %558, %559 : vector<8x128xf32>
    %561 = math.tanh %560 : vector<8x128xf32>
    %562 = arith.mulf %557, %561 : vector<8x128xf32>
    %563 = arith.truncf %562 : vector<8x128xf32> to vector<8x128xbf16>
    %564 = tpu.concatenate %563, %478 in 1 : vector<8x128xbf16>, vector<8x128xbf16> -> vector<8x256xbf16>
    %cst_97 = arith.constant dense<0.000000e+00> : vector<8x512xf32>
    %565 = tpu.matmul %564, %2, %cst_97 {dimension_numbers = #tpu.dot_dimension_numbers<[1], [0], [0], [1], [0, 0, 1, 1], [], []>} : vector<8x256xbf16>, vector<256x512xbf16>, vector<8x512xf32> -> vector<8x512xf32>
    %566 = arith.addf %565, %14 : vector<8x512xf32>
    %567 = vector.extract_strided_slice %566 {offsets = [0, 0], sizes = [8, 128], strides = [1, 1]} : vector<8x512xf32> to vector<8x128xf32>
    %568 = arith.negf %567 : vector<8x128xf32>
    %569 = math.exp %568 : vector<8x128xf32>
    %cst_98 = arith.constant 1.000000e+00 : f32
    %570 = vector.broadcast %cst_98 : f32 to vector<8x128xf32>
    %571 = arith.addf %570, %569 : vector<8x128xf32>
    %572 = arith.divf %570, %571 : vector<8x128xf32>
    %573 = vector.extract_strided_slice %566 {offsets = [0, 128], sizes = [8, 128], strides = [1, 1]} : vector<8x512xf32> to vector<8x128xf32>
    %574 = arith.negf %573 : vector<8x128xf32>
    %575 = math.exp %574 : vector<8x128xf32>
    %cst_99 = arith.constant 1.000000e+00 : f32
    %576 = vector.broadcast %cst_99 : f32 to vector<8x128xf32>
    %577 = arith.addf %576, %575 : vector<8x128xf32>
    %578 = arith.divf %576, %577 : vector<8x128xf32>
    %579 = vector.extract_strided_slice %566 {offsets = [0, 256], sizes = [8, 128], strides = [1, 1]} : vector<8x512xf32> to vector<8x128xf32>
    %580 = math.tanh %579 : vector<8x128xf32>
    %581 = vector.extract_strided_slice %566 {offsets = [0, 384], sizes = [8, 128], strides = [1, 1]} : vector<8x512xf32> to vector<8x128xf32>
    %582 = arith.negf %581 : vector<8x128xf32>
    %583 = math.exp %582 : vector<8x128xf32>
    %cst_100 = arith.constant 1.000000e+00 : f32
    %584 = vector.broadcast %cst_100 : f32 to vector<8x128xf32>
    %585 = arith.addf %584, %583 : vector<8x128xf32>
    %586 = arith.divf %584, %585 : vector<8x128xf32>
    %587 = arith.mulf %578, %475 : vector<8x128xf32>
    %588 = arith.mulf %572, %580 : vector<8x128xf32>
    %589 = arith.addf %587, %588 : vector<8x128xf32>
    %590 = math.tanh %589 : vector<8x128xf32>
    %591 = arith.mulf %586, %590 : vector<8x128xf32>
    %592 = arith.truncf %591 : vector<8x128xf32> to vector<8x128xbf16>
    %cst_101 = arith.constant dense<0.000000e+00> : vector<8x512xf32>
    %593 = tpu.matmul %506, %1, %cst_101 {dimension_numbers = #tpu.dot_dimension_numbers<[1], [0], [0], [1], [0, 0, 1, 1], [], []>} : vector<8x128xbf16>, vector<128x512xbf16>, vector<8x512xf32> -> vector<8x512xf32>
    %594 = arith.addf %10, %593 : vector<8x512xf32>
    %595 = vector.extract_strided_slice %594 {offsets = [0, 0], sizes = [8, 128], strides = [1, 1]} : vector<8x512xf32> to vector<8x128xf32>
    %596 = arith.negf %595 : vector<8x128xf32>
    %597 = math.exp %596 : vector<8x128xf32>
    %cst_102 = arith.constant 1.000000e+00 : f32
    %598 = vector.broadcast %cst_102 : f32 to vector<8x128xf32>
    %599 = arith.addf %598, %597 : vector<8x128xf32>
    %600 = arith.divf %598, %599 : vector<8x128xf32>
    %601 = vector.extract_strided_slice %594 {offsets = [0, 128], sizes = [8, 128], strides = [1, 1]} : vector<8x512xf32> to vector<8x128xf32>
    %602 = arith.negf %601 : vector<8x128xf32>
    %603 = math.exp %602 : vector<8x128xf32>
    %cst_103 = arith.constant 1.000000e+00 : f32
    %604 = vector.broadcast %cst_103 : f32 to vector<8x128xf32>
    %605 = arith.addf %604, %603 : vector<8x128xf32>
    %606 = arith.divf %604, %605 : vector<8x128xf32>
    %607 = vector.extract_strided_slice %594 {offsets = [0, 256], sizes = [8, 128], strides = [1, 1]} : vector<8x512xf32> to vector<8x128xf32>
    %608 = math.tanh %607 : vector<8x128xf32>
    %609 = vector.extract_strided_slice %594 {offsets = [0, 384], sizes = [8, 128], strides = [1, 1]} : vector<8x512xf32> to vector<8x128xf32>
    %610 = arith.negf %609 : vector<8x128xf32>
    %611 = math.exp %610 : vector<8x128xf32>
    %cst_104 = arith.constant 1.000000e+00 : f32
    %612 = vector.broadcast %cst_104 : f32 to vector<8x128xf32>
    %613 = arith.addf %612, %611 : vector<8x128xf32>
    %614 = arith.divf %612, %613 : vector<8x128xf32>
    %615 = arith.mulf %606, %503 : vector<8x128xf32>
    %616 = arith.mulf %600, %608 : vector<8x128xf32>
    %617 = arith.addf %615, %616 : vector<8x128xf32>
    %618 = math.tanh %617 : vector<8x128xf32>
    %619 = arith.mulf %614, %618 : vector<8x128xf32>
    %620 = arith.truncf %619 : vector<8x128xf32> to vector<8x128xbf16>
    %621 = tpu.concatenate %620, %535 in 1 : vector<8x128xbf16>, vector<8x128xbf16> -> vector<8x256xbf16>
    %cst_105 = arith.constant dense<0.000000e+00> : vector<8x512xf32>
    %622 = tpu.matmul %621, %2, %cst_105 {dimension_numbers = #tpu.dot_dimension_numbers<[1], [0], [0], [1], [0, 0, 1, 1], [], []>} : vector<8x256xbf16>, vector<256x512xbf16>, vector<8x512xf32> -> vector<8x512xf32>
    %623 = arith.addf %622, %14 : vector<8x512xf32>
    %624 = vector.extract_strided_slice %623 {offsets = [0, 0], sizes = [8, 128], strides = [1, 1]} : vector<8x512xf32> to vector<8x128xf32>
    %625 = arith.negf %624 : vector<8x128xf32>
    %626 = math.exp %625 : vector<8x128xf32>
    %cst_106 = arith.constant 1.000000e+00 : f32
    %627 = vector.broadcast %cst_106 : f32 to vector<8x128xf32>
    %628 = arith.addf %627, %626 : vector<8x128xf32>
    %629 = arith.divf %627, %628 : vector<8x128xf32>
    %630 = vector.extract_strided_slice %623 {offsets = [0, 128], sizes = [8, 128], strides = [1, 1]} : vector<8x512xf32> to vector<8x128xf32>
    %631 = arith.negf %630 : vector<8x128xf32>
    %632 = math.exp %631 : vector<8x128xf32>
    %cst_107 = arith.constant 1.000000e+00 : f32
    %633 = vector.broadcast %cst_107 : f32 to vector<8x128xf32>
    %634 = arith.addf %633, %632 : vector<8x128xf32>
    %635 = arith.divf %633, %634 : vector<8x128xf32>
    %636 = vector.extract_strided_slice %623 {offsets = [0, 256], sizes = [8, 128], strides = [1, 1]} : vector<8x512xf32> to vector<8x128xf32>
    %637 = math.tanh %636 : vector<8x128xf32>
    %638 = vector.extract_strided_slice %623 {offsets = [0, 384], sizes = [8, 128], strides = [1, 1]} : vector<8x512xf32> to vector<8x128xf32>
    %639 = arith.negf %638 : vector<8x128xf32>
    %640 = math.exp %639 : vector<8x128xf32>
    %cst_108 = arith.constant 1.000000e+00 : f32
    %641 = vector.broadcast %cst_108 : f32 to vector<8x128xf32>
    %642 = arith.addf %641, %640 : vector<8x128xf32>
    %643 = arith.divf %641, %642 : vector<8x128xf32>
    %644 = arith.mulf %635, %532 : vector<8x128xf32>
    %645 = arith.mulf %629, %637 : vector<8x128xf32>
    %646 = arith.addf %644, %645 : vector<8x128xf32>
    %647 = math.tanh %646 : vector<8x128xf32>
    %648 = arith.mulf %643, %647 : vector<8x128xf32>
    %649 = arith.truncf %648 : vector<8x128xf32> to vector<8x128xbf16>
    %cst_109 = arith.constant dense<0.000000e+00> : vector<8x512xf32>
    %650 = tpu.matmul %563, %1, %cst_109 {dimension_numbers = #tpu.dot_dimension_numbers<[1], [0], [0], [1], [0, 0, 1, 1], [], []>} : vector<8x128xbf16>, vector<128x512xbf16>, vector<8x512xf32> -> vector<8x512xf32>
    %651 = arith.addf %11, %650 : vector<8x512xf32>
    %652 = vector.extract_strided_slice %651 {offsets = [0, 0], sizes = [8, 128], strides = [1, 1]} : vector<8x512xf32> to vector<8x128xf32>
    %653 = arith.negf %652 : vector<8x128xf32>
    %654 = math.exp %653 : vector<8x128xf32>
    %cst_110 = arith.constant 1.000000e+00 : f32
    %655 = vector.broadcast %cst_110 : f32 to vector<8x128xf32>
    %656 = arith.addf %655, %654 : vector<8x128xf32>
    %657 = arith.divf %655, %656 : vector<8x128xf32>
    %658 = vector.extract_strided_slice %651 {offsets = [0, 128], sizes = [8, 128], strides = [1, 1]} : vector<8x512xf32> to vector<8x128xf32>
    %659 = arith.negf %658 : vector<8x128xf32>
    %660 = math.exp %659 : vector<8x128xf32>
    %cst_111 = arith.constant 1.000000e+00 : f32
    %661 = vector.broadcast %cst_111 : f32 to vector<8x128xf32>
    %662 = arith.addf %661, %660 : vector<8x128xf32>
    %663 = arith.divf %661, %662 : vector<8x128xf32>
    %664 = vector.extract_strided_slice %651 {offsets = [0, 256], sizes = [8, 128], strides = [1, 1]} : vector<8x512xf32> to vector<8x128xf32>
    %665 = math.tanh %664 : vector<8x128xf32>
    %666 = vector.extract_strided_slice %651 {offsets = [0, 384], sizes = [8, 128], strides = [1, 1]} : vector<8x512xf32> to vector<8x128xf32>
    %667 = arith.negf %666 : vector<8x128xf32>
    %668 = math.exp %667 : vector<8x128xf32>
    %cst_112 = arith.constant 1.000000e+00 : f32
    %669 = vector.broadcast %cst_112 : f32 to vector<8x128xf32>
    %670 = arith.addf %669, %668 : vector<8x128xf32>
    %671 = arith.divf %669, %670 : vector<8x128xf32>
    %672 = arith.mulf %663, %560 : vector<8x128xf32>
    %673 = arith.mulf %657, %665 : vector<8x128xf32>
    %674 = arith.addf %672, %673 : vector<8x128xf32>
    %675 = math.tanh %674 : vector<8x128xf32>
    %676 = arith.mulf %671, %675 : vector<8x128xf32>
    %677 = arith.truncf %676 : vector<8x128xf32> to vector<8x128xbf16>
    %678 = tpu.concatenate %677, %592 in 1 : vector<8x128xbf16>, vector<8x128xbf16> -> vector<8x256xbf16>
    %cst_113 = arith.constant dense<0.000000e+00> : vector<8x512xf32>
    %679 = tpu.matmul %678, %2, %cst_113 {dimension_numbers = #tpu.dot_dimension_numbers<[1], [0], [0], [1], [0, 0, 1, 1], [], []>} : vector<8x256xbf16>, vector<256x512xbf16>, vector<8x512xf32> -> vector<8x512xf32>
    %680 = arith.addf %679, %14 : vector<8x512xf32>
    %681 = vector.extract_strided_slice %680 {offsets = [0, 0], sizes = [8, 128], strides = [1, 1]} : vector<8x512xf32> to vector<8x128xf32>
    %682 = arith.negf %681 : vector<8x128xf32>
    %683 = math.exp %682 : vector<8x128xf32>
    %cst_114 = arith.constant 1.000000e+00 : f32
    %684 = vector.broadcast %cst_114 : f32 to vector<8x128xf32>
    %685 = arith.addf %684, %683 : vector<8x128xf32>
    %686 = arith.divf %684, %685 : vector<8x128xf32>
    %687 = vector.extract_strided_slice %680 {offsets = [0, 128], sizes = [8, 128], strides = [1, 1]} : vector<8x512xf32> to vector<8x128xf32>
    %688 = arith.negf %687 : vector<8x128xf32>
    %689 = math.exp %688 : vector<8x128xf32>
    %cst_115 = arith.constant 1.000000e+00 : f32
    %690 = vector.broadcast %cst_115 : f32 to vector<8x128xf32>
    %691 = arith.addf %690, %689 : vector<8x128xf32>
    %692 = arith.divf %690, %691 : vector<8x128xf32>
    %693 = vector.extract_strided_slice %680 {offsets = [0, 256], sizes = [8, 128], strides = [1, 1]} : vector<8x512xf32> to vector<8x128xf32>
    %694 = math.tanh %693 : vector<8x128xf32>
    %695 = vector.extract_strided_slice %680 {offsets = [0, 384], sizes = [8, 128], strides = [1, 1]} : vector<8x512xf32> to vector<8x128xf32>
    %696 = arith.negf %695 : vector<8x128xf32>
    %697 = math.exp %696 : vector<8x128xf32>
    %cst_116 = arith.constant 1.000000e+00 : f32
    %698 = vector.broadcast %cst_116 : f32 to vector<8x128xf32>
    %699 = arith.addf %698, %697 : vector<8x128xf32>
    %700 = arith.divf %698, %699 : vector<8x128xf32>
    %701 = arith.mulf %692, %589 : vector<8x128xf32>
    %702 = arith.mulf %686, %694 : vector<8x128xf32>
    %703 = arith.addf %701, %702 : vector<8x128xf32>
    %704 = math.tanh %703 : vector<8x128xf32>
    %705 = arith.mulf %700, %704 : vector<8x128xf32>
    %706 = arith.truncf %705 : vector<8x128xf32> to vector<8x128xbf16>
    %cst_117 = arith.constant dense<0.000000e+00> : vector<8x512xf32>
    %707 = tpu.matmul %620, %1, %cst_117 {dimension_numbers = #tpu.dot_dimension_numbers<[1], [0], [0], [1], [0, 0, 1, 1], [], []>} : vector<8x128xbf16>, vector<128x512xbf16>, vector<8x512xf32> -> vector<8x512xf32>
    %708 = arith.addf %10, %707 : vector<8x512xf32>
    %709 = vector.extract_strided_slice %708 {offsets = [0, 0], sizes = [8, 128], strides = [1, 1]} : vector<8x512xf32> to vector<8x128xf32>
    %710 = arith.negf %709 : vector<8x128xf32>
    %711 = math.exp %710 : vector<8x128xf32>
    %cst_118 = arith.constant 1.000000e+00 : f32
    %712 = vector.broadcast %cst_118 : f32 to vector<8x128xf32>
    %713 = arith.addf %712, %711 : vector<8x128xf32>
    %714 = arith.divf %712, %713 : vector<8x128xf32>
    %715 = vector.extract_strided_slice %708 {offsets = [0, 128], sizes = [8, 128], strides = [1, 1]} : vector<8x512xf32> to vector<8x128xf32>
    %716 = arith.negf %715 : vector<8x128xf32>
    %717 = math.exp %716 : vector<8x128xf32>
    %cst_119 = arith.constant 1.000000e+00 : f32
    %718 = vector.broadcast %cst_119 : f32 to vector<8x128xf32>
    %719 = arith.addf %718, %717 : vector<8x128xf32>
    %720 = arith.divf %718, %719 : vector<8x128xf32>
    %721 = vector.extract_strided_slice %708 {offsets = [0, 256], sizes = [8, 128], strides = [1, 1]} : vector<8x512xf32> to vector<8x128xf32>
    %722 = math.tanh %721 : vector<8x128xf32>
    %723 = vector.extract_strided_slice %708 {offsets = [0, 384], sizes = [8, 128], strides = [1, 1]} : vector<8x512xf32> to vector<8x128xf32>
    %724 = arith.negf %723 : vector<8x128xf32>
    %725 = math.exp %724 : vector<8x128xf32>
    %cst_120 = arith.constant 1.000000e+00 : f32
    %726 = vector.broadcast %cst_120 : f32 to vector<8x128xf32>
    %727 = arith.addf %726, %725 : vector<8x128xf32>
    %728 = arith.divf %726, %727 : vector<8x128xf32>
    %729 = arith.mulf %720, %617 : vector<8x128xf32>
    %730 = arith.mulf %714, %722 : vector<8x128xf32>
    %731 = arith.addf %729, %730 : vector<8x128xf32>
    %732 = math.tanh %731 : vector<8x128xf32>
    %733 = arith.mulf %728, %732 : vector<8x128xf32>
    %734 = arith.truncf %733 : vector<8x128xf32> to vector<8x128xbf16>
    %735 = tpu.concatenate %734, %649 in 1 : vector<8x128xbf16>, vector<8x128xbf16> -> vector<8x256xbf16>
    %cst_121 = arith.constant dense<0.000000e+00> : vector<8x512xf32>
    %736 = tpu.matmul %735, %2, %cst_121 {dimension_numbers = #tpu.dot_dimension_numbers<[1], [0], [0], [1], [0, 0, 1, 1], [], []>} : vector<8x256xbf16>, vector<256x512xbf16>, vector<8x512xf32> -> vector<8x512xf32>
    %737 = arith.addf %736, %14 : vector<8x512xf32>
    %738 = vector.extract_strided_slice %737 {offsets = [0, 0], sizes = [8, 128], strides = [1, 1]} : vector<8x512xf32> to vector<8x128xf32>
    %739 = arith.negf %738 : vector<8x128xf32>
    %740 = math.exp %739 : vector<8x128xf32>
    %cst_122 = arith.constant 1.000000e+00 : f32
    %741 = vector.broadcast %cst_122 : f32 to vector<8x128xf32>
    %742 = arith.addf %741, %740 : vector<8x128xf32>
    %743 = arith.divf %741, %742 : vector<8x128xf32>
    %744 = vector.extract_strided_slice %737 {offsets = [0, 128], sizes = [8, 128], strides = [1, 1]} : vector<8x512xf32> to vector<8x128xf32>
    %745 = arith.negf %744 : vector<8x128xf32>
    %746 = math.exp %745 : vector<8x128xf32>
    %cst_123 = arith.constant 1.000000e+00 : f32
    %747 = vector.broadcast %cst_123 : f32 to vector<8x128xf32>
    %748 = arith.addf %747, %746 : vector<8x128xf32>
    %749 = arith.divf %747, %748 : vector<8x128xf32>
    %750 = vector.extract_strided_slice %737 {offsets = [0, 256], sizes = [8, 128], strides = [1, 1]} : vector<8x512xf32> to vector<8x128xf32>
    %751 = math.tanh %750 : vector<8x128xf32>
    %752 = vector.extract_strided_slice %737 {offsets = [0, 384], sizes = [8, 128], strides = [1, 1]} : vector<8x512xf32> to vector<8x128xf32>
    %753 = arith.negf %752 : vector<8x128xf32>
    %754 = math.exp %753 : vector<8x128xf32>
    %cst_124 = arith.constant 1.000000e+00 : f32
    %755 = vector.broadcast %cst_124 : f32 to vector<8x128xf32>
    %756 = arith.addf %755, %754 : vector<8x128xf32>
    %757 = arith.divf %755, %756 : vector<8x128xf32>
    %758 = arith.mulf %749, %646 : vector<8x128xf32>
    %759 = arith.mulf %743, %751 : vector<8x128xf32>
    %760 = arith.addf %758, %759 : vector<8x128xf32>
    %761 = math.tanh %760 : vector<8x128xf32>
    %762 = arith.mulf %757, %761 : vector<8x128xf32>
    %763 = arith.truncf %762 : vector<8x128xf32> to vector<8x128xbf16>
    %cst_125 = arith.constant dense<0.000000e+00> : vector<8x512xf32>
    %764 = tpu.matmul %677, %1, %cst_125 {dimension_numbers = #tpu.dot_dimension_numbers<[1], [0], [0], [1], [0, 0, 1, 1], [], []>} : vector<8x128xbf16>, vector<128x512xbf16>, vector<8x512xf32> -> vector<8x512xf32>
    %765 = arith.addf %11, %764 : vector<8x512xf32>
    %766 = vector.extract_strided_slice %765 {offsets = [0, 0], sizes = [8, 128], strides = [1, 1]} : vector<8x512xf32> to vector<8x128xf32>
    %767 = arith.negf %766 : vector<8x128xf32>
    %768 = math.exp %767 : vector<8x128xf32>
    %cst_126 = arith.constant 1.000000e+00 : f32
    %769 = vector.broadcast %cst_126 : f32 to vector<8x128xf32>
    %770 = arith.addf %769, %768 : vector<8x128xf32>
    %771 = arith.divf %769, %770 : vector<8x128xf32>
    %772 = vector.extract_strided_slice %765 {offsets = [0, 128], sizes = [8, 128], strides = [1, 1]} : vector<8x512xf32> to vector<8x128xf32>
    %773 = arith.negf %772 : vector<8x128xf32>
    %774 = math.exp %773 : vector<8x128xf32>
    %cst_127 = arith.constant 1.000000e+00 : f32
    %775 = vector.broadcast %cst_127 : f32 to vector<8x128xf32>
    %776 = arith.addf %775, %774 : vector<8x128xf32>
    %777 = arith.divf %775, %776 : vector<8x128xf32>
    %778 = vector.extract_strided_slice %765 {offsets = [0, 256], sizes = [8, 128], strides = [1, 1]} : vector<8x512xf32> to vector<8x128xf32>
    %779 = math.tanh %778 : vector<8x128xf32>
    %780 = vector.extract_strided_slice %765 {offsets = [0, 384], sizes = [8, 128], strides = [1, 1]} : vector<8x512xf32> to vector<8x128xf32>
    %781 = arith.negf %780 : vector<8x128xf32>
    %782 = math.exp %781 : vector<8x128xf32>
    %cst_128 = arith.constant 1.000000e+00 : f32
    %783 = vector.broadcast %cst_128 : f32 to vector<8x128xf32>
    %784 = arith.addf %783, %782 : vector<8x128xf32>
    %785 = arith.divf %783, %784 : vector<8x128xf32>
    %786 = arith.mulf %777, %674 : vector<8x128xf32>
    %787 = arith.mulf %771, %779 : vector<8x128xf32>
    %788 = arith.addf %786, %787 : vector<8x128xf32>
    %789 = math.tanh %788 : vector<8x128xf32>
    %790 = arith.mulf %785, %789 : vector<8x128xf32>
    %791 = arith.truncf %790 : vector<8x128xf32> to vector<8x128xbf16>
    %792 = tpu.concatenate %791, %706 in 1 : vector<8x128xbf16>, vector<8x128xbf16> -> vector<8x256xbf16>
    %cst_129 = arith.constant dense<0.000000e+00> : vector<8x512xf32>
    %793 = tpu.matmul %792, %2, %cst_129 {dimension_numbers = #tpu.dot_dimension_numbers<[1], [0], [0], [1], [0, 0, 1, 1], [], []>} : vector<8x256xbf16>, vector<256x512xbf16>, vector<8x512xf32> -> vector<8x512xf32>
    %794 = arith.addf %793, %14 : vector<8x512xf32>
    %795 = vector.extract_strided_slice %794 {offsets = [0, 0], sizes = [8, 128], strides = [1, 1]} : vector<8x512xf32> to vector<8x128xf32>
    %796 = arith.negf %795 : vector<8x128xf32>
    %797 = math.exp %796 : vector<8x128xf32>
    %cst_130 = arith.constant 1.000000e+00 : f32
    %798 = vector.broadcast %cst_130 : f32 to vector<8x128xf32>
    %799 = arith.addf %798, %797 : vector<8x128xf32>
    %800 = arith.divf %798, %799 : vector<8x128xf32>
    %801 = vector.extract_strided_slice %794 {offsets = [0, 128], sizes = [8, 128], strides = [1, 1]} : vector<8x512xf32> to vector<8x128xf32>
    %802 = arith.negf %801 : vector<8x128xf32>
    %803 = math.exp %802 : vector<8x128xf32>
    %cst_131 = arith.constant 1.000000e+00 : f32
    %804 = vector.broadcast %cst_131 : f32 to vector<8x128xf32>
    %805 = arith.addf %804, %803 : vector<8x128xf32>
    %806 = arith.divf %804, %805 : vector<8x128xf32>
    %807 = vector.extract_strided_slice %794 {offsets = [0, 256], sizes = [8, 128], strides = [1, 1]} : vector<8x512xf32> to vector<8x128xf32>
    %808 = math.tanh %807 : vector<8x128xf32>
    %809 = vector.extract_strided_slice %794 {offsets = [0, 384], sizes = [8, 128], strides = [1, 1]} : vector<8x512xf32> to vector<8x128xf32>
    %810 = arith.negf %809 : vector<8x128xf32>
    %811 = math.exp %810 : vector<8x128xf32>
    %cst_132 = arith.constant 1.000000e+00 : f32
    %812 = vector.broadcast %cst_132 : f32 to vector<8x128xf32>
    %813 = arith.addf %812, %811 : vector<8x128xf32>
    %814 = arith.divf %812, %813 : vector<8x128xf32>
    %815 = arith.mulf %806, %703 : vector<8x128xf32>
    %816 = arith.mulf %800, %808 : vector<8x128xf32>
    %817 = arith.addf %815, %816 : vector<8x128xf32>
    %818 = math.tanh %817 : vector<8x128xf32>
    %819 = arith.mulf %814, %818 : vector<8x128xf32>
    %820 = arith.truncf %819 : vector<8x128xf32> to vector<8x128xbf16>
    %821 = tpu.concatenate %79, %136, %193, %250, %307, %364, %421, %478, %535, %592, %649, %706, %763, %820 in 0 : vector<8x128xbf16>, vector<8x128xbf16>, vector<8x128xbf16>, vector<8x128xbf16>, vector<8x128xbf16>, vector<8x128xbf16>, vector<8x128xbf16>, vector<8x128xbf16>, vector<8x128xbf16>, vector<8x128xbf16>, vector<8x128xbf16>, vector<8x128xbf16>, vector<8x128xbf16>, vector<8x128xbf16> -> vector<112x128xbf16>
    %cst_133 = arith.constant dense<0.000000e+00> : vector<112x128xf32>
    %822 = tpu.matmul %821, %3, %cst_133 {dimension_numbers = #tpu.dot_dimension_numbers<[1], [0], [0], [1], [0, 0, 1, 1], [], []>} : vector<112x128xbf16>, vector<128x128xbf16>, vector<112x128xf32> -> vector<112x128xf32>
    %c0_134 = arith.constant 0 : index
    %c0_135 = arith.constant 0 : index
    %823 = vector.load %arg8[%c0_134, %c0_135] : memref<1x128xf32, #tpu.memory_space<vmem>>, vector<1x128xf32>
    %824 = vector.broadcast %823 : vector<1x128xf32> to vector<112x128xf32>
    %825 = arith.addf %822, %824 : vector<112x128xf32>
    %826 = vector.shape_cast %825 : vector<112x128xf32> to vector<7x16x128xf32>
    %c0_136 = arith.constant 0 : index
    %c0_137 = arith.constant 0 : index
    %c0_138 = arith.constant 0 : index
    %827 = vector.load %arg9[%c0_136, %c0_137, %c0_138] : memref<7x16x128xf32, #tpu.memory_space<vmem>>, vector<7x16x128xf32>
    tpu.vector_store %arg9[%c0_136, %c0_137, %c0_138], %826 {strides = array<i32>} : memref<7x16x128xf32, #tpu.memory_space<vmem>>, vector<7x16x128xf32>,
    return
  }
  func.func @transform_0(%arg0: i32) -> (i32, i32) {
    %c0_i32 = arith.constant 0 : i32
    %c0_i32_0 = arith.constant 0 : i32
    return %arg0, %c0_i32 : i32, i32
  }
  func.func @transform_1(%arg0: i32) -> (i32, i32) {
    %c0_i32 = arith.constant 0 : i32
    %c0_i32_0 = arith.constant 0 : i32
    %c0_i32_1 = arith.constant 0 : i32
    return %c0_i32, %c0_i32_0 : i32, i32
  }
  func.func @transform_2(%arg0: i32) -> (i32, i32) {
    %c0_i32 = arith.constant 0 : i32
    %c0_i32_0 = arith.constant 0 : i32
    %c0_i32_1 = arith.constant 0 : i32
    return %c0_i32, %c0_i32_0 : i32, i32
  }
  func.func @transform_3(%arg0: i32) -> (i32, i32) {
    %c0_i32 = arith.constant 0 : i32
    %c0_i32_0 = arith.constant 0 : i32
    %c0_i32_1 = arith.constant 0 : i32
    return %c0_i32, %c0_i32_0 : i32, i32
  }
  func.func @transform_4(%arg0: i32) -> (i32, i32) {
    %c0_i32 = arith.constant 0 : i32
    %c0_i32_0 = arith.constant 0 : i32
    %c0_i32_1 = arith.constant 0 : i32
    return %c0_i32, %c0_i32_0 : i32, i32
  }
  func.func @transform_5(%arg0: i32) -> (i32, i32) {
    %c0_i32 = arith.constant 0 : i32
    %c0_i32_0 = arith.constant 0 : i32
    %c0_i32_1 = arith.constant 0 : i32
    return %c0_i32, %c0_i32_0 : i32, i32
  }
  func.func @transform_6(%arg0: i32) -> (i32, i32) {
    %c0_i32 = arith.constant 0 : i32
    %c0_i32_0 = arith.constant 0 : i32
    %c0_i32_1 = arith.constant 0 : i32
    return %c0_i32, %c0_i32_0 : i32, i32
  }
  func.func @transform_7(%arg0: i32) -> (i32, i32) {
    %c0_i32 = arith.constant 0 : i32
    %c0_i32_0 = arith.constant 0 : i32
    %c0_i32_1 = arith.constant 0 : i32
    return %c0_i32, %c0_i32_0 : i32, i32
  }
  func.func @transform_8(%arg0: i32) -> (i32, i32, i32) {
    %c0_i32 = arith.constant 0 : i32
    %c0_i32_0 = arith.constant 0 : i32
    %c0_i32_1 = arith.constant 0 : i32
    return %c0_i32, %arg0, %c0_i32_0 : i32, i32, i32
  }
}

</mosaic_0001>

<llo_original>
// kernel: tpu_custom_call.1
$region0: #{tpu_custom_call.1}
  #allocation0 [shape = 'u32[]', space=smem, size = 0x4, offset = 0x4, fixed_abs, tag = 'smem constant byte address 0x4 - core index']
  #allocation1 [shape = 'u32[144,128]{1,0:T(1,128)}', space=vmem, size = 0x12000, scoped, tag = 'internal scratch']
  #allocation12 [shape = 's32[]', space=sflag, size = 0x4, offset = 0, fixed_abs, tag = 'sflag constant byte address 0x0 - dummy sync flag']
  %s0 = inlined_call_operand.hbm [shape: f32[32,256], index: 0, kind: input, shape index: {}]
  %s1 = inlined_call_operand.hbm [shape: bf16[256,512], index: 1, kind: input, shape index: {}]
  %s2 = inlined_call_operand.hbm [shape: bf16[128,512], index: 2, kind: input, shape index: {}]
  %s3 = inlined_call_operand.vmem [shape: f32[1,512], index: 3, kind: input, shape index: {}]
  %s4 = inlined_call_operand.hbm [shape: bf16[256,512], index: 4, kind: input, shape index: {}]
  %s5 = inlined_call_operand.vmem [shape: f32[1,512], index: 5, kind: input, shape index: {}]
  %s6 = inlined_call_operand.hbm [shape: bf16[128,128], index: 6, kind: input, shape index: {}]
  %s7 = inlined_call_operand.vmem [shape: f32[1,128], index: 7, kind: input, shape index: {}]
  %s8 = inlined_call_operand.hbm [shape: f32[7,32,128], index: 8, kind: output, shape index: {}]
  %s9 = sld [smem:[#allocation0]]
  $region85: #{tpu_custom_call.1} parent=0
    _
  %s11 = ssub.s32 1, %s9
  %s12 = scalar_select 0, %s11, %s9
  $region1: #{tpu_custom_call.1} parent=0
    #allocation2 [shape = 'u8[32768]{0}', space=vmem, size = 0x8000, scoped, tag = 'input window, operand 0']
    #allocation3 [shape = 's32[2]{0}', space=sflag, size = 0x8, scoped, tag = 'scoped memory for tpu_custom_call.1']
    #allocation4 [shape = 's32[2]{0}', space=sflag, size = 0x8, scoped, tag = 'scoped memory for tpu_custom_call.1']
    #allocation5 [shape = 'u8[262144]{0}', space=vmem, size = 0x40000, scoped, tag = 'input window, operand 1, single buffered']
    #allocation6 [shape = 's32[1]{0}', space=sflag, size = 0x4, scoped, tag = 'scoped memory for tpu_custom_call.1']
    #allocation7 [shape = 'u8[131072]{0}', space=vmem, size = 0x20000, scoped, tag = 'input window, operand 2, single buffered']
    #allocation8 [shape = 'u8[262144]{0}', space=vmem, size = 0x40000, scoped, tag = 'input window, operand 4, single buffered']
    #allocation9 [shape = 's32[1]{0}', space=sflag, size = 0x4, scoped, tag = 'scoped memory for tpu_custom_call.1']
    #allocation10 [shape = 'u8[32768]{0}', space=vmem, size = 0x8000, scoped, tag = 'input window, operand 6, single buffered']
    #allocation11 [shape = 'u8[114688]{0}', space=vmem, size = 0x1c000, scoped, tag = 'output window, operand 0']
    %13 = vsyncpa [#allocation3], 0
    %s14 = scalar_lea.sflag [#allocation3], 1
    %15 = vsyncpa %s14, 0
    %16 = vsyncpa [#allocation6], 0
    %17 = vsyncpa [#allocation9], 0
    %18 = vsyncpa [#allocation4], 0
    %s19 = scalar_lea.sflag [#allocation4], 1
    %20 = vsyncpa %s19, 0
    loop: start=0, step=1, limit=4
    $region2: #{tpu_custom_call.1} parent=1 // loop_pre_header
      _
    $region3: #{tpu_custom_call.1} parent=1 // loop_header
      %s22 = sphi 0, %s26
      %p23 = scmp.ge.s32.totalorder %s22, 4
      %s32 = sphi 0, %s34
      %s35 = sphi 0, %s32
      %s36 = sphi 0, %s35
      %s52 = sphi 0, %s36
      %s56 = sphi 0, %s56
      %s58 = sphi 0, %s56
      %s59 = sphi 0, %s58
      %s73 = sphi 0, %s59
      %s77 = sphi 0, %s77
      %s79 = sphi 0, %s77
      %s80 = sphi 0, %s79
      %s94 = sphi 0, %s80
      %s98 = sphi 0, %s98
      %s100 = sphi 0, %s98
      %s101 = sphi 0, %s100
      %s115 = sphi 0, %s101
      %s119 = sphi 0, %s119
      %s121 = sphi 0, %s119
      %s122 = sphi 0, %s121
      %s136 = sphi 0, %s122
      %s140 = sphi 0, %s140
      %s142 = sphi 0, %s140
      %s143 = sphi 0, %s142
      %s157 = sphi 0, %s143
      %s161 = sphi 0, %s161
      %s163 = sphi 0, %s161
      %s164 = sphi 0, %s163
      %s178 = sphi 0, %s164
      %s182 = sphi 0, %s182
      %s184 = sphi 0, %s182
      %s185 = sphi 0, %s184
      %s199 = sphi 0, %s185
      %s205 = sphi 0, %s207
      %s208 = sphi 0, %s205
      %s209 = sphi 0, %s208
      %s225 = sphi 0, %s209
    $region4: #{tpu_custom_call.1} parent=1 // loop_header_branch
      %25 = sbr.rel (%p23) target = $region8
    $region5: #{tpu_custom_call.1} parent=1 // loop_body
      %s27 = ssub.s32 %s22, 1
      %s28 = ssub.s32 %s22, 2
      %s29 = sadd.s32 %s22, 1
      %s30 = ssub.s32 %s22, %s29
      %p31 = scmp.eq.s32.totalorder %s30, 0
      %s33 = sadd.s32 %s32, 1
      %s34 = scalar_select %p31, %s32, %s33
      %p37 = pneg %p31
      %p38 = scmp.eq.s32.totalorder %s22, 1
      %p39 = por %p37, %p38
      %p40 = scmp.ne.s32.totalorder %s32, %s35
      %p41 = scmp.eq.s32.totalorder %s22, 0
      %p42 = por %p40, %p41
      %p43 = scmp.ne.s32.totalorder %s32, %s35
      %p44 = scmp.eq.s32.totalorder %s27, 1
      %p45 = por %p43, %p44
      %p46 = scmp.ne.s32.totalorder %s35, %s36
      %p47 = scmp.eq.s32.totalorder %s27, 0
      %p48 = por %p46, %p47
      %p49 = scmp.ne.s32.totalorder %s35, %s36
      %p50 = scmp.eq.s32.totalorder %s28, 1
      %p51 = por %p49, %p50
      %p53 = scmp.ne.s32.totalorder %s36, %s52
      %p54 = scmp.eq.s32.totalorder %s28, 0
      %p55 = por %p53, %p54
      %s57 = sadd.s32 %s56, 1
      %p60 = scmp.eq.s32.totalorder %s22, 1
      %p61 = scmp.ne.s32.totalorder %s56, %s58
      %p62 = scmp.eq.s32.totalorder %s22, 0
      %p63 = por %p61, %p62
      %p64 = scmp.ne.s32.totalorder %s56, %s58
      %p65 = scmp.eq.s32.totalorder %s27, 1
      %p66 = por %p64, %p65
      %p67 = scmp.ne.s32.totalorder %s58, %s59
      %p68 = scmp.eq.s32.totalorder %s27, 0
      %p69 = por %p67, %p68
      %p70 = scmp.ne.s32.totalorder %s58, %s59
      %p71 = scmp.eq.s32.totalorder %s28, 1
      %p72 = por %p70, %p71
      %p74 = scmp.ne.s32.totalorder %s59, %s73
      %p75 = scmp.eq.s32.totalorder %s28, 0
      %p76 = por %p74, %p75
      %s78 = sadd.s32 %s77, 1
      %p81 = scmp.eq.s32.totalorder %s22, 1
      %p82 = scmp.ne.s32.totalorder %s77, %s79
      %p83 = scmp.eq.s32.totalorder %s22, 0
      %p84 = por %p82, %p83
      %p85 = scmp.ne.s32.totalorder %s77, %s79
      %p86 = scmp.eq.s32.totalorder %s27, 1
      %p87 = por %p85, %p86
      %p88 = scmp.ne.s32.totalorder %s79, %s80
      %p89 = scmp.eq.s32.totalorder %s27, 0
      %p90 = por %p88, %p89
      %p91 = scmp.ne.s32.totalorder %s79, %s80
      %p92 = scmp.eq.s32.totalorder %s28, 1
      %p93 = por %p91, %p92
      %p95 = scmp.ne.s32.totalorder %s80, %s94
      %p96 = scmp.eq.s32.totalorder %s28, 0
      %p97 = por %p95, %p96
      %s99 = sadd.s32 %s98, 1
      %p102 = scmp.eq.s32.totalorder %s22, 1
      %p103 = scmp.ne.s32.totalorder %s98, %s100
      %p104 = scmp.eq.s32.totalorder %s22, 0
      %p105 = por %p103, %p104
      %p106 = scmp.ne.s32.totalorder %s98, %s100
      %p107 = scmp.eq.s32.totalorder %s27, 1
      %p108 = por %p106, %p107
      %p109 = scmp.ne.s32.totalorder %s100, %s101
      %p110 = scmp.eq.s32.totalorder %s27, 0
      %p111 = por %p109, %p110
      %p112 = scmp.ne.s32.totalorder %s100, %s101
      %p113 = scmp.eq.s32.totalorder %s28, 1
      %p114 = por %p112, %p113
      %p116 = scmp.ne.s32.totalorder %s101, %s115
      %p117 = scmp.eq.s32.totalorder %s28, 0
      %p118 = por %p116, %p117
      %s120 = sadd.s32 %s119, 1
      %p123 = scmp.eq.s32.totalorder %s22, 1
      %p124 = scmp.ne.s32.totalorder %s119, %s121
      %p125 = scmp.eq.s32.totalorder %s22, 0
      %p126 = por %p124, %p125
      %p127 = scmp.ne.s32.totalorder %s119, %s121
      %p128 = scmp.eq.s32.totalorder %s27, 1
      %p129 = por %p127, %p128
      %p130 = scmp.ne.s32.totalorder %s121, %s122
      %p131 = scmp.eq.s32.totalorder %s27, 0
      %p132 = por %p130, %p131
      %p133 = scmp.ne.s32.totalorder %s121, %s122
      %p134 = scmp.eq.s32.totalorder %s28, 1
      %p135 = por %p133, %p134
      %p137 = scmp.ne.s32.totalorder %s122, %s136
      %p138 = scmp.eq.s32.totalorder %s28, 0
      %p139 = por %p137, %p138
      %s141 = sadd.s32 %s140, 1
      %p144 = scmp.eq.s32.totalorder %s22, 1
      %p145 = scmp.ne.s32.totalorder %s140, %s142
      %p146 = scmp.eq.s32.totalorder %s22, 0
      %p147 = por %p145, %p146
      %p148 = scmp.ne.s32.totalorder %s140, %s142
      %p149 = scmp.eq.s32.totalorder %s27, 1
      %p150 = por %p148, %p149
      %p151 = scmp.ne.s32.totalorder %s142, %s143
      %p152 = scmp.eq.s32.totalorder %s27, 0
      %p153 = por %p151, %p152
      %p154 = scmp.ne.s32.totalorder %s142, %s143
      %p155 = scmp.eq.s32.totalorder %s28, 1
      %p156 = por %p154, %p155
      %p158 = scmp.ne.s32.totalorder %s143, %s157
      %p159 = scmp.eq.s32.totalorder %s28, 0
      %p160 = por %p158, %p159
      %s162 = sadd.s32 %s161, 1
      %p165 = scmp.eq.s32.totalorder %s22, 1
      %p166 = scmp.ne.s32.totalorder %s161, %s163
      %p167 = scmp.eq.s32.totalorder %s22, 0
      %p168 = por %p166, %p167
      %p169 = scmp.ne.s32.totalorder %s161, %s163
      %p170 = scmp.eq.s32.totalorder %s27, 1
      %p171 = por %p169, %p170
      %p172 = scmp.ne.s32.totalorder %s163, %s164
      %p173 = scmp.eq.s32.totalorder %s27, 0
      %p174 = por %p172, %p173
      %p175 = scmp.ne.s32.totalorder %s163, %s164
      %p176 = scmp.eq.s32.totalorder %s28, 1
      %p177 = por %p175, %p176
      %p179 = scmp.ne.s32.totalorder %s164, %s178
      %p180 = scmp.eq.s32.totalorder %s28, 0
      %p181 = por %p179, %p180
      %s183 = sadd.s32 %s182, 1
      %p186 = scmp.eq.s32.totalorder %s22, 1
      %p187 = scmp.ne.s32.totalorder %s182, %s184
      %p188 = scmp.eq.s32.totalorder %s22, 0
      %p189 = por %p187, %p188
      %p190 = scmp.ne.s32.totalorder %s182, %s184
      %p191 = scmp.eq.s32.totalorder %s27, 1
      %p192 = por %p190, %p191
      %p193 = scmp.ne.s32.totalorder %s184, %s185
      %p194 = scmp.eq.s32.totalorder %s27, 0
      %p195 = por %p193, %p194
      %p196 = scmp.ne.s32.totalorder %s184, %s185
      %p197 = scmp.eq.s32.totalorder %s28, 1
      %p198 = por %p196, %p197
      %p200 = scmp.ne.s32.totalorder %s185, %s199
      %p201 = scmp.eq.s32.totalorder %s28, 0
      %p202 = por %p200, %p201
      %s203 = ssub.s32 %s22, %s29
      %p204 = scmp.eq.s32.totalorder %s203, 0
      %s206 = sadd.s32 %s205, 1
      %s207 = scalar_select %p204, %s205, %s206
      %p210 = pneg %p204
      %p211 = scmp.eq.s32.totalorder %s22, 1
      %p212 = por %p210, %p211
      %p213 = scmp.ne.s32.totalorder %s205, %s208
      %p214 = scmp.eq.s32.totalorder %s22, 0
      %p215 = por %p213, %p214
      %p216 = scmp.ne.s32.totalorder %s205, %s208
      %p217 = scmp.eq.s32.totalorder %s27, 1
      %p218 = por %p216, %p217
      %p219 = scmp.ne.s32.totalorder %s208, %s209
      %p220 = scmp.eq.s32.totalorder %s27, 0
      %p221 = por %p219, %p220
      %p222 = scmp.ne.s32.totalorder %s208, %s209
      %p223 = scmp.eq.s32.totalorder %s28, 1
      %p224 = por %p222, %p223
      %p226 = scmp.ne.s32.totalorder %s209, %s225
      %p227 = scmp.eq.s32.totalorder %s28, 0
      %p228 = por %p226, %p227
      %p229 = scmp.le.s32.totalorder 1, %s22
      %p230 = scmp.lt.s32.totalorder %s22, 3
      %p231 = pnand %p229, %p230
      %p232 = pneg %p231
      // Predicated region
      $region9: #{tpu_custom_call.1} parent=5 // pred_check
        _
      $region10: #{tpu_custom_call.1} parent=5 // pred_check_branch
        %234 = sbr.rel (%p231) target = $region12
      $region11: #{tpu_custom_call.1} parent=5 // pred_region
        %s235 = ssub.s32 %s22, 1
        // Predicated region
        $region13: #{tpu_custom_call.1} parent=11 // pred_check
          %p236 = pneg %p69
        $region14: #{tpu_custom_call.1} parent=11 // pred_check_branch
          %238 = sbr.rel (%p236) target = $region16
        $region15: #{tpu_custom_call.1} parent=11 // pred_region
          %s240 = ssub.s32 8192, 8192
          %241 = vsyncadd [#allocation6], %s240
          %s242 = sshll.u32 [#allocation5], 4
          %s243 = int_to_ptr.vmem [resolvable:$true] %s242
          %248 = dma.hbm_to_vmem [thread:$0]  %s1, 8192, %s243, [#allocation6], 256, 256, 16
        $region16: #{tpu_custom_call.1} parent=11 // pred_fallthru
          _
        // Predicated region
        $region17: #{tpu_custom_call.1} parent=11 // pred_check
          %p249 = pneg %p90
        $region18: #{tpu_custom_call.1} parent=11 // pred_check_branch
          %251 = sbr.rel (%p249) target = $region20
        $region19: #{tpu_custom_call.1} parent=11 // pred_region
          %s253 = ssub.s32 4096, 4096
          %254 = vsyncadd [#allocation6], %s253
          %s255 = sshll.u32 [#allocation7], 4
          %s256 = int_to_ptr.vmem [resolvable:$true] %s255
          %261 = dma.hbm_to_vmem [thread:$0]  %s2, 4096, %s256, [#allocation6], 256, 256, 16
        $region20: #{tpu_custom_call.1} parent=11 // pred_fallthru
          _
        // Predicated region
        $region21: #{tpu_custom_call.1} parent=11 // pred_check
          %p262 = pneg %p111
        $region22: #{tpu_custom_call.1} parent=11 // pred_check_branch
          %264 = sbr.rel (%p262) target = $region24
        $region23: #{tpu_custom_call.1} parent=11 // pred_region
          _
        $region24: #{tpu_custom_call.1} parent=11 // pred_fallthru
          _
        // Predicated region
        $region25: #{tpu_custom_call.1} parent=11 // pred_check
          %p265 = pneg %p132
        $region26: #{tpu_custom_call.1} parent=11 // pred_check_branch
          %267 = sbr.rel (%p265) target = $region28
        $region27: #{tpu_custom_call.1} parent=11 // pred_region
          %s269 = ssub.s32 8192, 8192
          %270 = vsyncadd [#allocation9], %s269
          %s271 = sshll.u32 [#allocation8], 4
          %s272 = int_to_ptr.vmem [resolvable:$true] %s271
          %277 = dma.hbm_to_vmem [thread:$0]  %s4, 8192, %s272, [#allocation9], 256, 256, 16
        $region28: #{tpu_custom_call.1} parent=11 // pred_fallthru
          _
        // Predicated region
        $region29: #{tpu_custom_call.1} parent=11 // pred_check
          %p278 = pneg %p153
        $region30: #{tpu_custom_call.1} parent=11 // pred_check_branch
          %280 = sbr.rel (%p278) target = $region32
        $region31: #{tpu_custom_call.1} parent=11 // pred_region
          _
        $region32: #{tpu_custom_call.1} parent=11 // pred_fallthru
          _
        // Predicated region
        $region33: #{tpu_custom_call.1} parent=11 // pred_check
          %p281 = pneg %p174
        $region34: #{tpu_custom_call.1} parent=11 // pred_check_branch
          %283 = sbr.rel (%p281) target = $region36
        $region35: #{tpu_custom_call.1} parent=11 // pred_region
          %s285 = ssub.s32 1024, 1024
          %286 = vsyncadd [#allocation9], %s285
          %s287 = sshll.u32 [#allocation10], 4
          %s288 = int_to_ptr.vmem [resolvable:$true] %s287
          %293 = dma.hbm_to_vmem [thread:$0]  %s6, 1024, %s288, [#allocation9], 64, 64, 4
        $region36: #{tpu_custom_call.1} parent=11 // pred_fallthru
          _
        // Predicated region
        $region37: #{tpu_custom_call.1} parent=11 // pred_check
          %p294 = pneg %p195
        $region38: #{tpu_custom_call.1} parent=11 // pred_check_branch
          %296 = sbr.rel (%p294) target = $region40
        $region39: #{tpu_custom_call.1} parent=11 // pred_region
          _
        $region40: #{tpu_custom_call.1} parent=11 // pred_fallthru
          _
      $region12: #{tpu_custom_call.1} parent=5 // pred_fallthru
        _
      %p297 = scmp.lt.s32.totalorder %s22, 2
      // Predicated region
      $region41: #{tpu_custom_call.1} parent=5 // pred_check
        %p298 = pneg %p297
      $region42: #{tpu_custom_call.1} parent=5 // pred_check_branch
        %300 = sbr.rel (%p298) target = $region44
      $region43: #{tpu_custom_call.1} parent=5 // pred_region
        // Predicated region
        $region45: #{tpu_custom_call.1} parent=43 // pred_check
          %p301 = pneg %p42
        $region46: #{tpu_custom_call.1} parent=43 // pred_check_branch
          %303 = sbr.rel (%p301) target = $region48
        $region47: #{tpu_custom_call.1} parent=43 // pred_region
          %s304 = sand.u32 %s32, 1
          %s305 = scalar_lea.sflag [#allocation3], %s304
          %s306 = sand.u32 %s32, 1
          %s307 = smul.addr %s306, 32
          %s308 = scalar_lea.vmem [#allocation2], %s307
          %s309 = smul.u32 2, %s22
          %s311 = ssub.s32 512, 512
          %312 = vsyncadd %s305, %s311
          %s313 = smul.addr %s309, 2
          %s314 = smul.addr %s313, 128
          %s315 = scalar_lea.hbm %s0, %s314
          %s316 = sshll.u32 %s308, 4
          %s317 = int_to_ptr.vmem [resolvable:$true] %s316
          %322 = dma.hbm_to_vmem [thread:$0]  %s315, 512, %s317, %s305, 256, 256, 16
        $region48: #{tpu_custom_call.1} parent=43 // pred_fallthru
          _
      $region44: #{tpu_custom_call.1} parent=5 // pred_fallthru
        _
      %p323 = scmp.le.s32.totalorder 1, %s22
      %p324 = scmp.lt.s32.totalorder %s22, 3
      %p325 = pnand %p323, %p324
      %p326 = pneg %p325
      // Predicated region
      $region49: #{tpu_custom_call.1} parent=5 // pred_check
        _
      $region50: #{tpu_custom_call.1} parent=5 // pred_check_branch
        %328 = sbr.rel (%p325) target = $region52
      $region51: #{tpu_custom_call.1} parent=5 // pred_region
        %s329 = ssub.s32 %s22, 1
        %s330 = sand.u32 %s35, 1
        %s331 = scalar_lea.sflag [#allocation3], %s330
        %s332 = sand.u32 %s35, 1
        %s333 = smul.addr %s332, 32
        %s334 = scalar_lea.vmem [#allocation2], %s333
        // Predicated region
        $region53: #{tpu_custom_call.1} parent=51 // pred_check
          %p335 = pneg %p48
        $region54: #{tpu_custom_call.1} parent=51 // pred_check_branch
          %337 = sbr.rel (%p335) target = $region56
        $region55: #{tpu_custom_call.1} parent=51 // pred_region
          %338 = dma.done %s331, 512
        $region56: #{tpu_custom_call.1} parent=51 // pred_fallthru
          _
        // Predicated region
        $region57: #{tpu_custom_call.1} parent=51 // pred_check
          %p339 = pneg %p69
        $region58: #{tpu_custom_call.1} parent=51 // pred_check_branch
          %341 = sbr.rel (%p339) target = $region60
        $region59: #{tpu_custom_call.1} parent=51 // pred_region
          %342 = dma.done [#allocation6], 8192
        $region60: #{tpu_custom_call.1} parent=51 // pred_fallthru
          _
        // Predicated region
        $region61: #{tpu_custom_call.1} parent=51 // pred_check
          %p343 = pneg %p90
        $region62: #{tpu_custom_call.1} parent=51 // pred_check_branch
          %345 = sbr.rel (%p343) target = $region64
        $region63: #{tpu_custom_call.1} parent=51 // pred_region
          %346 = dma.done [#allocation6], 4096
        $region64: #{tpu_custom_call.1} parent=51 // pred_fallthru
          _
        // Predicated region
        $region65: #{tpu_custom_call.1} parent=51 // pred_check
          %p347 = pneg %p132
        $region66: #{tpu_custom_call.1} parent=51 // pred_check_branch
          %349 = sbr.rel (%p347) target = $region68
        $region67: #{tpu_custom_call.1} parent=51 // pred_region
          %350 = dma.done [#allocation9], 8192
        $region68: #{tpu_custom_call.1} parent=51 // pred_fallthru
          _
        // Predicated region
        $region69: #{tpu_custom_call.1} parent=51 // pred_check
          %p351 = pneg %p174
        $region70: #{tpu_custom_call.1} parent=51 // pred_check_branch
          %353 = sbr.rel (%p351) target = $region72
        $region71: #{tpu_custom_call.1} parent=51 // pred_region
          %354 = dma.done [#allocation9], 1024
        $region72: #{tpu_custom_call.1} parent=51 // pred_fallthru
          _
        %s355 = sand.u32 %s35, 1
        %s356 = scalar_lea.sflag [#allocation3], %s355
        %s357 = sand.u32 %s35, 1
        %s358 = smul.addr %s357, 32
        %s359 = scalar_lea.vmem [#allocation2], %s358
        %p360 = pneg %p48
        %p361 = pneg %p45
        %p362 = pneg %p69
        %p363 = pneg %p66
        %p364 = pneg %p90
        %p365 = pneg %p87
        %p366 = pneg %p111
        %p367 = pneg %p108
        %p368 = pneg %p132
        %p369 = pneg %p129
        %p370 = pneg %p153
        %p371 = pneg %p150
        %p372 = pneg %p174
        %p373 = pneg %p171
        %p374 = pneg %p195
        %p375 = pneg %p192
        %p376 = pneg %p221
        %p377 = pneg %p218
        %s378 = sand.u32 %s208, 1
        %s379 = scalar_lea.sflag [#allocation4], %s378
        %s380 = sand.u32 %s208, 1
        %s381 = smul.addr %s380, 112
        %s382 = scalar_lea.vmem [#allocation11], %s381
        %s383 = smul.u32 2, %s27
        %s384 = smul.u32 2, %s27
        %v386 = vld [vmem:[#allocation5] sm:$0xff]
        %v387 = vld [vmem:[#allocation5 + $0x8] sm:$0xff]
        %v388 = vld [vmem:[#allocation5 + $0x10] sm:$0xff]
        %v389 = vld [vmem:[#allocation5 + $0x18] sm:$0xff]
        %v390 = vld [vmem:[#allocation5 + $0x20] sm:$0xff]
        %v391 = vld [vmem:[#allocation5 + $0x28] sm:$0xff]
        %v392 = vld [vmem:[#allocation5 + $0x30] sm:$0xff]
        %v393 = vld [vmem:[#allocation5 + $0x38] sm:$0xff]
        %v394 = vld [vmem:[#allocation5 + $0x40] sm:$0xff]
        %v395 = vld [vmem:[#allocation5 + $0x48] sm:$0xff]
        %v396 = vld [vmem:[#allocation5 + $0x50] sm:$0xff]
        %v397 = vld [vmem:[#allocation5 + $0x58] sm:$0xff]
        %v398 = vld [vmem:[#allocation5 + $0x60] sm:$0xff]
        %v399 = vld [vmem:[#allocation5 + $0x68] sm:$0xff]
        %v400 = vld [vmem:[#allocation5 + $0x70] sm:$0xff]
        %v401 = vld [vmem:[#allocation5 + $0x78] sm:$0xff]
        %v402 = vld [vmem:[#allocation5 + $0x80] sm:$0xff]
        %v403 = vld [vmem:[#allocation5 + $0x88] sm:$0xff]
        %v404 = vld [vmem:[#allocation5 + $0x90] sm:$0xff]
        %v405 = vld [vmem:[#allocation5 + $0x98] sm:$0xff]
        %v406 = vld [vmem:[#allocation5 + $0xa0] sm:$0xff]
        %v407 = vld [vmem:[#allocation5 + $0xa8] sm:$0xff]
        %v408 = vld [vmem:[#allocation5 + $0xb0] sm:$0xff]
        %v409 = vld [vmem:[#allocation5 + $0xb8] sm:$0xff]
        %v410 = vld [vmem:[#allocation5 + $0xc0] sm:$0xff]
        %v411 = vld [vmem:[#allocation5 + $0xc8] sm:$0xff]
        %v412 = vld [vmem:[#allocation5 + $0xd0] sm:$0xff]
        %v413 = vld [vmem:[#allocation5 + $0xd8] sm:$0xff]
        %v414 = vld [vmem:[#allocation5 + $0xe0] sm:$0xff]
        %v415 = vld [vmem:[#allocation5 + $0xe8] sm:$0xff]
        %v416 = vld [vmem:[#allocation5 + $0xf0] sm:$0xff]
        %v417 = vld [vmem:[#allocation5 + $0xf8] sm:$0xff]
        %v418 = vld [vmem:[#allocation5 + $0x100] sm:$0xff]
        %v419 = vld [vmem:[#allocation5 + $0x108] sm:$0xff]
        %v420 = vld [vmem:[#allocation5 + $0x110] sm:$0xff]
        %v421 = vld [vmem:[#allocation5 + $0x118] sm:$0xff]
        %v422 = vld [vmem:[#allocation5 + $0x120] sm:$0xff]
        %v423 = vld [vmem:[#allocation5 + $0x128] sm:$0xff]
        %v424 = vld [vmem:[#allocation5 + $0x130] sm:$0xff]
        %v425 = vld [vmem:[#allocation5 + $0x138] sm:$0xff]
        %v426 = vld [vmem:[#allocation5 + $0x140] sm:$0xff]
        %v427 = vld [vmem:[#allocation5 + $0x148] sm:$0xff]
        %v428 = vld [vmem:[#allocation5 + $0x150] sm:$0xff]
        %v429 = vld [vmem:[#allocation5 + $0x158] sm:$0xff]
        %v430 = vld [vmem:[#allocation5 + $0x160] sm:$0xff]
        %v431 = vld [vmem:[#allocation5 + $0x168] sm:$0xff]
        %v432 = vld [vmem:[#allocation5 + $0x170] sm:$0xff]
        %v433 = vld [vmem:[#allocation5 + $0x178] sm:$0xff]
        %v434 = vld [vmem:[#allocation5 + $0x180] sm:$0xff]
        %v435 = vld [vmem:[#allocation5 + $0x188] sm:$0xff]
        %v436 = vld [vmem:[#allocation5 + $0x190] sm:$0xff]
        %v437 = vld [vmem:[#allocation5 + $0x198] sm:$0xff]
        %v438 = vld [vmem:[#allocation5 + $0x1a0] sm:$0xff]
        %v439 = vld [vmem:[#allocation5 + $0x1a8] sm:$0xff]
        %v440 = vld [vmem:[#allocation5 + $0x1b0] sm:$0xff]
        %v441 = vld [vmem:[#allocation5 + $0x1b8] sm:$0xff]
        %v442 = vld [vmem:[#allocation5 + $0x1c0] sm:$0xff]
        %v443 = vld [vmem:[#allocation5 + $0x1c8] sm:$0xff]
        %v444 = vld [vmem:[#allocation5 + $0x1d0] sm:$0xff]
        %v445 = vld [vmem:[#allocation5 + $0x1d8] sm:$0xff]
        %v446 = vld [vmem:[#allocation5 + $0x1e0] sm:$0xff]
        %v447 = vld [vmem:[#allocation5 + $0x1e8] sm:$0xff]
        %v448 = vld [vmem:[#allocation5 + $0x1f0] sm:$0xff]
        %v449 = vld [vmem:[#allocation5 + $0x1f8] sm:$0xff]
        %v450 = vld [vmem:[#allocation7] sm:$0xff]
        %v451 = vld [vmem:[#allocation7 + $0x8] sm:$0xff]
        %v452 = vld [vmem:[#allocation7 + $0x10] sm:$0xff]
        %v453 = vld [vmem:[#allocation7 + $0x18] sm:$0xff]
        %v454 = vld [vmem:[#allocation7 + $0x20] sm:$0xff]
        %v455 = vld [vmem:[#allocation7 + $0x28] sm:$0xff]
        %v456 = vld [vmem:[#allocation7 + $0x30] sm:$0xff]
        %v457 = vld [vmem:[#allocation7 + $0x38] sm:$0xff]
        %v458 = vld [vmem:[#allocation7 + $0x40] sm:$0xff]
        %v459 = vld [vmem:[#allocation7 + $0x48] sm:$0xff]
        %v460 = vld [vmem:[#allocation7 + $0x50] sm:$0xff]
        %v461 = vld [vmem:[#allocation7 + $0x58] sm:$0xff]
        %v462 = vld [vmem:[#allocation7 + $0x60] sm:$0xff]
        %v463 = vld [vmem:[#allocation7 + $0x68] sm:$0xff]
        %v464 = vld [vmem:[#allocation7 + $0x70] sm:$0xff]
        %v465 = vld [vmem:[#allocation7 + $0x78] sm:$0xff]
        %v466 = vld [vmem:[#allocation7 + $0x80] sm:$0xff]
        %v467 = vld [vmem:[#allocation7 + $0x88] sm:$0xff]
        %v468 = vld [vmem:[#allocation7 + $0x90] sm:$0xff]
        %v469 = vld [vmem:[#allocation7 + $0x98] sm:$0xff]
        %v470 = vld [vmem:[#allocation7 + $0xa0] sm:$0xff]
        %v471 = vld [vmem:[#allocation7 + $0xa8] sm:$0xff]
        %v472 = vld [vmem:[#allocation7 + $0xb0] sm:$0xff]
        %v473 = vld [vmem:[#allocation7 + $0xb8] sm:$0xff]
        %v474 = vld [vmem:[#allocation7 + $0xc0] sm:$0xff]
        %v475 = vld [vmem:[#allocation7 + $0xc8] sm:$0xff]
        %v476 = vld [vmem:[#allocation7 + $0xd0] sm:$0xff]
        %v477 = vld [vmem:[#allocation7 + $0xd8] sm:$0xff]
        %v478 = vld [vmem:[#allocation7 + $0xe0] sm:$0xff]
        %v479 = vld [vmem:[#allocation7 + $0xe8] sm:$0xff]
        %v480 = vld [vmem:[#allocation7 + $0xf0] sm:$0xff]
        %v481 = vld [vmem:[#allocation7 + $0xf8] sm:$0xff]
        %v482 = vld [vmem:[#allocation8] sm:$0xff]
        %v483 = vld [vmem:[#allocation8 + $0x8] sm:$0xff]
        %v484 = vld [vmem:[#allocation8 + $0x10] sm:$0xff]
        %v485 = vld [vmem:[#allocation8 + $0x18] sm:$0xff]
        %v486 = vld [vmem:[#allocation8 + $0x20] sm:$0xff]
        %v487 = vld [vmem:[#allocation8 + $0x28] sm:$0xff]
        %v488 = vld [vmem:[#allocation8 + $0x30] sm:$0xff]
        %v489 = vld [vmem:[#allocation8 + $0x38] sm:$0xff]
        %v490 = vld [vmem:[#allocation8 + $0x40] sm:$0xff]
        %v491 = vld [vmem:[#allocation8 + $0x48] sm:$0xff]
        %v492 = vld [vmem:[#allocation8 + $0x50] sm:$0xff]
        %v493 = vld [vmem:[#allocation8 + $0x58] sm:$0xff]
        %v494 = vld [vmem:[#allocation8 + $0x60] sm:$0xff]
        %v495 = vld [vmem:[#allocation8 + $0x68] sm:$0xff]
        %v496 = vld [vmem:[#allocation8 + $0x70] sm:$0xff]
        %v497 = vld [vmem:[#allocation8 + $0x78] sm:$0xff]
        %v498 = vld [vmem:[#allocation8 + $0x80] sm:$0xff]
        %v499 = vld [vmem:[#allocation8 + $0x88] sm:$0xff]
        %v500 = vld [vmem:[#allocation8 + $0x90] sm:$0xff]
        %v501 = vld [vmem:[#allocation8 + $0x98] sm:$0xff]
        %v502 = vld [vmem:[#allocation8 + $0xa0] sm:$0xff]
        %v503 = vld [vmem:[#allocation8 + $0xa8] sm:$0xff]
        %v504 = vld [vmem:[#allocation8 + $0xb0] sm:$0xff]
        %v505 = vld [vmem:[#allocation8 + $0xb8] sm:$0xff]
        %v506 = vld [vmem:[#allocation8 + $0xc0] sm:$0xff]
        %v507 = vld [vmem:[#allocation8 + $0xc8] sm:$0xff]
        %v508 = vld [vmem:[#allocation8 + $0xd0] sm:$0xff]
        %v509 = vld [vmem:[#allocation8 + $0xd8] sm:$0xff]
        %v510 = vld [vmem:[#allocation8 + $0xe0] sm:$0xff]
        %v511 = vld [vmem:[#allocation8 + $0xe8] sm:$0xff]
        %v512 = vld [vmem:[#allocation8 + $0xf0] sm:$0xff]
        %v513 = vld [vmem:[#allocation8 + $0xf8] sm:$0xff]
        %v514 = vld [vmem:[#allocation8 + $0x100] sm:$0xff]
        %v515 = vld [vmem:[#allocation8 + $0x108] sm:$0xff]
        %v516 = vld [vmem:[#allocation8 + $0x110] sm:$0xff]
        %v517 = vld [vmem:[#allocation8 + $0x118] sm:$0xff]
        %v518 = vld [vmem:[#allocation8 + $0x120] sm:$0xff]
        %v519 = vld [vmem:[#allocation8 + $0x128] sm:$0xff]
        %v520 = vld [vmem:[#allocation8 + $0x130] sm:$0xff]
        %v521 = vld [vmem:[#allocation8 + $0x138] sm:$0xff]
        %v522 = vld [vmem:[#allocation8 + $0x140] sm:$0xff]
        %v523 = vld [vmem:[#allocation8 + $0x148] sm:$0xff]
        %v524 = vld [vmem:[#allocation8 + $0x150] sm:$0xff]
        %v525 = vld [vmem:[#allocation8 + $0x158] sm:$0xff]
        %v526 = vld [vmem:[#allocation8 + $0x160] sm:$0xff]
        %v527 = vld [vmem:[#allocation8 + $0x168] sm:$0xff]
        %v528 = vld [vmem:[#allocation8 + $0x170] sm:$0xff]
        %v529 = vld [vmem:[#allocation8 + $0x178] sm:$0xff]
        %v530 = vld [vmem:[#allocation8 + $0x180] sm:$0xff]
        %v531 = vld [vmem:[#allocation8 + $0x188] sm:$0xff]
        %v532 = vld [vmem:[#allocation8 + $0x190] sm:$0xff]
        %v533 = vld [vmem:[#allocation8 + $0x198] sm:$0xff]
        %v534 = vld [vmem:[#allocation8 + $0x1a0] sm:$0xff]
        %v535 = vld [vmem:[#allocation8 + $0x1a8] sm:$0xff]
        %v536 = vld [vmem:[#allocation8 + $0x1b0] sm:$0xff]
        %v537 = vld [vmem:[#allocation8 + $0x1b8] sm:$0xff]
        %v538 = vld [vmem:[#allocation8 + $0x1c0] sm:$0xff]
        %v539 = vld [vmem:[#allocation8 + $0x1c8] sm:$0xff]
        %v540 = vld [vmem:[#allocation8 + $0x1d0] sm:$0xff]
        %v541 = vld [vmem:[#allocation8 + $0x1d8] sm:$0xff]
        %v542 = vld [vmem:[#allocation8 + $0x1e0] sm:$0xff]
        %v543 = vld [vmem:[#allocation8 + $0x1e8] sm:$0xff]
        %v544 = vld [vmem:[#allocation8 + $0x1f0] sm:$0xff]
        %v545 = vld [vmem:[#allocation8 + $0x1f8] sm:$0xff]
        %v546 = vld [vmem:[#allocation10] sm:$0xf]
        %v547 = vld [vmem:[#allocation10 + $0x4] sm:$0xf]
        %v548 = vld [vmem:[#allocation10 + $0x8] sm:$0xf]
        %v549 = vld [vmem:[#allocation10 + $0xc] sm:$0xf]
        %v550 = vld [vmem:[#allocation10 + $0x10] sm:$0xf]
        %v551 = vld [vmem:[#allocation10 + $0x14] sm:$0xf]
        %v552 = vld [vmem:[#allocation10 + $0x18] sm:$0xf]
        %v553 = vld [vmem:[#allocation10 + $0x1c] sm:$0xf]
        %v554 = vld [vmem:[#allocation10 + $0x20] sm:$0xf]
        %v555 = vld [vmem:[#allocation10 + $0x24] sm:$0xf]
        %v556 = vld [vmem:[#allocation10 + $0x28] sm:$0xf]
        %v557 = vld [vmem:[#allocation10 + $0x2c] sm:$0xf]
        %v558 = vld [vmem:[#allocation10 + $0x30] sm:$0xf]
        %v559 = vld [vmem:[#allocation10 + $0x34] sm:$0xf]
        %v560 = vld [vmem:[#allocation10 + $0x38] sm:$0xf]
        %v561 = vld [vmem:[#allocation10 + $0x3c] sm:$0xf]
        %v562 = vld [vmem:[%s334] sm:$0xff]
        %v563 = vld [vmem:[%s334 + $0x8] sm:$0xff]
        %v564 = vld [vmem:[%s334 + $0x10] sm:$0xff]
        %v565 = vld [vmem:[%s334 + $0x18] sm:$0xff]
        %v566 = vpack.c.bf16 %v564, %v562
        %v567 = vpack.c.bf16 %v565, %v563
        %v568 = vld [vmem:[%s3] sm:$0xf]
        %v570 = vlaneseq
        %v571 = vshrl.u32 %v570, 7
        %v572 = vsub.s32 0, %v571
        %v573 = vrot.slane %v568, %v572
        %v574 = vlaneseq
        %v575 = vshrl.u32 %v574, 7
        %v576 = vsub.s32 1, %v575
        %v577 = vrot.slane %v568, %v576
        %v578 = vlaneseq
        %v579 = vshrl.u32 %v578, 7
        %v580 = vsub.s32 2, %v579
        %v581 = vrot.slane %v568, %v580
        %v582 = vlaneseq
        %v583 = vshrl.u32 %v582, 7
        %v584 = vsub.s32 3, %v583
        %v585 = vrot.slane %v568, %v584
        %v654 = vunpack.c.l.b16 %v386
        %v655 = vunpack.c.h.b16 %v386
        %v656 = vunpack.c.l.b16 %v387
        %v657 = vunpack.c.h.b16 %v387
        %v658 = vunpack.c.l.b16 %v388
        %v659 = vunpack.c.h.b16 %v388
        %v660 = vunpack.c.l.b16 %v389
        %v661 = vunpack.c.h.b16 %v389
        %v662 = vunpack.c.l.b16 %v390
        %v663 = vunpack.c.h.b16 %v390
        %v664 = vunpack.c.l.b16 %v391
        %v665 = vunpack.c.h.b16 %v391
        %v666 = vunpack.c.l.b16 %v392
        %v667 = vunpack.c.h.b16 %v392
        %v668 = vunpack.c.l.b16 %v393
        %v669 = vunpack.c.h.b16 %v393
        %v670 = vunpack.c.l.b16 %v394
        %v671 = vunpack.c.h.b16 %v394
        %v672 = vunpack.c.l.b16 %v395
        %v673 = vunpack.c.h.b16 %v395
        %v674 = vunpack.c.l.b16 %v396
        %v675 = vunpack.c.h.b16 %v396
        %v676 = vunpack.c.l.b16 %v397
        %v677 = vunpack.c.h.b16 %v397
        %v678 = vunpack.c.l.b16 %v398
        %v679 = vunpack.c.h.b16 %v398
        %v680 = vunpack.c.l.b16 %v399
        %v681 = vunpack.c.h.b16 %v399
        %v682 = vunpack.c.l.b16 %v400
        %v683 = vunpack.c.h.b16 %v400
        %v684 = vunpack.c.l.b16 %v401
        %v685 = vunpack.c.h.b16 %v401
        %v686 = vunpack.c.l.b16 %v402
        %v687 = vunpack.c.h.b16 %v402
        %v688 = vunpack.c.l.b16 %v403
        %v689 = vunpack.c.h.b16 %v403
        %v690 = vunpack.c.l.b16 %v404
        %v691 = vunpack.c.h.b16 %v404
        %v692 = vunpack.c.l.b16 %v405
        %v693 = vunpack.c.h.b16 %v405
        %v694 = vunpack.c.l.b16 %v406
        %v695 = vunpack.c.h.b16 %v406
        %v696 = vunpack.c.l.b16 %v407
        %v697 = vunpack.c.h.b16 %v407
        %v698 = vunpack.c.l.b16 %v408
        %v699 = vunpack.c.h.b16 %v408
        %v700 = vunpack.c.l.b16 %v409
        %v701 = vunpack.c.h.b16 %v409
        %v702 = vunpack.c.l.b16 %v410
        %v703 = vunpack.c.h.b16 %v410
        %v704 = vunpack.c.l.b16 %v411
        %v705 = vunpack.c.h.b16 %v411
        %v706 = vunpack.c.l.b16 %v412
        %v707 = vunpack.c.h.b16 %v412
        %v708 = vunpack.c.l.b16 %v413
        %v709 = vunpack.c.h.b16 %v413
        %v710 = vunpack.c.l.b16 %v414
        %v711 = vunpack.c.h.b16 %v414
        %v712 = vunpack.c.l.b16 %v415
        %v713 = vunpack.c.h.b16 %v415
        %v714 = vunpack.c.l.b16 %v416
        %v715 = vunpack.c.h.b16 %v416
        %v716 = vunpack.c.l.b16 %v417
        %v717 = vunpack.c.h.b16 %v417
        %v718 = vunpack.c.l.b16 %v418
        %v719 = vunpack.c.h.b16 %v418
        %v720 = vunpack.c.l.b16 %v419
        %v721 = vunpack.c.h.b16 %v419
        %v722 = vunpack.c.l.b16 %v420
        %v723 = vunpack.c.h.b16 %v420
        %v724 = vunpack.c.l.b16 %v421
        %v725 = vunpack.c.h.b16 %v421
        %v726 = vunpack.c.l.b16 %v422
        %v727 = vunpack.c.h.b16 %v422
        %v728 = vunpack.c.l.b16 %v423
        %v729 = vunpack.c.h.b16 %v423
        %v730 = vunpack.c.l.b16 %v424
        %v731 = vunpack.c.h.b16 %v424
        %v732 = vunpack.c.l.b16 %v425
        %v733 = vunpack.c.h.b16 %v425
        %v734 = vunpack.c.l.b16 %v426
        %v735 = vunpack.c.h.b16 %v426
        %v736 = vunpack.c.l.b16 %v427
        %v737 = vunpack.c.h.b16 %v427
        %v738 = vunpack.c.l.b16 %v428
        %v739 = vunpack.c.h.b16 %v428
        %v740 = vunpack.c.l.b16 %v429
        %v741 = vunpack.c.h.b16 %v429
        %v742 = vunpack.c.l.b16 %v430
        %v743 = vunpack.c.h.b16 %v430
        %v744 = vunpack.c.l.b16 %v431
        %v745 = vunpack.c.h.b16 %v431
        %v746 = vunpack.c.l.b16 %v432
        %v747 = vunpack.c.h.b16 %v432
        %v748 = vunpack.c.l.b16 %v433
        %v749 = vunpack.c.h.b16 %v433
        %v750 = vunpack.c.l.b16 %v434
        %v751 = vunpack.c.h.b16 %v434
        %v752 = vunpack.c.l.b16 %v435
        %v753 = vunpack.c.h.b16 %v435
        %v754 = vunpack.c.l.b16 %v436
        %v755 = vunpack.c.h.b16 %v436
        %v756 = vunpack.c.l.b16 %v437
        %v757 = vunpack.c.h.b16 %v437
        %v758 = vunpack.c.l.b16 %v438
        %v759 = vunpack.c.h.b16 %v438
        %v760 = vunpack.c.l.b16 %v439
        %v761 = vunpack.c.h.b16 %v439
        %v762 = vunpack.c.l.b16 %v440
        %v763 = vunpack.c.h.b16 %v440
        %v764 = vunpack.c.l.b16 %v441
        %v765 = vunpack.c.h.b16 %v441
        %v766 = vunpack.c.l.b16 %v442
        %v767 = vunpack.c.h.b16 %v442
        %v768 = vunpack.c.l.b16 %v443
        %v769 = vunpack.c.h.b16 %v443
        %v770 = vunpack.c.l.b16 %v444
        %v771 = vunpack.c.h.b16 %v444
        %v772 = vunpack.c.l.b16 %v445
        %v773 = vunpack.c.h.b16 %v445
        %v774 = vunpack.c.l.b16 %v446
        %v775 = vunpack.c.h.b16 %v446
        %v776 = vunpack.c.l.b16 %v447
        %v777 = vunpack.c.h.b16 %v447
        %v778 = vunpack.c.l.b16 %v448
        %v779 = vunpack.c.h.b16 %v448
        %v780 = vunpack.c.l.b16 %v449
        %v781 = vunpack.c.h.b16 %v449
        %v782 = vpack.c.b16 %v658, %v654
        %v783 = vpack.c.b16 %v659, %v655
        %v784 = vpack.c.b16 %v660, %v656
        %v785 = vpack.c.b16 %v661, %v657
        %v786 = vpack.c.b16 %v666, %v662
        %v787 = vpack.c.b16 %v667, %v663
        %v788 = vpack.c.b16 %v668, %v664
        %v789 = vpack.c.b16 %v669, %v665
        %v790 = vpack.c.b16 %v674, %v670
        %v791 = vpack.c.b16 %v675, %v671
        %v792 = vpack.c.b16 %v676, %v672
        %v793 = vpack.c.b16 %v677, %v673
        %v794 = vpack.c.b16 %v682, %v678
        %v795 = vpack.c.b16 %v683, %v679
        %v796 = vpack.c.b16 %v684, %v680
        %v797 = vpack.c.b16 %v685, %v681
        %v798 = vpack.c.b16 %v690, %v686
        %v799 = vpack.c.b16 %v691, %v687
        %v800 = vpack.c.b16 %v692, %v688
        %v801 = vpack.c.b16 %v693, %v689
        %v802 = vpack.c.b16 %v698, %v694
        %v803 = vpack.c.b16 %v699, %v695
        %v804 = vpack.c.b16 %v700, %v696
        %v805 = vpack.c.b16 %v701, %v697
        %v806 = vpack.c.b16 %v706, %v702
        %v807 = vpack.c.b16 %v707, %v703
        %v808 = vpack.c.b16 %v708, %v704
        %v809 = vpack.c.b16 %v709, %v705
        %v810 = vpack.c.b16 %v714, %v710
        %v811 = vpack.c.b16 %v715, %v711
        %v812 = vpack.c.b16 %v716, %v712
        %v813 = vpack.c.b16 %v717, %v713
        %v814 = vpack.c.b16 %v722, %v718
        %v815 = vpack.c.b16 %v723, %v719
        %v816 = vpack.c.b16 %v724, %v720
        %v817 = vpack.c.b16 %v725, %v721
        %v818 = vpack.c.b16 %v730, %v726
        %v819 = vpack.c.b16 %v731, %v727
        %v820 = vpack.c.b16 %v732, %v728
        %v821 = vpack.c.b16 %v733, %v729
        %v822 = vpack.c.b16 %v738, %v734
        %v823 = vpack.c.b16 %v739, %v735
        %v824 = vpack.c.b16 %v740, %v736
        %v825 = vpack.c.b16 %v741, %v737
        %v826 = vpack.c.b16 %v746, %v742
        %v827 = vpack.c.b16 %v747, %v743
        %v828 = vpack.c.b16 %v748, %v744
        %v829 = vpack.c.b16 %v749, %v745
        %v830 = vpack.c.b16 %v754, %v750
        %v831 = vpack.c.b16 %v755, %v751
        %v832 = vpack.c.b16 %v756, %v752
        %v833 = vpack.c.b16 %v757, %v753
        %v834 = vpack.c.b16 %v762, %v758
        %v835 = vpack.c.b16 %v763, %v759
        %v836 = vpack.c.b16 %v764, %v760
        %v837 = vpack.c.b16 %v765, %v761
        %v838 = vpack.c.b16 %v770, %v766
        %v839 = vpack.c.b16 %v771, %v767
        %v840 = vpack.c.b16 %v772, %v768
        %v841 = vpack.c.b16 %v773, %v769
        %v842 = vpack.c.b16 %v778, %v774
        %v843 = vpack.c.b16 %v779, %v775
        %v844 = vpack.c.b16 %v780, %v776
        %v845 = vpack.c.b16 %v781, %v777
        %910 = vmatprep.subr.bf16.mxu0 %v783
        %911 = vmatpush1.bf16.msra.mxu0 %v782
        %912 = vmatprep.subr.bf16.mxu0 %v787
        %913 = vmatpush1.bf16.msra.mxu0 %v786
        %914 = vmatprep.subr.bf16.mxu0 %v791
        %915 = vmatpush1.bf16.msra.mxu0 %v790
        %916 = vmatprep.subr.bf16.mxu0 %v795
        %917 = vmatpush1.bf16.msra.mxu0 %v794
        %918 = vmatprep.subr.bf16.mxu0 %v799
        %919 = vmatpush1.bf16.msra.mxu0 %v798
        %920 = vmatprep.subr.bf16.mxu0 %v803
        %921 = vmatpush1.bf16.msra.mxu0 %v802
        %922 = vmatprep.subr.bf16.mxu0 %v807
        %923 = vmatpush1.bf16.msra.mxu0 %v806
        %924 = vmatprep.subr.bf16.mxu0 %v811
        %925 = vmatpush1.bf16.msra.mxu0 %v810
        %926 = vmatprep.subr.bf16.mxu0 %v815
        %927 = vmatpush1.bf16.msra.mxu0 %v814
        %928 = vmatprep.subr.bf16.mxu0 %v819
        %929 = vmatpush1.bf16.msra.mxu0 %v818
        %930 = vmatprep.subr.bf16.mxu0 %v823
        %931 = vmatpush1.bf16.msra.mxu0 %v822
        %932 = vmatprep.subr.bf16.mxu0 %v827
        %933 = vmatpush1.bf16.msra.mxu0 %v826
        %934 = vmatprep.subr.bf16.mxu0 %v831
        %935 = vmatpush1.bf16.msra.mxu0 %v830
        %936 = vmatprep.subr.bf16.mxu0 %v835
        %937 = vmatpush1.bf16.msra.mxu0 %v834
        %938 = vmatprep.subr.bf16.mxu0 %v839
        %939 = vmatpush1.bf16.msra.mxu0 %v838
        %940 = vmatprep.subr.bf16.mxu0 %v843
        %941 = vmatpush1.bf16.msra.mxu0 %v842
        %942 = vmatprep.mubr.bf16.mxu0 %v567
        %943 = vmatmul.mubr.bf16.gmra.mrb[0].mxu0 %v566
        %v944 = vpop.f32.mrb[0].mxu0
        %v945 = vadd.f32 %v573, %v944
        %v946 = vpop.f32.mrb[0].mxu0
        %v947 = vadd.f32 %v577, %v946
        %v948 = vpop.f32.mrb[0].mxu0
        %v949 = vadd.f32 %v573, %v948
        %v950 = vpop.f32.mrb[0].mxu0
        %v951 = vadd.f32 %v577, %v950
        %952 = vdwg.mxu0
        %953 = vmatprep.subr.bf16.mxu0 %v785
        %954 = vmatpush1.bf16.msra.mxu0 %v784
        %955 = vmatprep.subr.bf16.mxu0 %v789
        %956 = vmatpush1.bf16.msra.mxu0 %v788
        %957 = vmatprep.subr.bf16.mxu0 %v793
        %958 = vmatpush1.bf16.msra.mxu0 %v792
        %959 = vmatprep.subr.bf16.mxu0 %v797
        %960 = vmatpush1.bf16.msra.mxu0 %v796
        %961 = vmatprep.subr.bf16.mxu0 %v801
        %962 = vmatpush1.bf16.msra.mxu0 %v800
        %963 = vmatprep.subr.bf16.mxu0 %v805
        %964 = vmatpush1.bf16.msra.mxu0 %v804
        %965 = vmatprep.subr.bf16.mxu0 %v809
        %966 = vmatpush1.bf16.msra.mxu0 %v808
        %967 = vmatprep.subr.bf16.mxu0 %v813
        %968 = vmatpush1.bf16.msra.mxu0 %v812
        %969 = vmatprep.subr.bf16.mxu0 %v817
        %970 = vmatpush1.bf16.msra.mxu0 %v816
        %971 = vmatprep.subr.bf16.mxu0 %v821
        %972 = vmatpush1.bf16.msra.mxu0 %v820
        %973 = vmatprep.subr.bf16.mxu0 %v825
        %974 = vmatpush1.bf16.msra.mxu0 %v824
        %975 = vmatprep.subr.bf16.mxu0 %v829
        %976 = vmatpush1.bf16.msra.mxu0 %v828
        %977 = vmatprep.subr.bf16.mxu0 %v833
        %978 = vmatpush1.bf16.msra.mxu0 %v832
        %979 = vmatprep.subr.bf16.mxu0 %v837
        %980 = vmatpush1.bf16.msra.mxu0 %v836
        %981 = vmatprep.subr.bf16.mxu0 %v841
        %982 = vmatpush1.bf16.msra.mxu0 %v840
        %983 = vmatprep.subr.bf16.mxu0 %v845
        %984 = vmatpush1.bf16.msra.mxu0 %v844
        %985 = vmatprep.mubr.bf16.mxu0 %v567
        %986 = vmatmul.mubr.bf16.gmra.mrb[0].mxu0 %v566
        %v987 = vpop.f32.mrb[0].mxu0
        %v988 = vadd.f32 %v581, %v987
        %v989 = vpop.f32.mrb[0].mxu0
        %v990 = vadd.f32 %v585, %v989
        %v991 = vpop.f32.mrb[0].mxu0
        %v992 = vadd.f32 %v581, %v991
        %v993 = vpop.f32.mrb[0].mxu0
        %v994 = vadd.f32 %v585, %v993
        %995 = vdwg.mxu0
        %v996 = vld [vmem:[%s5] sm:$0xf]
        %v998 = vlaneseq
        %v999 = vshrl.u32 %v998, 7
        %v1000 = vsub.s32 0, %v999
        %v1001 = vrot.slane %v996, %v1000
        %v1002 = vlaneseq
        %v1003 = vshrl.u32 %v1002, 7
        %v1004 = vsub.s32 1, %v1003
        %v1005 = vrot.slane %v996, %v1004
        %v1006 = vlaneseq
        %v1007 = vshrl.u32 %v1006, 7
        %v1008 = vsub.s32 2, %v1007
        %v1009 = vrot.slane %v996, %v1008
        %v1010 = vlaneseq
        %v1011 = vshrl.u32 %v1010, 7
        %v1012 = vsub.s32 3, %v1011
        %v1013 = vrot.slane %v996, %v1012
        %v1050 = vunpack.c.l.b16 %v450
        %v1051 = vunpack.c.h.b16 %v450
        %v1052 = vunpack.c.l.b16 %v451
        %v1053 = vunpack.c.h.b16 %v451
        %v1054 = vunpack.c.l.b16 %v452
        %v1055 = vunpack.c.h.b16 %v452
        %v1056 = vunpack.c.l.b16 %v453
        %v1057 = vunpack.c.h.b16 %v453
        %v1058 = vunpack.c.l.b16 %v454
        %v1059 = vunpack.c.h.b16 %v454
        %v1060 = vunpack.c.l.b16 %v455
        %v1061 = vunpack.c.h.b16 %v455
        %v1062 = vunpack.c.l.b16 %v456
        %v1063 = vunpack.c.h.b16 %v456
        %v1064 = vunpack.c.l.b16 %v457
        %v1065 = vunpack.c.h.b16 %v457
        %v1066 = vunpack.c.l.b16 %v458
        %v1067 = vunpack.c.h.b16 %v458
        %v1068 = vunpack.c.l.b16 %v459
        %v1069 = vunpack.c.h.b16 %v459
        %v1070 = vunpack.c.l.b16 %v460
        %v1071 = vunpack.c.h.b16 %v460
        %v1072 = vunpack.c.l.b16 %v461
        %v1073 = vunpack.c.h.b16 %v461
        %v1074 = vunpack.c.l.b16 %v462
        %v1075 = vunpack.c.h.b16 %v462
        %v1076 = vunpack.c.l.b16 %v463
        %v1077 = vunpack.c.h.b16 %v463
        %v1078 = vunpack.c.l.b16 %v464
        %v1079 = vunpack.c.h.b16 %v464
        %v1080 = vunpack.c.l.b16 %v465
        %v1081 = vunpack.c.h.b16 %v465
        %v1082 = vunpack.c.l.b16 %v466
        %v1083 = vunpack.c.h.b16 %v466
        %v1084 = vunpack.c.l.b16 %v467
        %v1085 = vunpack.c.h.b16 %v467
        %v1086 = vunpack.c.l.b16 %v468
        %v1087 = vunpack.c.h.b16 %v468
        %v1088 = vunpack.c.l.b16 %v469
        %v1089 = vunpack.c.h.b16 %v469
        %v1090 = vunpack.c.l.b16 %v470
        %v1091 = vunpack.c.h.b16 %v470
        %v1092 = vunpack.c.l.b16 %v471
        %v1093 = vunpack.c.h.b16 %v471
        %v1094 = vunpack.c.l.b16 %v472
        %v1095 = vunpack.c.h.b16 %v472
        %v1096 = vunpack.c.l.b16 %v473
        %v1097 = vunpack.c.h.b16 %v473
        %v1098 = vunpack.c.l.b16 %v474
        %v1099 = vunpack.c.h.b16 %v474
        %v1100 = vunpack.c.l.b16 %v475
        %v1101 = vunpack.c.h.b16 %v475
        %v1102 = vunpack.c.l.b16 %v476
        %v1103 = vunpack.c.h.b16 %v476
        %v1104 = vunpack.c.l.b16 %v477
        %v1105 = vunpack.c.h.b16 %v477
        %v1106 = vunpack.c.l.b16 %v478
        %v1107 = vunpack.c.h.b16 %v478
        %v1108 = vunpack.c.l.b16 %v479
        %v1109 = vunpack.c.h.b16 %v479
        %v1110 = vunpack.c.l.b16 %v480
        %v1111 = vunpack.c.h.b16 %v480
        %v1112 = vunpack.c.l.b16 %v481
        %v1113 = vunpack.c.h.b16 %v481
        %v1114 = vpack.c.b16 %v1054, %v1050
        %v1115 = vpack.c.b16 %v1055, %v1051
        %v1116 = vpack.c.b16 %v1056, %v1052
        %v1117 = vpack.c.b16 %v1057, %v1053
        %v1118 = vpack.c.b16 %v1062, %v1058
        %v1119 = vpack.c.b16 %v1063, %v1059
        %v1120 = vpack.c.b16 %v1064, %v1060
        %v1121 = vpack.c.b16 %v1065, %v1061
        %v1122 = vpack.c.b16 %v1070, %v1066
        %v1123 = vpack.c.b16 %v1071, %v1067
        %v1124 = vpack.c.b16 %v1072, %v1068
        %v1125 = vpack.c.b16 %v1073, %v1069
        %v1126 = vpack.c.b16 %v1078, %v1074
        %v1127 = vpack.c.b16 %v1079, %v1075
        %v1128 = vpack.c.b16 %v1080, %v1076
        %v1129 = vpack.c.b16 %v1081, %v1077
        %v1130 = vpack.c.b16 %v1086, %v1082
        %v1131 = vpack.c.b16 %v1087, %v1083
        %v1132 = vpack.c.b16 %v1088, %v1084
        %v1133 = vpack.c.b16 %v1089, %v1085
        %v1134 = vpack.c.b16 %v1094, %v1090
        %v1135 = vpack.c.b16 %v1095, %v1091
        %v1136 = vpack.c.b16 %v1096, %v1092
        %v1137 = vpack.c.b16 %v1097, %v1093
        %v1138 = vpack.c.b16 %v1102, %v1098
        %v1139 = vpack.c.b16 %v1103, %v1099
        %v1140 = vpack.c.b16 %v1104, %v1100
        %v1141 = vpack.c.b16 %v1105, %v1101
        %v1142 = vpack.c.b16 %v1110, %v1106
        %v1143 = vpack.c.b16 %v1111, %v1107
        %v1144 = vpack.c.b16 %v1112, %v1108
        %v1145 = vpack.c.b16 %v1113, %v1109
        %1178 = vmatprep.subr.bf16.mxu0 %v1115
        %1179 = vmatpush1.bf16.msra.mxu0 %v1114
        %1180 = vmatprep.subr.bf16.mxu0 %v1119
        %1181 = vmatpush1.bf16.msra.mxu0 %v1118
        %1182 = vmatprep.subr.bf16.mxu0 %v1123
        %1183 = vmatpush1.bf16.msra.mxu0 %v1122
        %1184 = vmatprep.subr.bf16.mxu0 %v1127
        %1185 = vmatpush1.bf16.msra.mxu0 %v1126
        %1186 = vmatprep.subr.bf16.mxu0 %v1131
        %1187 = vmatpush1.bf16.msra.mxu0 %v1130
        %1188 = vmatprep.subr.bf16.mxu0 %v1135
        %1189 = vmatpush1.bf16.msra.mxu0 %v1134
        %1190 = vmatprep.subr.bf16.mxu0 %v1139
        %1191 = vmatpush1.bf16.msra.mxu0 %v1138
        %1192 = vmatprep.subr.bf16.mxu0 %v1143
        %1193 = vmatpush1.bf16.msra.mxu0 %v1142
        %1194 = vmatprep.subr.bf16.mxu0 0
        %1195 = vmatpush1.bf16.msra.mxu0 0
        %1196 = vmatprep.subr.bf16.mxu0 0
        %1197 = vmatpush1.bf16.msra.mxu0 0
        %1198 = vmatprep.subr.bf16.mxu0 0
        %1199 = vmatpush1.bf16.msra.mxu0 0
        %1200 = vmatprep.subr.bf16.mxu0 0
        %1201 = vmatpush1.bf16.msra.mxu0 0
        %1202 = vmatprep.subr.bf16.mxu0 0
        %1203 = vmatpush1.bf16.msra.mxu0 0
        %1204 = vmatprep.subr.bf16.mxu0 0
        %1205 = vmatpush1.bf16.msra.mxu0 0
        %1206 = vmatprep.subr.bf16.mxu0 0
        %1207 = vmatpush1.bf16.msra.mxu0 0
        %1208 = vmatprep.subr.bf16.mxu0 0
        %1209 = vmatpush1.bf16.msra.mxu0 0
        %1210 = vmatprep.mubr.bf16.mxu0 0
        %1211 = vmatmul.mubr.bf16.gmra.mrb[0].mxu0 0
        %v1212 = vpop.f32.mrb[0].mxu0
        %v1213 = vadd.f32 0.0, %v1212
        %v1214 = vpop.f32.mrb[0].mxu0
        %v1215 = vadd.f32 0.0, %v1214
        %v1216 = vpop.f32.mrb[0].mxu0
        %v1217 = vpop.f32.mrb[0].mxu0
        %1218 = vdwg.mxu0
        %1219 = vmatprep.subr.bf16.mxu0 %v1117
        %1220 = vmatpush1.bf16.msra.mxu0 %v1116
        %1221 = vmatprep.subr.bf16.mxu0 %v1121
        %1222 = vmatpush1.bf16.msra.mxu0 %v1120
        %1223 = vmatprep.subr.bf16.mxu0 %v1125
        %1224 = vmatpush1.bf16.msra.mxu0 %v1124
        %1225 = vmatprep.subr.bf16.mxu0 %v1129
        %1226 = vmatpush1.bf16.msra.mxu0 %v1128
        %1227 = vmatprep.subr.bf16.mxu0 %v1133
        %1228 = vmatpush1.bf16.msra.mxu0 %v1132
        %1229 = vmatprep.subr.bf16.mxu0 %v1137
        %1230 = vmatpush1.bf16.msra.mxu0 %v1136
        %1231 = vmatprep.subr.bf16.mxu0 %v1141
        %1232 = vmatpush1.bf16.msra.mxu0 %v1140
        %1233 = vmatprep.subr.bf16.mxu0 %v1145
        %1234 = vmatpush1.bf16.msra.mxu0 %v1144
        %1235 = vmatprep.subr.bf16.mxu0 0
        %1236 = vmatpush1.bf16.msra.mxu0 0
        %1237 = vmatprep.subr.bf16.mxu0 0
        %1238 = vmatpush1.bf16.msra.mxu0 0
        %1239 = vmatprep.subr.bf16.mxu0 0
        %1240 = vmatpush1.bf16.msra.mxu0 0
        %1241 = vmatprep.subr.bf16.mxu0 0
        %1242 = vmatpush1.bf16.msra.mxu0 0
        %1243 = vmatprep.subr.bf16.mxu0 0
        %1244 = vmatpush1.bf16.msra.mxu0 0
        %1245 = vmatprep.subr.bf16.mxu0 0
        %1246 = vmatpush1.bf16.msra.mxu0 0
        %1247 = vmatprep.subr.bf16.mxu0 0
        %1248 = vmatpush1.bf16.msra.mxu0 0
        %1249 = vmatprep.subr.bf16.mxu0 0
        %1250 = vmatpush1.bf16.msra.mxu0 0
        %1251 = vmatprep.mubr.bf16.mxu0 0
        %1252 = vmatmul.mubr.bf16.gmra.mrb[0].mxu0 0
        %v1253 = vpop.f32.mrb[0].mxu0
        %v1254 = vadd.f32 0.0, %v1253
        %v1255 = vpop.f32.mrb[0].mxu0
        %v1256 = vadd.f32 0.0, %v1255
        %v1257 = vpop.f32.mrb[0].mxu0
        %v1258 = vpop.f32.mrb[0].mxu0
        %1259 = vdwg.mxu0
        %v1260 = vadd.f32 %v945, %v1213
        %v1261 = vadd.f32 %v947, %v1215
        %v1262 = vadd.f32 %v988, %v1254
        %v1263 = vadd.f32 %v990, %v1256
        %v1264 = vxor.u32 %v1260, 2147483648
        %v1265 = vmul.f32 %v1264, 1.442695
        %v1266 = vpow.pop %v1265
        %v1267 = vadd.f32 %v1266, 1.0
        %v1268 = vrcp.pop %v1267
        %v1269 = vmul.f32 1.0, %v1268
        %v1270 = vxor.u32 %v1261, 2147483648
        %v1271 = vmul.f32 %v1270, 1.442695
        %v1272 = vpow.pop %v1271
        %v1273 = vadd.f32 %v1272, 1.0
        %v1274 = vrcp.pop %v1273
        %v1275 = vmul.f32 1.0, %v1274
        %v1276 = vtanh.pop %v1262
        %v1277 = vxor.u32 %v1263, 2147483648
        %v1278 = vmul.f32 %v1277, 1.442695
        %v1279 = vpow.pop %v1278
        %v1280 = vadd.f32 %v1279, 1.0
        %v1281 = vrcp.pop %v1280
        %v1282 = vmul.f32 1.0, %v1281
        %v1283 = vmul.f32 %v1275, 0.0
        %v1284 = vmul.f32 %v1269, %v1276
        %v1285 = vadd.f32 %v1283, %v1284
        %v1286 = vtanh.pop %v1285
        %v1287 = vmul.f32 %v1282, %v1286
        %v1288 = vpack.c.bf16 %v1287, %v1287
        %v1353 = vunpack.c.l.b16 %v482
        %v1354 = vunpack.c.h.b16 %v482
        %v1355 = vunpack.c.l.b16 %v483
        %v1356 = vunpack.c.h.b16 %v483
        %v1357 = vunpack.c.l.b16 %v484
        %v1358 = vunpack.c.h.b16 %v484
        %v1359 = vunpack.c.l.b16 %v485
        %v1360 = vunpack.c.h.b16 %v485
        %v1361 = vunpack.c.l.b16 %v486
        %v1362 = vunpack.c.h.b16 %v486
        %v1363 = vunpack.c.l.b16 %v487
        %v1364 = vunpack.c.h.b16 %v487
        %v1365 = vunpack.c.l.b16 %v488
        %v1366 = vunpack.c.h.b16 %v488
        %v1367 = vunpack.c.l.b16 %v489
        %v1368 = vunpack.c.h.b16 %v489
        %v1369 = vunpack.c.l.b16 %v490
        %v1370 = vunpack.c.h.b16 %v490
        %v1371 = vunpack.c.l.b16 %v491
        %v1372 = vunpack.c.h.b16 %v491
        %v1373 = vunpack.c.l.b16 %v492
        %v1374 = vunpack.c.h.b16 %v492
        %v1375 = vunpack.c.l.b16 %v493
        %v1376 = vunpack.c.h.b16 %v493
        %v1377 = vunpack.c.l.b16 %v494
        %v1378 = vunpack.c.h.b16 %v494
        %v1379 = vunpack.c.l.b16 %v495
        %v1380 = vunpack.c.h.b16 %v495
        %v1381 = vunpack.c.l.b16 %v496
        %v1382 = vunpack.c.h.b16 %v496
        %v1383 = vunpack.c.l.b16 %v497
        %v1384 = vunpack.c.h.b16 %v497
        %v1385 = vunpack.c.l.b16 %v498
        %v1386 = vunpack.c.h.b16 %v498
        %v1387 = vunpack.c.l.b16 %v499
        %v1388 = vunpack.c.h.b16 %v499
        %v1389 = vunpack.c.l.b16 %v500
        %v1390 = vunpack.c.h.b16 %v500
        %v1391 = vunpack.c.l.b16 %v501
        %v1392 = vunpack.c.h.b16 %v501
        %v1393 = vunpack.c.l.b16 %v502
        %v1394 = vunpack.c.h.b16 %v502
        %v1395 = vunpack.c.l.b16 %v503
        %v1396 = vunpack.c.h.b16 %v503
        %v1397 = vunpack.c.l.b16 %v504
        %v1398 = vunpack.c.h.b16 %v504
        %v1399 = vunpack.c.l.b16 %v505
        %v1400 = vunpack.c.h.b16 %v505
        %v1401 = vunpack.c.l.b16 %v506
        %v1402 = vunpack.c.h.b16 %v506
        %v1403 = vunpack.c.l.b16 %v507
        %v1404 = vunpack.c.h.b16 %v507
        %v1405 = vunpack.c.l.b16 %v508
        %v1406 = vunpack.c.h.b16 %v508
        %v1407 = vunpack.c.l.b16 %v509
        %v1408 = vunpack.c.h.b16 %v509
        %v1409 = vunpack.c.l.b16 %v510
        %v1410 = vunpack.c.h.b16 %v510
        %v1411 = vunpack.c.l.b16 %v511
        %v1412 = vunpack.c.h.b16 %v511
        %v1413 = vunpack.c.l.b16 %v512
        %v1414 = vunpack.c.h.b16 %v512
        %v1415 = vunpack.c.l.b16 %v513
        %v1416 = vunpack.c.h.b16 %v513
        %v1417 = vunpack.c.l.b16 %v514
        %v1418 = vunpack.c.h.b16 %v514
        %v1419 = vunpack.c.l.b16 %v515
        %v1420 = vunpack.c.h.b16 %v515
        %v1421 = vunpack.c.l.b16 %v516
        %v1422 = vunpack.c.h.b16 %v516
        %v1423 = vunpack.c.l.b16 %v517
        %v1424 = vunpack.c.h.b16 %v517
        %v1425 = vunpack.c.l.b16 %v518
        %v1426 = vunpack.c.h.b16 %v518
        %v1427 = vunpack.c.l.b16 %v519
        %v1428 = vunpack.c.h.b16 %v519
        %v1429 = vunpack.c.l.b16 %v520
        %v1430 = vunpack.c.h.b16 %v520
        %v1431 = vunpack.c.l.b16 %v521
        %v1432 = vunpack.c.h.b16 %v521
        %v1433 = vunpack.c.l.b16 %v522
        %v1434 = vunpack.c.h.b16 %v522
        %v1435 = vunpack.c.l.b16 %v523
        %v1436 = vunpack.c.h.b16 %v523
        %v1437 = vunpack.c.l.b16 %v524
        %v1438 = vunpack.c.h.b16 %v524
        %v1439 = vunpack.c.l.b16 %v525
        %v1440 = vunpack.c.h.b16 %v525
        %v1441 = vunpack.c.l.b16 %v526
        %v1442 = vunpack.c.h.b16 %v526
        %v1443 = vunpack.c.l.b16 %v527
        %v1444 = vunpack.c.h.b16 %v527
        %v1445 = vunpack.c.l.b16 %v528
        %v1446 = vunpack.c.h.b16 %v528
        %v1447 = vunpack.c.l.b16 %v529
        %v1448 = vunpack.c.h.b16 %v529
        %v1449 = vunpack.c.l.b16 %v530
        %v1450 = vunpack.c.h.b16 %v530
        %v1451 = vunpack.c.l.b16 %v531
        %v1452 = vunpack.c.h.b16 %v531
        %v1453 = vunpack.c.l.b16 %v532
        %v1454 = vunpack.c.h.b16 %v532
        %v1455 = vunpack.c.l.b16 %v533
        %v1456 = vunpack.c.h.b16 %v533
        %v1457 = vunpack.c.l.b16 %v534
        %v1458 = vunpack.c.h.b16 %v534
        %v1459 = vunpack.c.l.b16 %v535
        %v1460 = vunpack.c.h.b16 %v535
        %v1461 = vunpack.c.l.b16 %v536
        %v1462 = vunpack.c.h.b16 %v536
        %v1463 = vunpack.c.l.b16 %v537
        %v1464 = vunpack.c.h.b16 %v537
        %v1465 = vunpack.c.l.b16 %v538
        %v1466 = vunpack.c.h.b16 %v538
        %v1467 = vunpack.c.l.b16 %v539
        %v1468 = vunpack.c.h.b16 %v539
        %v1469 = vunpack.c.l.b16 %v540
        %v1470 = vunpack.c.h.b16 %v540
        %v1471 = vunpack.c.l.b16 %v541
        %v1472 = vunpack.c.h.b16 %v541
        %v1473 = vunpack.c.l.b16 %v542
        %v1474 = vunpack.c.h.b16 %v542
        %v1475 = vunpack.c.l.b16 %v543
        %v1476 = vunpack.c.h.b16 %v543
        %v1477 = vunpack.c.l.b16 %v544
        %v1478 = vunpack.c.h.b16 %v544
        %v1479 = vunpack.c.l.b16 %v545
        %v1480 = vunpack.c.h.b16 %v545
        %v1481 = vpack.c.b16 %v1357, %v1353
        %v1482 = vpack.c.b16 %v1358, %v1354
        %v1483 = vpack.c.b16 %v1359, %v1355
        %v1484 = vpack.c.b16 %v1360, %v1356
        %v1485 = vpack.c.b16 %v1365, %v1361
        %v1486 = vpack.c.b16 %v1366, %v1362
        %v1487 = vpack.c.b16 %v1367, %v1363
        %v1488 = vpack.c.b16 %v1368, %v1364
        %v1489 = vpack.c.b16 %v1373, %v1369
        %v1490 = vpack.c.b16 %v1374, %v1370
        %v1491 = vpack.c.b16 %v1375, %v1371
        %v1492 = vpack.c.b16 %v1376, %v1372
        %v1493 = vpack.c.b16 %v1381, %v1377
        %v1494 = vpack.c.b16 %v1382, %v1378
        %v1495 = vpack.c.b16 %v1383, %v1379
        %v1496 = vpack.c.b16 %v1384, %v1380
        %v1497 = vpack.c.b16 %v1389, %v1385
        %v1498 = vpack.c.b16 %v1390, %v1386
        %v1499 = vpack.c.b16 %v1391, %v1387
        %v1500 = vpack.c.b16 %v1392, %v1388
        %v1501 = vpack.c.b16 %v1397, %v1393
        %v1502 = vpack.c.b16 %v1398, %v1394
        %v1503 = vpack.c.b16 %v1399, %v1395
        %v1504 = vpack.c.b16 %v1400, %v1396
        %v1505 = vpack.c.b16 %v1405, %v1401
        %v1506 = vpack.c.b16 %v1406, %v1402
        %v1507 = vpack.c.b16 %v1407, %v1403
        %v1508 = vpack.c.b16 %v1408, %v1404
        %v1509 = vpack.c.b16 %v1413, %v1409
        %v1510 = vpack.c.b16 %v1414, %v1410
        %v1511 = vpack.c.b16 %v1415, %v1411
        %v1512 = vpack.c.b16 %v1416, %v1412
        %v1513 = vpack.c.b16 %v1421, %v1417
        %v1514 = vpack.c.b16 %v1422, %v1418
        %v1515 = vpack.c.b16 %v1423, %v1419
        %v1516 = vpack.c.b16 %v1424, %v1420
        %v1517 = vpack.c.b16 %v1429, %v1425
        %v1518 = vpack.c.b16 %v1430, %v1426
        %v1519 = vpack.c.b16 %v1431, %v1427
        %v1520 = vpack.c.b16 %v1432, %v1428
        %v1521 = vpack.c.b16 %v1437, %v1433
        %v1522 = vpack.c.b16 %v1438, %v1434
        %v1523 = vpack.c.b16 %v1439, %v1435
        %v1524 = vpack.c.b16 %v1440, %v1436
        %v1525 = vpack.c.b16 %v1445, %v1441
        %v1526 = vpack.c.b16 %v1446, %v1442
        %v1527 = vpack.c.b16 %v1447, %v1443
        %v1528 = vpack.c.b16 %v1448, %v1444
        %v1529 = vpack.c.b16 %v1453, %v1449
        %v1530 = vpack.c.b16 %v1454, %v1450
        %v1531 = vpack.c.b16 %v1455, %v1451
        %v1532 = vpack.c.b16 %v1456, %v1452
        %v1533 = vpack.c.b16 %v1461, %v1457
        %v1534 = vpack.c.b16 %v1462, %v1458
        %v1535 = vpack.c.b16 %v1463, %v1459
        %v1536 = vpack.c.b16 %v1464, %v1460
        %v1537 = vpack.c.b16 %v1469, %v1465
        %v1538 = vpack.c.b16 %v1470, %v1466
        %v1539 = vpack.c.b16 %v1471, %v1467
        %v1540 = vpack.c.b16 %v1472, %v1468
        %v1541 = vpack.c.b16 %v1477, %v1473
        %v1542 = vpack.c.b16 %v1478, %v1474
        %v1543 = vpack.c.b16 %v1479, %v1475
        %v1544 = vpack.c.b16 %v1480, %v1476
        %1609 = vmatprep.subr.bf16.mxu0 %v1482
        %1610 = vmatpush1.bf16.msra.mxu0 %v1481
        %1611 = vmatprep.subr.bf16.mxu0 %v1486
        %1612 = vmatpush1.bf16.msra.mxu0 %v1485
        %1613 = vmatprep.subr.bf16.mxu0 %v1490
        %1614 = vmatpush1.bf16.msra.mxu0 %v1489
        %1615 = vmatprep.subr.bf16.mxu0 %v1494
        %1616 = vmatpush1.bf16.msra.mxu0 %v1493
        %1617 = vmatprep.subr.bf16.mxu0 %v1498
        %1618 = vmatpush1.bf16.msra.mxu0 %v1497
        %1619 = vmatprep.subr.bf16.mxu0 %v1502
        %1620 = vmatpush1.bf16.msra.mxu0 %v1501
        %1621 = vmatprep.subr.bf16.mxu0 %v1506
        %1622 = vmatpush1.bf16.msra.mxu0 %v1505
        %1623 = vmatprep.subr.bf16.mxu0 %v1510
        %1624 = vmatpush1.bf16.msra.mxu0 %v1509
        %1625 = vmatprep.subr.bf16.mxu0 %v1514
        %1626 = vmatpush1.bf16.msra.mxu0 %v1513
        %1627 = vmatprep.subr.bf16.mxu0 %v1518
        %1628 = vmatpush1.bf16.msra.mxu0 %v1517
        %1629 = vmatprep.subr.bf16.mxu0 %v1522
        %1630 = vmatpush1.bf16.msra.mxu0 %v1521
        %1631 = vmatprep.subr.bf16.mxu0 %v1526
        %1632 = vmatpush1.bf16.msra.mxu0 %v1525
        %1633 = vmatprep.subr.bf16.mxu0 %v1530
        %1634 = vmatpush1.bf16.msra.mxu0 %v1529
        %1635 = vmatprep.subr.bf16.mxu0 %v1534
        %1636 = vmatpush1.bf16.msra.mxu0 %v1533
        %1637 = vmatprep.subr.bf16.mxu0 %v1538
        %1638 = vmatpush1.bf16.msra.mxu0 %v1537
        %1639 = vmatprep.subr.bf16.mxu0 %v1542
        %1640 = vmatpush1.bf16.msra.mxu0 %v1541
        %1641 = vmatprep.mubr.bf16.mxu0 0
        %1642 = vmatmul.mubr.bf16.gmra.mrb[0].mxu0 %v1288
        %v1643 = vpop.f32.mrb[0].mxu0
        %v1644 = vadd.f32 %v1001, %v1643
        %v1645 = vpop.f32.mrb[0].mxu0
        %v1646 = vadd.f32 %v1005, %v1645
        %v1647 = vpop.f32.mrb[0].mxu0
        %v1648 = vpop.f32.mrb[0].mxu0
        %1649 = vdwg.mxu0
        %1650 = vmatprep.subr.bf16.mxu0 %v1484
        %1651 = vmatpush1.bf16.msra.mxu0 %v1483
        %1652 = vmatprep.subr.bf16.mxu0 %v1488
        %1653 = vmatpush1.bf16.msra.mxu0 %v1487
        %1654 = vmatprep.subr.bf16.mxu0 %v1492
        %1655 = vmatpush1.bf16.msra.mxu0 %v1491
        %1656 = vmatprep.subr.bf16.mxu0 %v1496
        %1657 = vmatpush1.bf16.msra.mxu0 %v1495
        %1658 = vmatprep.subr.bf16.mxu0 %v1500
        %1659 = vmatpush1.bf16.msra.mxu0 %v1499
        %1660 = vmatprep.subr.bf16.mxu0 %v1504
        %1661 = vmatpush1.bf16.msra.mxu0 %v1503
        %1662 = vmatprep.subr.bf16.mxu0 %v1508
        %1663 = vmatpush1.bf16.msra.mxu0 %v1507
        %1664 = vmatprep.subr.bf16.mxu0 %v1512
        %1665 = vmatpush1.bf16.msra.mxu0 %v1511
        %1666 = vmatprep.subr.bf16.mxu0 %v1516
        %1667 = vmatpush1.bf16.msra.mxu0 %v1515
        %1668 = vmatprep.subr.bf16.mxu0 %v1520
        %1669 = vmatpush1.bf16.msra.mxu0 %v1519
        %1670 = vmatprep.subr.bf16.mxu0 %v1524
        %1671 = vmatpush1.bf16.msra.mxu0 %v1523
        %1672 = vmatprep.subr.bf16.mxu0 %v1528
        %1673 = vmatpush1.bf16.msra.mxu0 %v1527
        %1674 = vmatprep.subr.bf16.mxu0 %v1532
        %1675 = vmatpush1.bf16.msra.mxu0 %v1531
        %1676 = vmatprep.subr.bf16.mxu0 %v1536
        %1677 = vmatpush1.bf16.msra.mxu0 %v1535
        %1678 = vmatprep.subr.bf16.mxu0 %v1540
        %1679 = vmatpush1.bf16.msra.mxu0 %v1539
        %1680 = vmatprep.subr.bf16.mxu0 %v1544
        %1681 = vmatpush1.bf16.msra.mxu0 %v1543
        %1682 = vmatprep.mubr.bf16.mxu0 0
        %1683 = vmatmul.mubr.bf16.gmra.mrb[0].mxu0 %v1288
        %v1684 = vpop.f32.mrb[0].mxu0
        %v1685 = vadd.f32 %v1009, %v1684
        %v1686 = vpop.f32.mrb[0].mxu0
        %v1687 = vadd.f32 %v1013, %v1686
        %v1688 = vpop.f32.mrb[0].mxu0
        %v1689 = vpop.f32.mrb[0].mxu0
        %1690 = vdwg.mxu0
        %v1691 = vxor.u32 %v1644, 2147483648
        %v1692 = vmul.f32 %v1691, 1.442695
        %v1693 = vpow.pop %v1692
        %v1694 = vadd.f32 %v1693, 1.0
        %v1695 = vrcp.pop %v1694
        %v1696 = vmul.f32 1.0, %v1695
        %v1697 = vxor.u32 %v1646, 2147483648
        %v1698 = vmul.f32 %v1697, 1.442695
        %v1699 = vpow.pop %v1698
        %v1700 = vadd.f32 %v1699, 1.0
        %v1701 = vrcp.pop %v1700
        %v1702 = vmul.f32 1.0, %v1701
        %v1703 = vtanh.pop %v1685
        %v1704 = vxor.u32 %v1687, 2147483648
        %v1705 = vmul.f32 %v1704, 1.442695
        %v1706 = vpow.pop %v1705
        %v1707 = vadd.f32 %v1706, 1.0
        %v1708 = vrcp.pop %v1707
        %v1709 = vmul.f32 1.0, %v1708
        %v1710 = vmul.f32 %v1702, 0.0
        %v1711 = vmul.f32 %v1696, %v1703
        %v1712 = vadd.f32 %v1710, %v1711
        %v1713 = vtanh.pop %v1712
        %v1714 = vmul.f32 %v1709, %v1713
        %v1715 = vpack.c.bf16 %v1714, %v1714
        %v1716 = vadd.f32 %v949, %v1213
        %v1717 = vadd.f32 %v951, %v1215
        %v1718 = vadd.f32 %v992, %v1254
        %v1719 = vadd.f32 %v994, %v1256
        %v1720 = vxor.u32 %v1716, 2147483648
        %v1721 = vmul.f32 %v1720, 1.442695
        %v1722 = vpow.pop %v1721
        %v1723 = vadd.f32 %v1722, 1.0
        %v1724 = vrcp.pop %v1723
        %v1725 = vmul.f32 1.0, %v1724
        %v1726 = vxor.u32 %v1717, 2147483648
        %v1727 = vmul.f32 %v1726, 1.442695
        %v1728 = vpow.pop %v1727
        %v1729 = vadd.f32 %v1728, 1.0
        %v1730 = vrcp.pop %v1729
        %v1731 = vmul.f32 1.0, %v1730
        %v1732 = vtanh.pop %v1718
        %v1733 = vxor.u32 %v1719, 2147483648
        %v1734 = vmul.f32 %v1733, 1.442695
        %v1735 = vpow.pop %v1734
        %v1736 = vadd.f32 %v1735, 1.0
        %v1737 = vrcp.pop %v1736
        %v1738 = vmul.f32 1.0, %v1737
        %v1739 = vmul.f32 %v1731, 0.0
        %v1740 = vmul.f32 %v1725, %v1732
        %v1741 = vadd.f32 %v1739, %v1740
        %v1742 = vtanh.pop %v1741
        %v1743 = vmul.f32 %v1738, %v1742
        %v1744 = vpack.c.bf16 %v1743, %v1743
        %1745 = vmatprep.subr.bf16.mxu0 %v1482
        %1746 = vmatpush1.bf16.msra.mxu0 %v1481
        %1747 = vmatprep.subr.bf16.mxu0 %v1486
        %1748 = vmatpush1.bf16.msra.mxu0 %v1485
        %1749 = vmatprep.subr.bf16.mxu0 %v1490
        %1750 = vmatpush1.bf16.msra.mxu0 %v1489
        %1751 = vmatprep.subr.bf16.mxu0 %v1494
        %1752 = vmatpush1.bf16.msra.mxu0 %v1493
        %1753 = vmatprep.subr.bf16.mxu0 %v1498
        %1754 = vmatpush1.bf16.msra.mxu0 %v1497
        %1755 = vmatprep.subr.bf16.mxu0 %v1502
        %1756 = vmatpush1.bf16.msra.mxu0 %v1501
        %1757 = vmatprep.subr.bf16.mxu0 %v1506
        %1758 = vmatpush1.bf16.msra.mxu0 %v1505
        %1759 = vmatprep.subr.bf16.mxu0 %v1510
        %1760 = vmatpush1.bf16.msra.mxu0 %v1509
        %1761 = vmatprep.subr.bf16.mxu0 %v1514
        %1762 = vmatpush1.bf16.msra.mxu0 %v1513
        %1763 = vmatprep.subr.bf16.mxu0 %v1518
        %1764 = vmatpush1.bf16.msra.mxu0 %v1517
        %1765 = vmatprep.subr.bf16.mxu0 %v1522
        %1766 = vmatpush1.bf16.msra.mxu0 %v1521
        %1767 = vmatprep.subr.bf16.mxu0 %v1526
        %1768 = vmatpush1.bf16.msra.mxu0 %v1525
        %1769 = vmatprep.subr.bf16.mxu0 %v1530
        %1770 = vmatpush1.bf16.msra.mxu0 %v1529
        %1771 = vmatprep.subr.bf16.mxu0 %v1534
        %1772 = vmatpush1.bf16.msra.mxu0 %v1533
        %1773 = vmatprep.subr.bf16.mxu0 %v1538
        %1774 = vmatpush1.bf16.msra.mxu0 %v1537
        %1775 = vmatprep.subr.bf16.mxu0 %v1542
        %1776 = vmatpush1.bf16.msra.mxu0 %v1541
        %1777 = vmatprep.mubr.bf16.mxu0 0
        %1778 = vmatmul.mubr.bf16.gmra.mrb[0].mxu0 %v1744
        %v1779 = vpop.f32.mrb[0].mxu0
        %v1780 = vadd.f32 %v1001, %v1779
        %v1781 = vpop.f32.mrb[0].mxu0
        %v1782 = vadd.f32 %v1005, %v1781
        %v1783 = vpop.f32.mrb[0].mxu0
        %v1784 = vpop.f32.mrb[0].mxu0
        %1785 = vdwg.mxu0
        %1786 = vmatprep.subr.bf16.mxu0 %v1484
        %1787 = vmatpush1.bf16.msra.mxu0 %v1483
        %1788 = vmatprep.subr.bf16.mxu0 %v1488
        %1789 = vmatpush1.bf16.msra.mxu0 %v1487
        %1790 = vmatprep.subr.bf16.mxu0 %v1492
        %1791 = vmatpush1.bf16.msra.mxu0 %v1491
        %1792 = vmatprep.subr.bf16.mxu0 %v1496
        %1793 = vmatpush1.bf16.msra.mxu0 %v1495
        %1794 = vmatprep.subr.bf16.mxu0 %v1500
        %1795 = vmatpush1.bf16.msra.mxu0 %v1499
        %1796 = vmatprep.subr.bf16.mxu0 %v1504
        %1797 = vmatpush1.bf16.msra.mxu0 %v1503
        %1798 = vmatprep.subr.bf16.mxu0 %v1508
        %1799 = vmatpush1.bf16.msra.mxu0 %v1507
        %1800 = vmatprep.subr.bf16.mxu0 %v1512
        %1801 = vmatpush1.bf16.msra.mxu0 %v1511
        %1802 = vmatprep.subr.bf16.mxu0 %v1516
        %1803 = vmatpush1.bf16.msra.mxu0 %v1515
        %1804 = vmatprep.subr.bf16.mxu0 %v1520
        %1805 = vmatpush1.bf16.msra.mxu0 %v1519
        %1806 = vmatprep.subr.bf16.mxu0 %v1524
        %1807 = vmatpush1.bf16.msra.mxu0 %v1523
        %1808 = vmatprep.subr.bf16.mxu0 %v1528
        %1809 = vmatpush1.bf16.msra.mxu0 %v1527
        %1810 = vmatprep.subr.bf16.mxu0 %v1532
        %1811 = vmatpush1.bf16.msra.mxu0 %v1531
        %1812 = vmatprep.subr.bf16.mxu0 %v1536
        %1813 = vmatpush1.bf16.msra.mxu0 %v1535
        %1814 = vmatprep.subr.bf16.mxu0 %v1540
        %1815 = vmatpush1.bf16.msra.mxu0 %v1539
        %1816 = vmatprep.subr.bf16.mxu0 %v1544
        %1817 = vmatpush1.bf16.msra.mxu0 %v1543
        %1818 = vmatprep.mubr.bf16.mxu0 0
        %1819 = vmatmul.mubr.bf16.gmra.mrb[0].mxu0 %v1744
        %v1820 = vpop.f32.mrb[0].mxu0
        %v1821 = vadd.f32 %v1009, %v1820
        %v1822 = vpop.f32.mrb[0].mxu0
        %v1823 = vadd.f32 %v1013, %v1822
        %v1824 = vpop.f32.mrb[0].mxu0
        %v1825 = vpop.f32.mrb[0].mxu0
        %1826 = vdwg.mxu0
        %v1827 = vxor.u32 %v1780, 2147483648
        %v1828 = vmul.f32 %v1827, 1.442695
        %v1829 = vpow.pop %v1828
        %v1830 = vadd.f32 %v1829, 1.0
        %v1831 = vrcp.pop %v1830
        %v1832 = vmul.f32 1.0, %v1831
        %v1833 = vxor.u32 %v1782, 2147483648
        %v1834 = vmul.f32 %v1833, 1.442695
        %v1835 = vpow.pop %v1834
        %v1836 = vadd.f32 %v1835, 1.0
        %v1837 = vrcp.pop %v1836
        %v1838 = vmul.f32 1.0, %v1837
        %v1839 = vtanh.pop %v1821
        %v1840 = vxor.u32 %v1823, 2147483648
        %v1841 = vmul.f32 %v1840, 1.442695
        %v1842 = vpow.pop %v1841
        %v1843 = vadd.f32 %v1842, 1.0
        %v1844 = vrcp.pop %v1843
        %v1845 = vmul.f32 1.0, %v1844
        %v1846 = vmul.f32 %v1838, 0.0
        %v1847 = vmul.f32 %v1832, %v1839
        %v1848 = vadd.f32 %v1846, %v1847
        %v1849 = vtanh.pop %v1848
        %v1850 = vmul.f32 %v1845, %v1849
        %v1851 = vpack.c.bf16 %v1850, %v1850
        %1852 = vmatprep.subr.bf16.mxu0 %v1115
        %1853 = vmatpush1.bf16.msra.mxu0 %v1114
        %1854 = vmatprep.subr.bf16.mxu0 %v1119
        %1855 = vmatpush1.bf16.msra.mxu0 %v1118
        %1856 = vmatprep.subr.bf16.mxu0 %v1123
        %1857 = vmatpush1.bf16.msra.mxu0 %v1122
        %1858 = vmatprep.subr.bf16.mxu0 %v1127
        %1859 = vmatpush1.bf16.msra.mxu0 %v1126
        %1860 = vmatprep.subr.bf16.mxu0 %v1131
        %1861 = vmatpush1.bf16.msra.mxu0 %v1130
        %1862 = vmatprep.subr.bf16.mxu0 %v1135
        %1863 = vmatpush1.bf16.msra.mxu0 %v1134
        %1864 = vmatprep.subr.bf16.mxu0 %v1139
        %1865 = vmatpush1.bf16.msra.mxu0 %v1138
        %1866 = vmatprep.subr.bf16.mxu0 %v1143
        %1867 = vmatpush1.bf16.msra.mxu0 %v1142
        %1868 = vmatprep.subr.bf16.mxu0 0
        %1869 = vmatpush1.bf16.msra.mxu0 0
        %1870 = vmatprep.subr.bf16.mxu0 0
        %1871 = vmatpush1.bf16.msra.mxu0 0
        %1872 = vmatprep.subr.bf16.mxu0 0
        %1873 = vmatpush1.bf16.msra.mxu0 0
        %1874 = vmatprep.subr.bf16.mxu0 0
        %1875 = vmatpush1.bf16.msra.mxu0 0
        %1876 = vmatprep.subr.bf16.mxu0 0
        %1877 = vmatpush1.bf16.msra.mxu0 0
        %1878 = vmatprep.subr.bf16.mxu0 0
        %1879 = vmatpush1.bf16.msra.mxu0 0
        %1880 = vmatprep.subr.bf16.mxu0 0
        %1881 = vmatpush1.bf16.msra.mxu0 0
        %1882 = vmatprep.subr.bf16.mxu0 0
        %1883 = vmatpush1.bf16.msra.mxu0 0
        %1884 = vmatprep.mubr.bf16.mxu0 0
        %1885 = vmatmul.mubr.bf16.gmra.mrb[0].mxu0 %v1288
        %v1886 = vpop.f32.mrb[0].mxu0
        %v1887 = vadd.f32 0.0, %v1886
        %v1888 = vpop.f32.mrb[0].mxu0
        %v1889 = vadd.f32 0.0, %v1888
        %v1890 = vpop.f32.mrb[0].mxu0
        %v1891 = vpop.f32.mrb[0].mxu0
        %1892 = vdwg.mxu0
        %1893 = vmatprep.subr.bf16.mxu0 %v1117
        %1894 = vmatpush1.bf16.msra.mxu0 %v1116
        %1895 = vmatprep.subr.bf16.mxu0 %v1121
        %1896 = vmatpush1.bf16.msra.mxu0 %v1120
        %1897 = vmatprep.subr.bf16.mxu0 %v1125
        %1898 = vmatpush1.bf16.msra.mxu0 %v1124
        %1899 = vmatprep.subr.bf16.mxu0 %v1129
        %1900 = vmatpush1.bf16.msra.mxu0 %v1128
        %1901 = vmatprep.subr.bf16.mxu0 %v1133
        %1902 = vmatpush1.bf16.msra.mxu0 %v1132
        %1903 = vmatprep.subr.bf16.mxu0 %v1137
        %1904 = vmatpush1.bf16.msra.mxu0 %v1136
        %1905 = vmatprep.subr.bf16.mxu0 %v1141
        %1906 = vmatpush1.bf16.msra.mxu0 %v1140
        %1907 = vmatprep.subr.bf16.mxu0 %v1145
        %1908 = vmatpush1.bf16.msra.mxu0 %v1144
        %1909 = vmatprep.subr.bf16.mxu0 0
        %1910 = vmatpush1.bf16.msra.mxu0 0
        %1911 = vmatprep.subr.bf16.mxu0 0
        %1912 = vmatpush1.bf16.msra.mxu0 0
        %1913 = vmatprep.subr.bf16.mxu0 0
        %1914 = vmatpush1.bf16.msra.mxu0 0
        %1915 = vmatprep.subr.bf16.mxu0 0
        %1916 = vmatpush1.bf16.msra.mxu0 0
        %1917 = vmatprep.subr.bf16.mxu0 0
        %1918 = vmatpush1.bf16.msra.mxu0 0
        %1919 = vmatprep.subr.bf16.mxu0 0
        %1920 = vmatpush1.bf16.msra.mxu0 0
        %1921 = vmatprep.subr.bf16.mxu0 0
        %1922 = vmatpush1.bf16.msra.mxu0 0
        %1923 = vmatprep.subr.bf16.mxu0 0
        %1924 = vmatpush1.bf16.msra.mxu0 0
        %1925 = vmatprep.mubr.bf16.mxu0 0
        %1926 = vmatmul.mubr.bf16.gmra.mrb[0].mxu0 %v1288
        %v1927 = vpop.f32.mrb[0].mxu0
        %v1928 = vadd.f32 0.0, %v1927
        %v1929 = vpop.f32.mrb[0].mxu0
        %v1930 = vadd.f32 0.0, %v1929
        %v1931 = vpop.f32.mrb[0].mxu0
        %v1932 = vpop.f32.mrb[0].mxu0
        %1933 = vdwg.mxu0
        %v1934 = vadd.f32 %v945, %v1887
        %v1935 = vadd.f32 %v947, %v1889
        %v1936 = vadd.f32 %v988, %v1928
        %v1937 = vadd.f32 %v990, %v1930
        %v1938 = vxor.u32 %v1934, 2147483648
        %v1939 = vmul.f32 %v1938, 1.442695
        %v1940 = vpow.pop %v1939
        %v1941 = vadd.f32 %v1940, 1.0
        %v1942 = vrcp.pop %v1941
        %v1943 = vmul.f32 1.0, %v1942
        %v1944 = vxor.u32 %v1935, 2147483648
        %v1945 = vmul.f32 %v1944, 1.442695
        %v1946 = vpow.pop %v1945
        %v1947 = vadd.f32 %v1946, 1.0
        %v1948 = vrcp.pop %v1947
        %v1949 = vmul.f32 1.0, %v1948
        %v1950 = vtanh.pop %v1936
        %v1951 = vxor.u32 %v1937, 2147483648
        %v1952 = vmul.f32 %v1951, 1.442695
        %v1953 = vpow.pop %v1952
        %v1954 = vadd.f32 %v1953, 1.0
        %v1955 = vrcp.pop %v1954
        %v1956 = vmul.f32 1.0, %v1955
        %v1957 = vmul.f32 %v1949, %v1285
        %v1958 = vmul.f32 %v1943, %v1950
        %v1959 = vadd.f32 %v1957, %v1958
        %v1960 = vtanh.pop %v1959
        %v1961 = vmul.f32 %v1956, %v1960
        %v1962 = vpack.c.bf16 %v1961, %v1961
        %1963 = vmatprep.subr.bf16.mxu0 %v1482
        %1964 = vmatpush1.bf16.msra.mxu0 %v1481
        %1965 = vmatprep.subr.bf16.mxu0 %v1486
        %1966 = vmatpush1.bf16.msra.mxu0 %v1485
        %1967 = vmatprep.subr.bf16.mxu0 %v1490
        %1968 = vmatpush1.bf16.msra.mxu0 %v1489
        %1969 = vmatprep.subr.bf16.mxu0 %v1494
        %1970 = vmatpush1.bf16.msra.mxu0 %v1493
        %1971 = vmatprep.subr.bf16.mxu0 %v1498
        %1972 = vmatpush1.bf16.msra.mxu0 %v1497
        %1973 = vmatprep.subr.bf16.mxu0 %v1502
        %1974 = vmatpush1.bf16.msra.mxu0 %v1501
        %1975 = vmatprep.subr.bf16.mxu0 %v1506
        %1976 = vmatpush1.bf16.msra.mxu0 %v1505
        %1977 = vmatprep.subr.bf16.mxu0 %v1510
        %1978 = vmatpush1.bf16.msra.mxu0 %v1509
        %1979 = vmatprep.subr.bf16.mxu0 %v1514
        %1980 = vmatpush1.bf16.msra.mxu0 %v1513
        %1981 = vmatprep.subr.bf16.mxu0 %v1518
        %1982 = vmatpush1.bf16.msra.mxu0 %v1517
        %1983 = vmatprep.subr.bf16.mxu0 %v1522
        %1984 = vmatpush1.bf16.msra.mxu0 %v1521
        %1985 = vmatprep.subr.bf16.mxu0 %v1526
        %1986 = vmatpush1.bf16.msra.mxu0 %v1525
        %1987 = vmatprep.subr.bf16.mxu0 %v1530
        %1988 = vmatpush1.bf16.msra.mxu0 %v1529
        %1989 = vmatprep.subr.bf16.mxu0 %v1534
        %1990 = vmatpush1.bf16.msra.mxu0 %v1533
        %1991 = vmatprep.subr.bf16.mxu0 %v1538
        %1992 = vmatpush1.bf16.msra.mxu0 %v1537
        %1993 = vmatprep.subr.bf16.mxu0 %v1542
        %1994 = vmatpush1.bf16.msra.mxu0 %v1541
        %1995 = vmatprep.mubr.bf16.mxu0 %v1715
        %1996 = vmatmul.mubr.bf16.gmra.mrb[0].mxu0 %v1962
        %v1997 = vpop.f32.mrb[0].mxu0
        %v1998 = vadd.f32 %v1001, %v1997
        %v1999 = vpop.f32.mrb[0].mxu0
        %v2000 = vadd.f32 %v1005, %v1999
        %v2001 = vpop.f32.mrb[0].mxu0
        %v2002 = vpop.f32.mrb[0].mxu0
        %2003 = vdwg.mxu0
        %2004 = vmatprep.subr.bf16.mxu0 %v1484
        %2005 = vmatpush1.bf16.msra.mxu0 %v1483
        %2006 = vmatprep.subr.bf16.mxu0 %v1488
        %2007 = vmatpush1.bf16.msra.mxu0 %v1487
        %2008 = vmatprep.subr.bf16.mxu0 %v1492
        %2009 = vmatpush1.bf16.msra.mxu0 %v1491
        %2010 = vmatprep.subr.bf16.mxu0 %v1496
        %2011 = vmatpush1.bf16.msra.mxu0 %v1495
        %2012 = vmatprep.subr.bf16.mxu0 %v1500
        %2013 = vmatpush1.bf16.msra.mxu0 %v1499
        %2014 = vmatprep.subr.bf16.mxu0 %v1504
        %2015 = vmatpush1.bf16.msra.mxu0 %v1503
        %2016 = vmatprep.subr.bf16.mxu0 %v1508
        %2017 = vmatpush1.bf16.msra.mxu0 %v1507
        %2018 = vmatprep.subr.bf16.mxu0 %v1512
        %2019 = vmatpush1.bf16.msra.mxu0 %v1511
        %2020 = vmatprep.subr.bf16.mxu0 %v1516
        %2021 = vmatpush1.bf16.msra.mxu0 %v1515
        %2022 = vmatprep.subr.bf16.mxu0 %v1520
        %2023 = vmatpush1.bf16.msra.mxu0 %v1519
        %2024 = vmatprep.subr.bf16.mxu0 %v1524
        %2025 = vmatpush1.bf16.msra.mxu0 %v1523
        %2026 = vmatprep.subr.bf16.mxu0 %v1528
        %2027 = vmatpush1.bf16.msra.mxu0 %v1527
        %2028 = vmatprep.subr.bf16.mxu0 %v1532
        %2029 = vmatpush1.bf16.msra.mxu0 %v1531
        %2030 = vmatprep.subr.bf16.mxu0 %v1536
        %2031 = vmatpush1.bf16.msra.mxu0 %v1535
        %2032 = vmatprep.subr.bf16.mxu0 %v1540
        %2033 = vmatpush1.bf16.msra.mxu0 %v1539
        %2034 = vmatprep.subr.bf16.mxu0 %v1544
        %2035 = vmatpush1.bf16.msra.mxu0 %v1543
        %2036 = vmatprep.mubr.bf16.mxu0 %v1715
        %2037 = vmatmul.mubr.bf16.gmra.mrb[0].mxu0 %v1962
        %v2038 = vpop.f32.mrb[0].mxu0
        %v2039 = vadd.f32 %v1009, %v2038
        %v2040 = vpop.f32.mrb[0].mxu0
        %v2041 = vadd.f32 %v1013, %v2040
        %v2042 = vpop.f32.mrb[0].mxu0
        %v2043 = vpop.f32.mrb[0].mxu0
        %2044 = vdwg.mxu0
        %v2045 = vxor.u32 %v1998, 2147483648
        %v2046 = vmul.f32 %v2045, 1.442695
        %v2047 = vpow.pop %v2046
        %v2048 = vadd.f32 %v2047, 1.0
        %v2049 = vrcp.pop %v2048
        %v2050 = vmul.f32 1.0, %v2049
        %v2051 = vxor.u32 %v2000, 2147483648
        %v2052 = vmul.f32 %v2051, 1.442695
        %v2053 = vpow.pop %v2052
        %v2054 = vadd.f32 %v2053, 1.0
        %v2055 = vrcp.pop %v2054
        %v2056 = vmul.f32 1.0, %v2055
        %v2057 = vtanh.pop %v2039
        %v2058 = vxor.u32 %v2041, 2147483648
        %v2059 = vmul.f32 %v2058, 1.442695
        %v2060 = vpow.pop %v2059
        %v2061 = vadd.f32 %v2060, 1.0
        %v2062 = vrcp.pop %v2061
        %v2063 = vmul.f32 1.0, %v2062
        %v2064 = vmul.f32 %v2056, %v1712
        %v2065 = vmul.f32 %v2050, %v2057
        %v2066 = vadd.f32 %v2064, %v2065
        %v2067 = vtanh.pop %v2066
        %v2068 = vmul.f32 %v2063, %v2067
        %v2069 = vpack.c.bf16 %v2068, %v2068
        %2070 = vmatprep.subr.bf16.mxu0 %v1115
        %2071 = vmatpush1.bf16.msra.mxu0 %v1114
        %2072 = vmatprep.subr.bf16.mxu0 %v1119
        %2073 = vmatpush1.bf16.msra.mxu0 %v1118
        %2074 = vmatprep.subr.bf16.mxu0 %v1123
        %2075 = vmatpush1.bf16.msra.mxu0 %v1122
        %2076 = vmatprep.subr.bf16.mxu0 %v1127
        %2077 = vmatpush1.bf16.msra.mxu0 %v1126
        %2078 = vmatprep.subr.bf16.mxu0 %v1131
        %2079 = vmatpush1.bf16.msra.mxu0 %v1130
        %2080 = vmatprep.subr.bf16.mxu0 %v1135
        %2081 = vmatpush1.bf16.msra.mxu0 %v1134
        %2082 = vmatprep.subr.bf16.mxu0 %v1139
        %2083 = vmatpush1.bf16.msra.mxu0 %v1138
        %2084 = vmatprep.subr.bf16.mxu0 %v1143
        %2085 = vmatpush1.bf16.msra.mxu0 %v1142
        %2086 = vmatprep.subr.bf16.mxu0 0
        %2087 = vmatpush1.bf16.msra.mxu0 0
        %2088 = vmatprep.subr.bf16.mxu0 0
        %2089 = vmatpush1.bf16.msra.mxu0 0
        %2090 = vmatprep.subr.bf16.mxu0 0
        %2091 = vmatpush1.bf16.msra.mxu0 0
        %2092 = vmatprep.subr.bf16.mxu0 0
        %2093 = vmatpush1.bf16.msra.mxu0 0
        %2094 = vmatprep.subr.bf16.mxu0 0
        %2095 = vmatpush1.bf16.msra.mxu0 0
        %2096 = vmatprep.subr.bf16.mxu0 0
        %2097 = vmatpush1.bf16.msra.mxu0 0
        %2098 = vmatprep.subr.bf16.mxu0 0
        %2099 = vmatpush1.bf16.msra.mxu0 0
        %2100 = vmatprep.subr.bf16.mxu0 0
        %2101 = vmatpush1.bf16.msra.mxu0 0
        %2102 = vmatprep.mubr.bf16.mxu0 0
        %2103 = vmatmul.mubr.bf16.gmra.mrb[0].mxu0 %v1744
        %v2104 = vpop.f32.mrb[0].mxu0
        %v2105 = vadd.f32 0.0, %v2104
        %v2106 = vpop.f32.mrb[0].mxu0
        %v2107 = vadd.f32 0.0, %v2106
        %v2108 = vpop.f32.mrb[0].mxu0
        %v2109 = vpop.f32.mrb[0].mxu0
        %2110 = vdwg.mxu0
        %2111 = vmatprep.subr.bf16.mxu0 %v1117
        %2112 = vmatpush1.bf16.msra.mxu0 %v1116
        %2113 = vmatprep.subr.bf16.mxu0 %v1121
        %2114 = vmatpush1.bf16.msra.mxu0 %v1120
        %2115 = vmatprep.subr.bf16.mxu0 %v1125
        %2116 = vmatpush1.bf16.msra.mxu0 %v1124
        %2117 = vmatprep.subr.bf16.mxu0 %v1129
        %2118 = vmatpush1.bf16.msra.mxu0 %v1128
        %2119 = vmatprep.subr.bf16.mxu0 %v1133
        %2120 = vmatpush1.bf16.msra.mxu0 %v1132
        %2121 = vmatprep.subr.bf16.mxu0 %v1137
        %2122 = vmatpush1.bf16.msra.mxu0 %v1136
        %2123 = vmatprep.subr.bf16.mxu0 %v1141
        %2124 = vmatpush1.bf16.msra.mxu0 %v1140
        %2125 = vmatprep.subr.bf16.mxu0 %v1145
        %2126 = vmatpush1.bf16.msra.mxu0 %v1144
        %2127 = vmatprep.subr.bf16.mxu0 0
        %2128 = vmatpush1.bf16.msra.mxu0 0
        %2129 = vmatprep.subr.bf16.mxu0 0
        %2130 = vmatpush1.bf16.msra.mxu0 0
        %2131 = vmatprep.subr.bf16.mxu0 0
        %2132 = vmatpush1.bf16.msra.mxu0 0
        %2133 = vmatprep.subr.bf16.mxu0 0
        %2134 = vmatpush1.bf16.msra.mxu0 0
        %2135 = vmatprep.subr.bf16.mxu0 0
        %2136 = vmatpush1.bf16.msra.mxu0 0
        %2137 = vmatprep.subr.bf16.mxu0 0
        %2138 = vmatpush1.bf16.msra.mxu0 0
        %2139 = vmatprep.subr.bf16.mxu0 0
        %2140 = vmatpush1.bf16.msra.mxu0 0
        %2141 = vmatprep.subr.bf16.mxu0 0
        %2142 = vmatpush1.bf16.msra.mxu0 0
        %2143 = vmatprep.mubr.bf16.mxu0 0
        %2144 = vmatmul.mubr.bf16.gmra.mrb[0].mxu0 %v1744
        %v2145 = vpop.f32.mrb[0].mxu0
        %v2146 = vadd.f32 0.0, %v2145
        %v2147 = vpop.f32.mrb[0].mxu0
        %v2148 = vadd.f32 0.0, %v2147
        %v2149 = vpop.f32.mrb[0].mxu0
        %v2150 = vpop.f32.mrb[0].mxu0
        %2151 = vdwg.mxu0
        %v2152 = vadd.f32 %v949, %v2105
        %v2153 = vadd.f32 %v951, %v2107
        %v2154 = vadd.f32 %v992, %v2146
        %v2155 = vadd.f32 %v994, %v2148
        %v2156 = vxor.u32 %v2152, 2147483648
        %v2157 = vmul.f32 %v2156, 1.442695
        %v2158 = vpow.pop %v2157
        %v2159 = vadd.f32 %v2158, 1.0
        %v2160 = vrcp.pop %v2159
        %v2161 = vmul.f32 1.0, %v2160
        %v2162 = vxor.u32 %v2153, 2147483648
        %v2163 = vmul.f32 %v2162, 1.442695
        %v2164 = vpow.pop %v2163
        %v2165 = vadd.f32 %v2164, 1.0
        %v2166 = vrcp.pop %v2165
        %v2167 = vmul.f32 1.0, %v2166
        %v2168 = vtanh.pop %v2154
        %v2169 = vxor.u32 %v2155, 2147483648
        %v2170 = vmul.f32 %v2169, 1.442695
        %v2171 = vpow.pop %v2170
        %v2172 = vadd.f32 %v2171, 1.0
        %v2173 = vrcp.pop %v2172
        %v2174 = vmul.f32 1.0, %v2173
        %v2175 = vmul.f32 %v2167, %v1741
        %v2176 = vmul.f32 %v2161, %v2168
        %v2177 = vadd.f32 %v2175, %v2176
        %v2178 = vtanh.pop %v2177
        %v2179 = vmul.f32 %v2174, %v2178
        %v2180 = vpack.c.bf16 %v2179, %v2179
        %2181 = vmatprep.subr.bf16.mxu0 %v1482
        %2182 = vmatpush1.bf16.msra.mxu0 %v1481
        %2183 = vmatprep.subr.bf16.mxu0 %v1486
        %2184 = vmatpush1.bf16.msra.mxu0 %v1485
        %2185 = vmatprep.subr.bf16.mxu0 %v1490
        %2186 = vmatpush1.bf16.msra.mxu0 %v1489
        %2187 = vmatprep.subr.bf16.mxu0 %v1494
        %2188 = vmatpush1.bf16.msra.mxu0 %v1493
        %2189 = vmatprep.subr.bf16.mxu0 %v1498
        %2190 = vmatpush1.bf16.msra.mxu0 %v1497
        %2191 = vmatprep.subr.bf16.mxu0 %v1502
        %2192 = vmatpush1.bf16.msra.mxu0 %v1501
        %2193 = vmatprep.subr.bf16.mxu0 %v1506
        %2194 = vmatpush1.bf16.msra.mxu0 %v1505
        %2195 = vmatprep.subr.bf16.mxu0 %v1510
        %2196 = vmatpush1.bf16.msra.mxu0 %v1509
        %2197 = vmatprep.subr.bf16.mxu0 %v1514
        %2198 = vmatpush1.bf16.msra.mxu0 %v1513
        %2199 = vmatprep.subr.bf16.mxu0 %v1518
        %2200 = vmatpush1.bf16.msra.mxu0 %v1517
        %2201 = vmatprep.subr.bf16.mxu0 %v1522
        %2202 = vmatpush1.bf16.msra.mxu0 %v1521
        %2203 = vmatprep.subr.bf16.mxu0 %v1526
        %2204 = vmatpush1.bf16.msra.mxu0 %v1525
        %2205 = vmatprep.subr.bf16.mxu0 %v1530
        %2206 = vmatpush1.bf16.msra.mxu0 %v1529
        %2207 = vmatprep.subr.bf16.mxu0 %v1534
        %2208 = vmatpush1.bf16.msra.mxu0 %v1533
        %2209 = vmatprep.subr.bf16.mxu0 %v1538
        %2210 = vmatpush1.bf16.msra.mxu0 %v1537
        %2211 = vmatprep.subr.bf16.mxu0 %v1542
        %2212 = vmatpush1.bf16.msra.mxu0 %v1541
        %2213 = vmatprep.mubr.bf16.mxu0 %v1851
        %2214 = vmatmul.mubr.bf16.gmra.mrb[0].mxu0 %v2180
        %v2215 = vpop.f32.mrb[0].mxu0
        %v2216 = vadd.f32 %v1001, %v2215
        %v2217 = vpop.f32.mrb[0].mxu0
        %v2218 = vadd.f32 %v1005, %v2217
        %v2219 = vpop.f32.mrb[0].mxu0
        %v2220 = vpop.f32.mrb[0].mxu0
        %2221 = vdwg.mxu0
        %2222 = vmatprep.subr.bf16.mxu0 %v1484
        %2223 = vmatpush1.bf16.msra.mxu0 %v1483
        %2224 = vmatprep.subr.bf16.mxu0 %v1488
        %2225 = vmatpush1.bf16.msra.mxu0 %v1487
        %2226 = vmatprep.subr.bf16.mxu0 %v1492
        %2227 = vmatpush1.bf16.msra.mxu0 %v1491
        %2228 = vmatprep.subr.bf16.mxu0 %v1496
        %2229 = vmatpush1.bf16.msra.mxu0 %v1495
        %2230 = vmatprep.subr.bf16.mxu0 %v1500
        %2231 = vmatpush1.bf16.msra.mxu0 %v1499
        %2232 = vmatprep.subr.bf16.mxu0 %v1504
        %2233 = vmatpush1.bf16.msra.mxu0 %v1503
        %2234 = vmatprep.subr.bf16.mxu0 %v1508
        %2235 = vmatpush1.bf16.msra.mxu0 %v1507
        %2236 = vmatprep.subr.bf16.mxu0 %v1512
        %2237 = vmatpush1.bf16.msra.mxu0 %v1511
        %2238 = vmatprep.subr.bf16.mxu0 %v1516
        %2239 = vmatpush1.bf16.msra.mxu0 %v1515
        %2240 = vmatprep.subr.bf16.mxu0 %v1520
        %2241 = vmatpush1.bf16.msra.mxu0 %v1519
        %2242 = vmatprep.subr.bf16.mxu0 %v1524
        %2243 = vmatpush1.bf16.msra.mxu0 %v1523
        %2244 = vmatprep.subr.bf16.mxu0 %v1528
        %2245 = vmatpush1.bf16.msra.mxu0 %v1527
        %2246 = vmatprep.subr.bf16.mxu0 %v1532
        %2247 = vmatpush1.bf16.msra.mxu0 %v1531
        %2248 = vmatprep.subr.bf16.mxu0 %v1536
        %2249 = vmatpush1.bf16.msra.mxu0 %v1535
        %2250 = vmatprep.subr.bf16.mxu0 %v1540
        %2251 = vmatpush1.bf16.msra.mxu0 %v1539
        %2252 = vmatprep.subr.bf16.mxu0 %v1544
        %2253 = vmatpush1.bf16.msra.mxu0 %v1543
        %2254 = vmatprep.mubr.bf16.mxu0 %v1851
        %2255 = vmatmul.mubr.bf16.gmra.mrb[0].mxu0 %v2180
        %v2256 = vpop.f32.mrb[0].mxu0
        %v2257 = vadd.f32 %v1009, %v2256
        %v2258 = vpop.f32.mrb[0].mxu0
        %v2259 = vadd.f32 %v1013, %v2258
        %v2260 = vpop.f32.mrb[0].mxu0
        %v2261 = vpop.f32.mrb[0].mxu0
        %2262 = vdwg.mxu0
        %v2263 = vxor.u32 %v2216, 2147483648
        %v2264 = vmul.f32 %v2263, 1.442695
        %v2265 = vpow.pop %v2264
        %v2266 = vadd.f32 %v2265, 1.0
        %v2267 = vrcp.pop %v2266
        %v2268 = vmul.f32 1.0, %v2267
        %v2269 = vxor.u32 %v2218, 2147483648
        %v2270 = vmul.f32 %v2269, 1.442695
        %v2271 = vpow.pop %v2270
        %v2272 = vadd.f32 %v2271, 1.0
        %v2273 = vrcp.pop %v2272
        %v2274 = vmul.f32 1.0, %v2273
        %v2275 = vtanh.pop %v2257
        %v2276 = vxor.u32 %v2259, 2147483648
        %v2277 = vmul.f32 %v2276, 1.442695
        %v2278 = vpow.pop %v2277
        %v2279 = vadd.f32 %v2278, 1.0
        %v2280 = vrcp.pop %v2279
        %v2281 = vmul.f32 1.0, %v2280
        %v2282 = vmul.f32 %v2274, %v1848
        %v2283 = vmul.f32 %v2268, %v2275
        %v2284 = vadd.f32 %v2282, %v2283
        %v2285 = vtanh.pop %v2284
        %v2286 = vmul.f32 %v2281, %v2285
        %v2287 = vpack.c.bf16 %v2286, %v2286
        %2288 = vmatprep.subr.bf16.mxu0 %v1115
        %2289 = vmatpush1.bf16.msra.mxu0 %v1114
        %2290 = vmatprep.subr.bf16.mxu0 %v1119
        %2291 = vmatpush1.bf16.msra.mxu0 %v1118
        %2292 = vmatprep.subr.bf16.mxu0 %v1123
        %2293 = vmatpush1.bf16.msra.mxu0 %v1122
        %2294 = vmatprep.subr.bf16.mxu0 %v1127
        %2295 = vmatpush1.bf16.msra.mxu0 %v1126
        %2296 = vmatprep.subr.bf16.mxu0 %v1131
        %2297 = vmatpush1.bf16.msra.mxu0 %v1130
        %2298 = vmatprep.subr.bf16.mxu0 %v1135
        %2299 = vmatpush1.bf16.msra.mxu0 %v1134
        %2300 = vmatprep.subr.bf16.mxu0 %v1139
        %2301 = vmatpush1.bf16.msra.mxu0 %v1138
        %2302 = vmatprep.subr.bf16.mxu0 %v1143
        %2303 = vmatpush1.bf16.msra.mxu0 %v1142
        %2304 = vmatprep.subr.bf16.mxu0 0
        %2305 = vmatpush1.bf16.msra.mxu0 0
        %2306 = vmatprep.subr.bf16.mxu0 0
        %2307 = vmatpush1.bf16.msra.mxu0 0
        %2308 = vmatprep.subr.bf16.mxu0 0
        %2309 = vmatpush1.bf16.msra.mxu0 0
        %2310 = vmatprep.subr.bf16.mxu0 0
        %2311 = vmatpush1.bf16.msra.mxu0 0
        %2312 = vmatprep.subr.bf16.mxu0 0
        %2313 = vmatpush1.bf16.msra.mxu0 0
        %2314 = vmatprep.subr.bf16.mxu0 0
        %2315 = vmatpush1.bf16.msra.mxu0 0
        %2316 = vmatprep.subr.bf16.mxu0 0
        %2317 = vmatpush1.bf16.msra.mxu0 0
        %2318 = vmatprep.subr.bf16.mxu0 0
        %2319 = vmatpush1.bf16.msra.mxu0 0
        %2320 = vmatprep.mubr.bf16.mxu0 0
        %2321 = vmatmul.mubr.bf16.gmra.mrb[0].mxu0 %v1962
        %v2322 = vpop.f32.mrb[0].mxu0
        %v2323 = vadd.f32 0.0, %v2322
        %v2324 = vpop.f32.mrb[0].mxu0
        %v2325 = vadd.f32 0.0, %v2324
        %v2326 = vpop.f32.mrb[0].mxu0
        %v2327 = vpop.f32.mrb[0].mxu0
        %2328 = vdwg.mxu0
        %2329 = vmatprep.subr.bf16.mxu0 %v1117
        %2330 = vmatpush1.bf16.msra.mxu0 %v1116
        %2331 = vmatprep.subr.bf16.mxu0 %v1121
        %2332 = vmatpush1.bf16.msra.mxu0 %v1120
        %2333 = vmatprep.subr.bf16.mxu0 %v1125
        %2334 = vmatpush1.bf16.msra.mxu0 %v1124
        %2335 = vmatprep.subr.bf16.mxu0 %v1129
        %2336 = vmatpush1.bf16.msra.mxu0 %v1128
        %2337 = vmatprep.subr.bf16.mxu0 %v1133
        %2338 = vmatpush1.bf16.msra.mxu0 %v1132
        %2339 = vmatprep.subr.bf16.mxu0 %v1137
        %2340 = vmatpush1.bf16.msra.mxu0 %v1136
        %2341 = vmatprep.subr.bf16.mxu0 %v1141
        %2342 = vmatpush1.bf16.msra.mxu0 %v1140
        %2343 = vmatprep.subr.bf16.mxu0 %v1145
        %2344 = vmatpush1.bf16.msra.mxu0 %v1144
        %2345 = vmatprep.subr.bf16.mxu0 0
        %2346 = vmatpush1.bf16.msra.mxu0 0
        %2347 = vmatprep.subr.bf16.mxu0 0
        %2348 = vmatpush1.bf16.msra.mxu0 0
        %2349 = vmatprep.subr.bf16.mxu0 0
        %2350 = vmatpush1.bf16.msra.mxu0 0
        %2351 = vmatprep.subr.bf16.mxu0 0
        %2352 = vmatpush1.bf16.msra.mxu0 0
        %2353 = vmatprep.subr.bf16.mxu0 0
        %2354 = vmatpush1.bf16.msra.mxu0 0
        %2355 = vmatprep.subr.bf16.mxu0 0
        %2356 = vmatpush1.bf16.msra.mxu0 0
        %2357 = vmatprep.subr.bf16.mxu0 0
        %2358 = vmatpush1.bf16.msra.mxu0 0
        %2359 = vmatprep.subr.bf16.mxu0 0
        %2360 = vmatpush1.bf16.msra.mxu0 0
        %2361 = vmatprep.mubr.bf16.mxu0 0
        %2362 = vmatmul.mubr.bf16.gmra.mrb[0].mxu0 %v1962
        %v2363 = vpop.f32.mrb[0].mxu0
        %v2364 = vadd.f32 0.0, %v2363
        %v2365 = vpop.f32.mrb[0].mxu0
        %v2366 = vadd.f32 0.0, %v2365
        %v2367 = vpop.f32.mrb[0].mxu0
        %v2368 = vpop.f32.mrb[0].mxu0
        %2369 = vdwg.mxu0
        %v2370 = vadd.f32 %v945, %v2323
        %v2371 = vadd.f32 %v947, %v2325
        %v2372 = vadd.f32 %v988, %v2364
        %v2373 = vadd.f32 %v990, %v2366
        %v2374 = vxor.u32 %v2370, 2147483648
        %v2375 = vmul.f32 %v2374, 1.442695
        %v2376 = vpow.pop %v2375
        %v2377 = vadd.f32 %v2376, 1.0
        %v2378 = vrcp.pop %v2377
        %v2379 = vmul.f32 1.0, %v2378
        %v2380 = vxor.u32 %v2371, 2147483648
        %v2381 = vmul.f32 %v2380, 1.442695
        %v2382 = vpow.pop %v2381
        %v2383 = vadd.f32 %v2382, 1.0
        %v2384 = vrcp.pop %v2383
        %v2385 = vmul.f32 1.0, %v2384
        %v2386 = vtanh.pop %v2372
        %v2387 = vxor.u32 %v2373, 2147483648
        %v2388 = vmul.f32 %v2387, 1.442695
        %v2389 = vpow.pop %v2388
        %v2390 = vadd.f32 %v2389, 1.0
        %v2391 = vrcp.pop %v2390
        %v2392 = vmul.f32 1.0, %v2391
        %v2393 = vmul.f32 %v2385, %v1959
        %v2394 = vmul.f32 %v2379, %v2386
        %v2395 = vadd.f32 %v2393, %v2394
        %v2396 = vtanh.pop %v2395
        %v2397 = vmul.f32 %v2392, %v2396
        %v2398 = vpack.c.bf16 %v2397, %v2397
        %2399 = vmatprep.subr.bf16.mxu0 %v1482
        %2400 = vmatpush1.bf16.msra.mxu0 %v1481
        %2401 = vmatprep.subr.bf16.mxu0 %v1486
        %2402 = vmatpush1.bf16.msra.mxu0 %v1485
        %2403 = vmatprep.subr.bf16.mxu0 %v1490
        %2404 = vmatpush1.bf16.msra.mxu0 %v1489
        %2405 = vmatprep.subr.bf16.mxu0 %v1494
        %2406 = vmatpush1.bf16.msra.mxu0 %v1493
        %2407 = vmatprep.subr.bf16.mxu0 %v1498
        %2408 = vmatpush1.bf16.msra.mxu0 %v1497
        %2409 = vmatprep.subr.bf16.mxu0 %v1502
        %2410 = vmatpush1.bf16.msra.mxu0 %v1501
        %2411 = vmatprep.subr.bf16.mxu0 %v1506
        %2412 = vmatpush1.bf16.msra.mxu0 %v1505
        %2413 = vmatprep.subr.bf16.mxu0 %v1510
        %2414 = vmatpush1.bf16.msra.mxu0 %v1509
        %2415 = vmatprep.subr.bf16.mxu0 %v1514
        %2416 = vmatpush1.bf16.msra.mxu0 %v1513
        %2417 = vmatprep.subr.bf16.mxu0 %v1518
        %2418 = vmatpush1.bf16.msra.mxu0 %v1517
        %2419 = vmatprep.subr.bf16.mxu0 %v1522
        %2420 = vmatpush1.bf16.msra.mxu0 %v1521
        %2421 = vmatprep.subr.bf16.mxu0 %v1526
        %2422 = vmatpush1.bf16.msra.mxu0 %v1525
        %2423 = vmatprep.subr.bf16.mxu0 %v1530
        %2424 = vmatpush1.bf16.msra.mxu0 %v1529
        %2425 = vmatprep.subr.bf16.mxu0 %v1534
        %2426 = vmatpush1.bf16.msra.mxu0 %v1533
        %2427 = vmatprep.subr.bf16.mxu0 %v1538
        %2428 = vmatpush1.bf16.msra.mxu0 %v1537
        %2429 = vmatprep.subr.bf16.mxu0 %v1542
        %2430 = vmatpush1.bf16.msra.mxu0 %v1541
        %2431 = vmatprep.mubr.bf16.mxu0 %v2069
        %2432 = vmatmul.mubr.bf16.gmra.mrb[0].mxu0 %v2398
        %v2433 = vpop.f32.mrb[0].mxu0
        %v2434 = vadd.f32 %v1001, %v2433
        %v2435 = vpop.f32.mrb[0].mxu0
        %v2436 = vadd.f32 %v1005, %v2435
        %v2437 = vpop.f32.mrb[0].mxu0
        %v2438 = vpop.f32.mrb[0].mxu0
        %2439 = vdwg.mxu0
        %2440 = vmatprep.subr.bf16.mxu0 %v1484
        %2441 = vmatpush1.bf16.msra.mxu0 %v1483
        %2442 = vmatprep.subr.bf16.mxu0 %v1488
        %2443 = vmatpush1.bf16.msra.mxu0 %v1487
        %2444 = vmatprep.subr.bf16.mxu0 %v1492
        %2445 = vmatpush1.bf16.msra.mxu0 %v1491
        %2446 = vmatprep.subr.bf16.mxu0 %v1496
        %2447 = vmatpush1.bf16.msra.mxu0 %v1495
        %2448 = vmatprep.subr.bf16.mxu0 %v1500
        %2449 = vmatpush1.bf16.msra.mxu0 %v1499
        %2450 = vmatprep.subr.bf16.mxu0 %v1504
        %2451 = vmatpush1.bf16.msra.mxu0 %v1503
        %2452 = vmatprep.subr.bf16.mxu0 %v1508
        %2453 = vmatpush1.bf16.msra.mxu0 %v1507
        %2454 = vmatprep.subr.bf16.mxu0 %v1512
        %2455 = vmatpush1.bf16.msra.mxu0 %v1511
        %2456 = vmatprep.subr.bf16.mxu0 %v1516
        %2457 = vmatpush1.bf16.msra.mxu0 %v1515
        %2458 = vmatprep.subr.bf16.mxu0 %v1520
        %2459 = vmatpush1.bf16.msra.mxu0 %v1519
        %2460 = vmatprep.subr.bf16.mxu0 %v1524
        %2461 = vmatpush1.bf16.msra.mxu0 %v1523
        %2462 = vmatprep.subr.bf16.mxu0 %v1528
        %2463 = vmatpush1.bf16.msra.mxu0 %v1527
        %2464 = vmatprep.subr.bf16.mxu0 %v1532
        %2465 = vmatpush1.bf16.msra.mxu0 %v1531
        %2466 = vmatprep.subr.bf16.mxu0 %v1536
        %2467 = vmatpush1.bf16.msra.mxu0 %v1535
        %2468 = vmatprep.subr.bf16.mxu0 %v1540
        %2469 = vmatpush1.bf16.msra.mxu0 %v1539
        %2470 = vmatprep.subr.bf16.mxu0 %v1544
        %2471 = vmatpush1.bf16.msra.mxu0 %v1543
        %2472 = vmatprep.mubr.bf16.mxu0 %v2069
        %2473 = vmatmul.mubr.bf16.gmra.mrb[0].mxu0 %v2398
        %v2474 = vpop.f32.mrb[0].mxu0
        %v2475 = vadd.f32 %v1009, %v2474
        %v2476 = vpop.f32.mrb[0].mxu0
        %v2477 = vadd.f32 %v1013, %v2476
        %v2478 = vpop.f32.mrb[0].mxu0
        %v2479 = vpop.f32.mrb[0].mxu0
        %2480 = vdwg.mxu0
        %v2481 = vxor.u32 %v2434, 2147483648
        %v2482 = vmul.f32 %v2481, 1.442695
        %v2483 = vpow.pop %v2482
        %v2484 = vadd.f32 %v2483, 1.0
        %v2485 = vrcp.pop %v2484
        %v2486 = vmul.f32 1.0, %v2485
        %v2487 = vxor.u32 %v2436, 2147483648
        %v2488 = vmul.f32 %v2487, 1.442695
        %v2489 = vpow.pop %v2488
        %v2490 = vadd.f32 %v2489, 1.0
        %v2491 = vrcp.pop %v2490
        %v2492 = vmul.f32 1.0, %v2491
        %v2493 = vtanh.pop %v2475
        %v2494 = vxor.u32 %v2477, 2147483648
        %v2495 = vmul.f32 %v2494, 1.442695
        %v2496 = vpow.pop %v2495
        %v2497 = vadd.f32 %v2496, 1.0
        %v2498 = vrcp.pop %v2497
        %v2499 = vmul.f32 1.0, %v2498
        %v2500 = vmul.f32 %v2492, %v2066
        %v2501 = vmul.f32 %v2486, %v2493
        %v2502 = vadd.f32 %v2500, %v2501
        %v2503 = vtanh.pop %v2502
        %v2504 = vmul.f32 %v2499, %v2503
        %v2505 = vpack.c.bf16 %v2504, %v2504
        %2506 = vmatprep.subr.bf16.mxu0 %v1115
        %2507 = vmatpush1.bf16.msra.mxu0 %v1114
        %2508 = vmatprep.subr.bf16.mxu0 %v1119
        %2509 = vmatpush1.bf16.msra.mxu0 %v1118
        %2510 = vmatprep.subr.bf16.mxu0 %v1123
        %2511 = vmatpush1.bf16.msra.mxu0 %v1122
        %2512 = vmatprep.subr.bf16.mxu0 %v1127
        %2513 = vmatpush1.bf16.msra.mxu0 %v1126
        %2514 = vmatprep.subr.bf16.mxu0 %v1131
        %2515 = vmatpush1.bf16.msra.mxu0 %v1130
        %2516 = vmatprep.subr.bf16.mxu0 %v1135
        %2517 = vmatpush1.bf16.msra.mxu0 %v1134
        %2518 = vmatprep.subr.bf16.mxu0 %v1139
        %2519 = vmatpush1.bf16.msra.mxu0 %v1138
        %2520 = vmatprep.subr.bf16.mxu0 %v1143
        %2521 = vmatpush1.bf16.msra.mxu0 %v1142
        %2522 = vmatprep.subr.bf16.mxu0 0
        %2523 = vmatpush1.bf16.msra.mxu0 0
        %2524 = vmatprep.subr.bf16.mxu0 0
        %2525 = vmatpush1.bf16.msra.mxu0 0
        %2526 = vmatprep.subr.bf16.mxu0 0
        %2527 = vmatpush1.bf16.msra.mxu0 0
        %2528 = vmatprep.subr.bf16.mxu0 0
        %2529 = vmatpush1.bf16.msra.mxu0 0
        %2530 = vmatprep.subr.bf16.mxu0 0
        %2531 = vmatpush1.bf16.msra.mxu0 0
        %2532 = vmatprep.subr.bf16.mxu0 0
        %2533 = vmatpush1.bf16.msra.mxu0 0
        %2534 = vmatprep.subr.bf16.mxu0 0
        %2535 = vmatpush1.bf16.msra.mxu0 0
        %2536 = vmatprep.subr.bf16.mxu0 0
        %2537 = vmatpush1.bf16.msra.mxu0 0
        %2538 = vmatprep.mubr.bf16.mxu0 0
        %2539 = vmatmul.mubr.bf16.gmra.mrb[0].mxu0 %v2180
        %v2540 = vpop.f32.mrb[0].mxu0
        %v2541 = vadd.f32 0.0, %v2540
        %v2542 = vpop.f32.mrb[0].mxu0
        %v2543 = vadd.f32 0.0, %v2542
        %v2544 = vpop.f32.mrb[0].mxu0
        %v2545 = vpop.f32.mrb[0].mxu0
        %2546 = vdwg.mxu0
        %2547 = vmatprep.subr.bf16.mxu0 %v1117
        %2548 = vmatpush1.bf16.msra.mxu0 %v1116
        %2549 = vmatprep.subr.bf16.mxu0 %v1121
        %2550 = vmatpush1.bf16.msra.mxu0 %v1120
        %2551 = vmatprep.subr.bf16.mxu0 %v1125
        %2552 = vmatpush1.bf16.msra.mxu0 %v1124
        %2553 = vmatprep.subr.bf16.mxu0 %v1129
        %2554 = vmatpush1.bf16.msra.mxu0 %v1128
        %2555 = vmatprep.subr.bf16.mxu0 %v1133
        %2556 = vmatpush1.bf16.msra.mxu0 %v1132
        %2557 = vmatprep.subr.bf16.mxu0 %v1137
        %2558 = vmatpush1.bf16.msra.mxu0 %v1136
        %2559 = vmatprep.subr.bf16.mxu0 %v1141
        %2560 = vmatpush1.bf16.msra.mxu0 %v1140
        %2561 = vmatprep.subr.bf16.mxu0 %v1145
        %2562 = vmatpush1.bf16.msra.mxu0 %v1144
        %2563 = vmatprep.subr.bf16.mxu0 0
        %2564 = vmatpush1.bf16.msra.mxu0 0
        %2565 = vmatprep.subr.bf16.mxu0 0
        %2566 = vmatpush1.bf16.msra.mxu0 0
        %2567 = vmatprep.subr.bf16.mxu0 0
        %2568 = vmatpush1.bf16.msra.mxu0 0
        %2569 = vmatprep.subr.bf16.mxu0 0
        %2570 = vmatpush1.bf16.msra.mxu0 0
        %2571 = vmatprep.subr.bf16.mxu0 0
        %2572 = vmatpush1.bf16.msra.mxu0 0
        %2573 = vmatprep.subr.bf16.mxu0 0
        %2574 = vmatpush1.bf16.msra.mxu0 0
        %2575 = vmatprep.subr.bf16.mxu0 0
        %2576 = vmatpush1.bf16.msra.mxu0 0
        %2577 = vmatprep.subr.bf16.mxu0 0
        %2578 = vmatpush1.bf16.msra.mxu0 0
        %2579 = vmatprep.mubr.bf16.mxu0 0
        %2580 = vmatmul.mubr.bf16.gmra.mrb[0].mxu0 %v2180
        %v2581 = vpop.f32.mrb[0].mxu0
        %v2582 = vadd.f32 0.0, %v2581
        %v2583 = vpop.f32.mrb[0].mxu0
        %v2584 = vadd.f32 0.0, %v2583
        %v2585 = vpop.f32.mrb[0].mxu0
        %v2586 = vpop.f32.mrb[0].mxu0
        %2587 = vdwg.mxu0
        %v2588 = vadd.f32 %v949, %v2541
        %v2589 = vadd.f32 %v951, %v2543
        %v2590 = vadd.f32 %v992, %v2582
        %v2591 = vadd.f32 %v994, %v2584
        %v2592 = vxor.u32 %v2588, 2147483648
        %v2593 = vmul.f32 %v2592, 1.442695
        %v2594 = vpow.pop %v2593
        %v2595 = vadd.f32 %v2594, 1.0
        %v2596 = vrcp.pop %v2595
        %v2597 = vmul.f32 1.0, %v2596
        %v2598 = vxor.u32 %v2589, 2147483648
        %v2599 = vmul.f32 %v2598, 1.442695
        %v2600 = vpow.pop %v2599
        %v2601 = vadd.f32 %v2600, 1.0
        %v2602 = vrcp.pop %v2601
        %v2603 = vmul.f32 1.0, %v2602
        %v2604 = vtanh.pop %v2590
        %v2605 = vxor.u32 %v2591, 2147483648
        %v2606 = vmul.f32 %v2605, 1.442695
        %v2607 = vpow.pop %v2606
        %v2608 = vadd.f32 %v2607, 1.0
        %v2609 = vrcp.pop %v2608
        %v2610 = vmul.f32 1.0, %v2609
        %v2611 = vmul.f32 %v2603, %v2177
        %v2612 = vmul.f32 %v2597, %v2604
        %v2613 = vadd.f32 %v2611, %v2612
        %v2614 = vtanh.pop %v2613
        %v2615 = vmul.f32 %v2610, %v2614
        %v2616 = vpack.c.bf16 %v2615, %v2615
        %2617 = vmatprep.subr.bf16.mxu0 %v1482
        %2618 = vmatpush1.bf16.msra.mxu0 %v1481
        %2619 = vmatprep.subr.bf16.mxu0 %v1486
        %2620 = vmatpush1.bf16.msra.mxu0 %v1485
        %2621 = vmatprep.subr.bf16.mxu0 %v1490
        %2622 = vmatpush1.bf16.msra.mxu0 %v1489
        %2623 = vmatprep.subr.bf16.mxu0 %v1494
        %2624 = vmatpush1.bf16.msra.mxu0 %v1493
        %2625 = vmatprep.subr.bf16.mxu0 %v1498
        %2626 = vmatpush1.bf16.msra.mxu0 %v1497
        %2627 = vmatprep.subr.bf16.mxu0 %v1502
        %2628 = vmatpush1.bf16.msra.mxu0 %v1501
        %2629 = vmatprep.subr.bf16.mxu0 %v1506
        %2630 = vmatpush1.bf16.msra.mxu0 %v1505
        %2631 = vmatprep.subr.bf16.mxu0 %v1510
        %2632 = vmatpush1.bf16.msra.mxu0 %v1509
        %2633 = vmatprep.subr.bf16.mxu0 %v1514
        %2634 = vmatpush1.bf16.msra.mxu0 %v1513
        %2635 = vmatprep.subr.bf16.mxu0 %v1518
        %2636 = vmatpush1.bf16.msra.mxu0 %v1517
        %2637 = vmatprep.subr.bf16.mxu0 %v1522
        %2638 = vmatpush1.bf16.msra.mxu0 %v1521
        %2639 = vmatprep.subr.bf16.mxu0 %v1526
        %2640 = vmatpush1.bf16.msra.mxu0 %v1525
        %2641 = vmatprep.subr.bf16.mxu0 %v1530
        %2642 = vmatpush1.bf16.msra.mxu0 %v1529
        %2643 = vmatprep.subr.bf16.mxu0 %v1534
        %2644 = vmatpush1.bf16.msra.mxu0 %v1533
        %2645 = vmatprep.subr.bf16.mxu0 %v1538
        %2646 = vmatpush1.bf16.msra.mxu0 %v1537
        %2647 = vmatprep.subr.bf16.mxu0 %v1542
        %2648 = vmatpush1.bf16.msra.mxu0 %v1541
        %2649 = vmatprep.mubr.bf16.mxu0 %v2287
        %2650 = vmatmul.mubr.bf16.gmra.mrb[0].mxu0 %v2616
        %v2651 = vpop.f32.mrb[0].mxu0
        %v2652 = vadd.f32 %v1001, %v2651
        %v2653 = vpop.f32.mrb[0].mxu0
        %v2654 = vadd.f32 %v1005, %v2653
        %v2655 = vpop.f32.mrb[0].mxu0
        %v2656 = vpop.f32.mrb[0].mxu0
        %2657 = vdwg.mxu0
        %2658 = vmatprep.subr.bf16.mxu0 %v1484
        %2659 = vmatpush1.bf16.msra.mxu0 %v1483
        %2660 = vmatprep.subr.bf16.mxu0 %v1488
        %2661 = vmatpush1.bf16.msra.mxu0 %v1487
        %2662 = vmatprep.subr.bf16.mxu0 %v1492
        %2663 = vmatpush1.bf16.msra.mxu0 %v1491
        %2664 = vmatprep.subr.bf16.mxu0 %v1496
        %2665 = vmatpush1.bf16.msra.mxu0 %v1495
        %2666 = vmatprep.subr.bf16.mxu0 %v1500
        %2667 = vmatpush1.bf16.msra.mxu0 %v1499
        %2668 = vmatprep.subr.bf16.mxu0 %v1504
        %2669 = vmatpush1.bf16.msra.mxu0 %v1503
        %2670 = vmatprep.subr.bf16.mxu0 %v1508
        %2671 = vmatpush1.bf16.msra.mxu0 %v1507
        %2672 = vmatprep.subr.bf16.mxu0 %v1512
        %2673 = vmatpush1.bf16.msra.mxu0 %v1511
        %2674 = vmatprep.subr.bf16.mxu0 %v1516
        %2675 = vmatpush1.bf16.msra.mxu0 %v1515
        %2676 = vmatprep.subr.bf16.mxu0 %v1520
        %2677 = vmatpush1.bf16.msra.mxu0 %v1519
        %2678 = vmatprep.subr.bf16.mxu0 %v1524
        %2679 = vmatpush1.bf16.msra.mxu0 %v1523
        %2680 = vmatprep.subr.bf16.mxu0 %v1528
        %2681 = vmatpush1.bf16.msra.mxu0 %v1527
        %2682 = vmatprep.subr.bf16.mxu0 %v1532
        %2683 = vmatpush1.bf16.msra.mxu0 %v1531
        %2684 = vmatprep.subr.bf16.mxu0 %v1536
        %2685 = vmatpush1.bf16.msra.mxu0 %v1535
        %2686 = vmatprep.subr.bf16.mxu0 %v1540
        %2687 = vmatpush1.bf16.msra.mxu0 %v1539
        %2688 = vmatprep.subr.bf16.mxu0 %v1544
        %2689 = vmatpush1.bf16.msra.mxu0 %v1543
        %2690 = vmatprep.mubr.bf16.mxu0 %v2287
        %2691 = vmatmul.mubr.bf16.gmra.mrb[0].mxu0 %v2616
        %v2692 = vpop.f32.mrb[0].mxu0
        %v2693 = vadd.f32 %v1009, %v2692
        %v2694 = vpop.f32.mrb[0].mxu0
        %v2695 = vadd.f32 %v1013, %v2694
        %v2696 = vpop.f32.mrb[0].mxu0
        %v2697 = vpop.f32.mrb[0].mxu0
        %2698 = vdwg.mxu0
        %v2699 = vxor.u32 %v2652, 2147483648
        %v2700 = vmul.f32 %v2699, 1.442695
        %v2701 = vpow.pop %v2700
        %v2702 = vadd.f32 %v2701, 1.0
        %v2703 = vrcp.pop %v2702
        %v2704 = vmul.f32 1.0, %v2703
        %v2705 = vxor.u32 %v2654, 2147483648
        %v2706 = vmul.f32 %v2705, 1.442695
        %v2707 = vpow.pop %v2706
        %v2708 = vadd.f32 %v2707, 1.0
        %v2709 = vrcp.pop %v2708
        %v2710 = vmul.f32 1.0, %v2709
        %v2711 = vtanh.pop %v2693
        %v2712 = vxor.u32 %v2695, 2147483648
        %v2713 = vmul.f32 %v2712, 1.442695
        %v2714 = vpow.pop %v2713
        %v2715 = vadd.f32 %v2714, 1.0
        %v2716 = vrcp.pop %v2715
        %v2717 = vmul.f32 1.0, %v2716
        %v2718 = vmul.f32 %v2710, %v2284
        %v2719 = vmul.f32 %v2704, %v2711
        %v2720 = vadd.f32 %v2718, %v2719
        %v2721 = vtanh.pop %v2720
        %v2722 = vmul.f32 %v2717, %v2721
        %v2723 = vpack.c.bf16 %v2722, %v2722
        %2724 = vmatprep.subr.bf16.mxu0 %v1115
        %2725 = vmatpush1.bf16.msra.mxu0 %v1114
        %2726 = vmatprep.subr.bf16.mxu0 %v1119
        %2727 = vmatpush1.bf16.msra.mxu0 %v1118
        %2728 = vmatprep.subr.bf16.mxu0 %v1123
        %2729 = vmatpush1.bf16.msra.mxu0 %v1122
        %2730 = vmatprep.subr.bf16.mxu0 %v1127
        %2731 = vmatpush1.bf16.msra.mxu0 %v1126
        %2732 = vmatprep.subr.bf16.mxu0 %v1131
        %2733 = vmatpush1.bf16.msra.mxu0 %v1130
        %2734 = vmatprep.subr.bf16.mxu0 %v1135
        %2735 = vmatpush1.bf16.msra.mxu0 %v1134
        %2736 = vmatprep.subr.bf16.mxu0 %v1139
        %2737 = vmatpush1.bf16.msra.mxu0 %v1138
        %2738 = vmatprep.subr.bf16.mxu0 %v1143
        %2739 = vmatpush1.bf16.msra.mxu0 %v1142
        %2740 = vmatprep.subr.bf16.mxu0 0
        %2741 = vmatpush1.bf16.msra.mxu0 0
        %2742 = vmatprep.subr.bf16.mxu0 0
        %2743 = vmatpush1.bf16.msra.mxu0 0
        %2744 = vmatprep.subr.bf16.mxu0 0
        %2745 = vmatpush1.bf16.msra.mxu0 0
        %2746 = vmatprep.subr.bf16.mxu0 0
        %2747 = vmatpush1.bf16.msra.mxu0 0
        %2748 = vmatprep.subr.bf16.mxu0 0
        %2749 = vmatpush1.bf16.msra.mxu0 0
        %2750 = vmatprep.subr.bf16.mxu0 0
        %2751 = vmatpush1.bf16.msra.mxu0 0
        %2752 = vmatprep.subr.bf16.mxu0 0
        %2753 = vmatpush1.bf16.msra.mxu0 0
        %2754 = vmatprep.subr.bf16.mxu0 0
        %2755 = vmatpush1.bf16.msra.mxu0 0
        %2756 = vmatprep.mubr.bf16.mxu0 0
        %2757 = vmatmul.mubr.bf16.gmra.mrb[0].mxu0 %v2398
        %v2758 = vpop.f32.mrb[0].mxu0
        %v2759 = vadd.f32 0.0, %v2758
        %v2760 = vpop.f32.mrb[0].mxu0
        %v2761 = vadd.f32 0.0, %v2760
        %v2762 = vpop.f32.mrb[0].mxu0
        %v2763 = vpop.f32.mrb[0].mxu0
        %2764 = vdwg.mxu0
        %2765 = vmatprep.subr.bf16.mxu0 %v1117
        %2766 = vmatpush1.bf16.msra.mxu0 %v1116
        %2767 = vmatprep.subr.bf16.mxu0 %v1121
        %2768 = vmatpush1.bf16.msra.mxu0 %v1120
        %2769 = vmatprep.subr.bf16.mxu0 %v1125
        %2770 = vmatpush1.bf16.msra.mxu0 %v1124
        %2771 = vmatprep.subr.bf16.mxu0 %v1129
        %2772 = vmatpush1.bf16.msra.mxu0 %v1128
        %2773 = vmatprep.subr.bf16.mxu0 %v1133
        %2774 = vmatpush1.bf16.msra.mxu0 %v1132
        %2775 = vmatprep.subr.bf16.mxu0 %v1137
        %2776 = vmatpush1.bf16.msra.mxu0 %v1136
        %2777 = vmatprep.subr.bf16.mxu0 %v1141
        %2778 = vmatpush1.bf16.msra.mxu0 %v1140
        %2779 = vmatprep.subr.bf16.mxu0 %v1145
        %2780 = vmatpush1.bf16.msra.mxu0 %v1144
        %2781 = vmatprep.subr.bf16.mxu0 0
        %2782 = vmatpush1.bf16.msra.mxu0 0
        %2783 = vmatprep.subr.bf16.mxu0 0
        %2784 = vmatpush1.bf16.msra.mxu0 0
        %2785 = vmatprep.subr.bf16.mxu0 0
        %2786 = vmatpush1.bf16.msra.mxu0 0
        %2787 = vmatprep.subr.bf16.mxu0 0
        %2788 = vmatpush1.bf16.msra.mxu0 0
        %2789 = vmatprep.subr.bf16.mxu0 0
        %2790 = vmatpush1.bf16.msra.mxu0 0
        %2791 = vmatprep.subr.bf16.mxu0 0
        %2792 = vmatpush1.bf16.msra.mxu0 0
        %2793 = vmatprep.subr.bf16.mxu0 0
        %2794 = vmatpush1.bf16.msra.mxu0 0
        %2795 = vmatprep.subr.bf16.mxu0 0
        %2796 = vmatpush1.bf16.msra.mxu0 0
        %2797 = vmatprep.mubr.bf16.mxu0 0
        %2798 = vmatmul.mubr.bf16.gmra.mrb[0].mxu0 %v2398
        %v2799 = vpop.f32.mrb[0].mxu0
        %v2800 = vadd.f32 0.0, %v2799
        %v2801 = vpop.f32.mrb[0].mxu0
        %v2802 = vadd.f32 0.0, %v2801
        %v2803 = vpop.f32.mrb[0].mxu0
        %v2804 = vpop.f32.mrb[0].mxu0
        %2805 = vdwg.mxu0
        %v2806 = vadd.f32 %v945, %v2759
        %v2807 = vadd.f32 %v947, %v2761
        %v2808 = vadd.f32 %v988, %v2800
        %v2809 = vadd.f32 %v990, %v2802
        %v2810 = vxor.u32 %v2806, 2147483648
        %v2811 = vmul.f32 %v2810, 1.442695
        %v2812 = vpow.pop %v2811
        %v2813 = vadd.f32 %v2812, 1.0
        %v2814 = vrcp.pop %v2813
        %v2815 = vmul.f32 1.0, %v2814
        %v2816 = vxor.u32 %v2807, 2147483648
        %v2817 = vmul.f32 %v2816, 1.442695
        %v2818 = vpow.pop %v2817
        %v2819 = vadd.f32 %v2818, 1.0
        %v2820 = vrcp.pop %v2819
        %v2821 = vmul.f32 1.0, %v2820
        %v2822 = vtanh.pop %v2808
        %v2823 = vxor.u32 %v2809, 2147483648
        %v2824 = vmul.f32 %v2823, 1.442695
        %v2825 = vpow.pop %v2824
        %v2826 = vadd.f32 %v2825, 1.0
        %v2827 = vrcp.pop %v2826
        %v2828 = vmul.f32 1.0, %v2827
        %v2829 = vmul.f32 %v2821, %v2395
        %v2830 = vmul.f32 %v2815, %v2822
        %v2831 = vadd.f32 %v2829, %v2830
        %v2832 = vtanh.pop %v2831
        %v2833 = vmul.f32 %v2828, %v2832
        %v2834 = vpack.c.bf16 %v2833, %v2833
        %2835 = vmatprep.subr.bf16.mxu0 %v1482
        %2836 = vmatpush1.bf16.msra.mxu0 %v1481
        %2837 = vmatprep.subr.bf16.mxu0 %v1486
        %2838 = vmatpush1.bf16.msra.mxu0 %v1485
        %2839 = vmatprep.subr.bf16.mxu0 %v1490
        %2840 = vmatpush1.bf16.msra.mxu0 %v1489
        %2841 = vmatprep.subr.bf16.mxu0 %v1494
        %2842 = vmatpush1.bf16.msra.mxu0 %v1493
        %2843 = vmatprep.subr.bf16.mxu0 %v1498
        %2844 = vmatpush1.bf16.msra.mxu0 %v1497
        %2845 = vmatprep.subr.bf16.mxu0 %v1502
        %2846 = vmatpush1.bf16.msra.mxu0 %v1501
        %2847 = vmatprep.subr.bf16.mxu0 %v1506
        %2848 = vmatpush1.bf16.msra.mxu0 %v1505
        %2849 = vmatprep.subr.bf16.mxu0 %v1510
        %2850 = vmatpush1.bf16.msra.mxu0 %v1509
        %2851 = vmatprep.subr.bf16.mxu0 %v1514
        %2852 = vmatpush1.bf16.msra.mxu0 %v1513
        %2853 = vmatprep.subr.bf16.mxu0 %v1518
        %2854 = vmatpush1.bf16.msra.mxu0 %v1517
        %2855 = vmatprep.subr.bf16.mxu0 %v1522
        %2856 = vmatpush1.bf16.msra.mxu0 %v1521
        %2857 = vmatprep.subr.bf16.mxu0 %v1526
        %2858 = vmatpush1.bf16.msra.mxu0 %v1525
        %2859 = vmatprep.subr.bf16.mxu0 %v1530
        %2860 = vmatpush1.bf16.msra.mxu0 %v1529
        %2861 = vmatprep.subr.bf16.mxu0 %v1534
        %2862 = vmatpush1.bf16.msra.mxu0 %v1533
        %2863 = vmatprep.subr.bf16.mxu0 %v1538
        %2864 = vmatpush1.bf16.msra.mxu0 %v1537
        %2865 = vmatprep.subr.bf16.mxu0 %v1542
        %2866 = vmatpush1.bf16.msra.mxu0 %v1541
        %2867 = vmatprep.mubr.bf16.mxu0 %v2505
        %2868 = vmatmul.mubr.bf16.gmra.mrb[0].mxu0 %v2834
        %v2869 = vpop.f32.mrb[0].mxu0
        %v2870 = vadd.f32 %v1001, %v2869
        %v2871 = vpop.f32.mrb[0].mxu0
        %v2872 = vadd.f32 %v1005, %v2871
        %v2873 = vpop.f32.mrb[0].mxu0
        %v2874 = vpop.f32.mrb[0].mxu0
        %2875 = vdwg.mxu0
        %2876 = vmatprep.subr.bf16.mxu0 %v1484
        %2877 = vmatpush1.bf16.msra.mxu0 %v1483
        %2878 = vmatprep.subr.bf16.mxu0 %v1488
        %2879 = vmatpush1.bf16.msra.mxu0 %v1487
        %2880 = vmatprep.subr.bf16.mxu0 %v1492
        %2881 = vmatpush1.bf16.msra.mxu0 %v1491
        %2882 = vmatprep.subr.bf16.mxu0 %v1496
        %2883 = vmatpush1.bf16.msra.mxu0 %v1495
        %2884 = vmatprep.subr.bf16.mxu0 %v1500
        %2885 = vmatpush1.bf16.msra.mxu0 %v1499
        %2886 = vmatprep.subr.bf16.mxu0 %v1504
        %2887 = vmatpush1.bf16.msra.mxu0 %v1503
        %2888 = vmatprep.subr.bf16.mxu0 %v1508
        %2889 = vmatpush1.bf16.msra.mxu0 %v1507
        %2890 = vmatprep.subr.bf16.mxu0 %v1512
        %2891 = vmatpush1.bf16.msra.mxu0 %v1511
        %2892 = vmatprep.subr.bf16.mxu0 %v1516
        %2893 = vmatpush1.bf16.msra.mxu0 %v1515
        %2894 = vmatprep.subr.bf16.mxu0 %v1520
        %2895 = vmatpush1.bf16.msra.mxu0 %v1519
        %2896 = vmatprep.subr.bf16.mxu0 %v1524
        %2897 = vmatpush1.bf16.msra.mxu0 %v1523
        %2898 = vmatprep.subr.bf16.mxu0 %v1528
        %2899 = vmatpush1.bf16.msra.mxu0 %v1527
        %2900 = vmatprep.subr.bf16.mxu0 %v1532
        %2901 = vmatpush1.bf16.msra.mxu0 %v1531
        %2902 = vmatprep.subr.bf16.mxu0 %v1536
        %2903 = vmatpush1.bf16.msra.mxu0 %v1535
        %2904 = vmatprep.subr.bf16.mxu0 %v1540
        %2905 = vmatpush1.bf16.msra.mxu0 %v1539
        %2906 = vmatprep.subr.bf16.mxu0 %v1544
        %2907 = vmatpush1.bf16.msra.mxu0 %v1543
        %2908 = vmatprep.mubr.bf16.mxu0 %v2505
        %2909 = vmatmul.mubr.bf16.gmra.mrb[0].mxu0 %v2834
        %v2910 = vpop.f32.mrb[0].mxu0
        %v2911 = vadd.f32 %v1009, %v2910
        %v2912 = vpop.f32.mrb[0].mxu0
        %v2913 = vadd.f32 %v1013, %v2912
        %v2914 = vpop.f32.mrb[0].mxu0
        %v2915 = vpop.f32.mrb[0].mxu0
        %2916 = vdwg.mxu0
        %v2917 = vxor.u32 %v2870, 2147483648
        %v2918 = vmul.f32 %v2917, 1.442695
        %v2919 = vpow.pop %v2918
        %v2920 = vadd.f32 %v2919, 1.0
        %v2921 = vrcp.pop %v2920
        %v2922 = vmul.f32 1.0, %v2921
        %v2923 = vxor.u32 %v2872, 2147483648
        %v2924 = vmul.f32 %v2923, 1.442695
        %v2925 = vpow.pop %v2924
        %v2926 = vadd.f32 %v2925, 1.0
        %v2927 = vrcp.pop %v2926
        %v2928 = vmul.f32 1.0, %v2927
        %v2929 = vtanh.pop %v2911
        %v2930 = vxor.u32 %v2913, 2147483648
        %v2931 = vmul.f32 %v2930, 1.442695
        %v2932 = vpow.pop %v2931
        %v2933 = vadd.f32 %v2932, 1.0
        %v2934 = vrcp.pop %v2933
        %v2935 = vmul.f32 1.0, %v2934
        %v2936 = vmul.f32 %v2928, %v2502
        %v2937 = vmul.f32 %v2922, %v2929
        %v2938 = vadd.f32 %v2936, %v2937
        %v2939 = vtanh.pop %v2938
        %v2940 = vmul.f32 %v2935, %v2939
        %v2941 = vpack.c.bf16 %v2940, %v2940
        %2942 = vmatprep.subr.bf16.mxu0 %v1115
        %2943 = vmatpush1.bf16.msra.mxu0 %v1114
        %2944 = vmatprep.subr.bf16.mxu0 %v1119
        %2945 = vmatpush1.bf16.msra.mxu0 %v1118
        %2946 = vmatprep.subr.bf16.mxu0 %v1123
        %2947 = vmatpush1.bf16.msra.mxu0 %v1122
        %2948 = vmatprep.subr.bf16.mxu0 %v1127
        %2949 = vmatpush1.bf16.msra.mxu0 %v1126
        %2950 = vmatprep.subr.bf16.mxu0 %v1131
        %2951 = vmatpush1.bf16.msra.mxu0 %v1130
        %2952 = vmatprep.subr.bf16.mxu0 %v1135
        %2953 = vmatpush1.bf16.msra.mxu0 %v1134
        %2954 = vmatprep.subr.bf16.mxu0 %v1139
        %2955 = vmatpush1.bf16.msra.mxu0 %v1138
        %2956 = vmatprep.subr.bf16.mxu0 %v1143
        %2957 = vmatpush1.bf16.msra.mxu0 %v1142
        %2958 = vmatprep.subr.bf16.mxu0 0
        %2959 = vmatpush1.bf16.msra.mxu0 0
        %2960 = vmatprep.subr.bf16.mxu0 0
        %2961 = vmatpush1.bf16.msra.mxu0 0
        %2962 = vmatprep.subr.bf16.mxu0 0
        %2963 = vmatpush1.bf16.msra.mxu0 0
        %2964 = vmatprep.subr.bf16.mxu0 0
        %2965 = vmatpush1.bf16.msra.mxu0 0
        %2966 = vmatprep.subr.bf16.mxu0 0
        %2967 = vmatpush1.bf16.msra.mxu0 0
        %2968 = vmatprep.subr.bf16.mxu0 0
        %2969 = vmatpush1.bf16.msra.mxu0 0
        %2970 = vmatprep.subr.bf16.mxu0 0
        %2971 = vmatpush1.bf16.msra.mxu0 0
        %2972 = vmatprep.subr.bf16.mxu0 0
        %2973 = vmatpush1.bf16.msra.mxu0 0
        %2974 = vmatprep.mubr.bf16.mxu0 0
        %2975 = vmatmul.mubr.bf16.gmra.mrb[0].mxu0 %v2616
        %v2976 = vpop.f32.mrb[0].mxu0
        %v2977 = vadd.f32 0.0, %v2976
        %v2978 = vpop.f32.mrb[0].mxu0
        %v2979 = vadd.f32 0.0, %v2978
        %v2980 = vpop.f32.mrb[0].mxu0
        %v2981 = vpop.f32.mrb[0].mxu0
        %2982 = vdwg.mxu0
        %2983 = vmatprep.subr.bf16.mxu0 %v1117
        %2984 = vmatpush1.bf16.msra.mxu0 %v1116
        %2985 = vmatprep.subr.bf16.mxu0 %v1121
        %2986 = vmatpush1.bf16.msra.mxu0 %v1120
        %2987 = vmatprep.subr.bf16.mxu0 %v1125
        %2988 = vmatpush1.bf16.msra.mxu0 %v1124
        %2989 = vmatprep.subr.bf16.mxu0 %v1129
        %2990 = vmatpush1.bf16.msra.mxu0 %v1128
        %2991 = vmatprep.subr.bf16.mxu0 %v1133
        %2992 = vmatpush1.bf16.msra.mxu0 %v1132
        %2993 = vmatprep.subr.bf16.mxu0 %v1137
        %2994 = vmatpush1.bf16.msra.mxu0 %v1136
        %2995 = vmatprep.subr.bf16.mxu0 %v1141
        %2996 = vmatpush1.bf16.msra.mxu0 %v1140
        %2997 = vmatprep.subr.bf16.mxu0 %v1145
        %2998 = vmatpush1.bf16.msra.mxu0 %v1144
        %2999 = vmatprep.subr.bf16.mxu0 0
        %3000 = vmatpush1.bf16.msra.mxu0 0
        %3001 = vmatprep.subr.bf16.mxu0 0
        %3002 = vmatpush1.bf16.msra.mxu0 0
        %3003 = vmatprep.subr.bf16.mxu0 0
        %3004 = vmatpush1.bf16.msra.mxu0 0
        %3005 = vmatprep.subr.bf16.mxu0 0
        %3006 = vmatpush1.bf16.msra.mxu0 0
        %3007 = vmatprep.subr.bf16.mxu0 0
        %3008 = vmatpush1.bf16.msra.mxu0 0
        %3009 = vmatprep.subr.bf16.mxu0 0
        %3010 = vmatpush1.bf16.msra.mxu0 0
        %3011 = vmatprep.subr.bf16.mxu0 0
        %3012 = vmatpush1.bf16.msra.mxu0 0
        %3013 = vmatprep.subr.bf16.mxu0 0
        %3014 = vmatpush1.bf16.msra.mxu0 0
        %3015 = vmatprep.mubr.bf16.mxu0 0
        %3016 = vmatmul.mubr.bf16.gmra.mrb[0].mxu0 %v2616
        %v3017 = vpop.f32.mrb[0].mxu0
        %v3018 = vadd.f32 0.0, %v3017
        %v3019 = vpop.f32.mrb[0].mxu0
        %v3020 = vadd.f32 0.0, %v3019
        %v3021 = vpop.f32.mrb[0].mxu0
        %v3022 = vpop.f32.mrb[0].mxu0
        %3023 = vdwg.mxu0
        %v3024 = vadd.f32 %v949, %v2977
        %v3025 = vadd.f32 %v951, %v2979
        %v3026 = vadd.f32 %v992, %v3018
        %v3027 = vadd.f32 %v994, %v3020
        %v3028 = vxor.u32 %v3024, 2147483648
        %v3029 = vmul.f32 %v3028, 1.442695
        %v3030 = vpow.pop %v3029
        %v3031 = vadd.f32 %v3030, 1.0
        %v3032 = vrcp.pop %v3031
        %v3033 = vmul.f32 1.0, %v3032
        %v3034 = vxor.u32 %v3025, 2147483648
        %v3035 = vmul.f32 %v3034, 1.442695
        %v3036 = vpow.pop %v3035
        %v3037 = vadd.f32 %v3036, 1.0
        %v3038 = vrcp.pop %v3037
        %v3039 = vmul.f32 1.0, %v3038
        %v3040 = vtanh.pop %v3026
        %v3041 = vxor.u32 %v3027, 2147483648
        %v3042 = vmul.f32 %v3041, 1.442695
        %v3043 = vpow.pop %v3042
        %v3044 = vadd.f32 %v3043, 1.0
        %v3045 = vrcp.pop %v3044
        %v3046 = vmul.f32 1.0, %v3045
        %v3047 = vmul.f32 %v3039, %v2613
        %v3048 = vmul.f32 %v3033, %v3040
        %v3049 = vadd.f32 %v3047, %v3048
        %v3050 = vtanh.pop %v3049
        %v3051 = vmul.f32 %v3046, %v3050
        %v3052 = vpack.c.bf16 %v3051, %v3051
        %3053 = vmatprep.subr.bf16.mxu0 %v1482
        %3054 = vmatpush1.bf16.msra.mxu0 %v1481
        %3055 = vmatprep.subr.bf16.mxu0 %v1486
        %3056 = vmatpush1.bf16.msra.mxu0 %v1485
        %3057 = vmatprep.subr.bf16.mxu0 %v1490
        %3058 = vmatpush1.bf16.msra.mxu0 %v1489
        %3059 = vmatprep.subr.bf16.mxu0 %v1494
        %3060 = vmatpush1.bf16.msra.mxu0 %v1493
        %3061 = vmatprep.subr.bf16.mxu0 %v1498
        %3062 = vmatpush1.bf16.msra.mxu0 %v1497
        %3063 = vmatprep.subr.bf16.mxu0 %v1502
        %3064 = vmatpush1.bf16.msra.mxu0 %v1501
        %3065 = vmatprep.subr.bf16.mxu0 %v1506
        %3066 = vmatpush1.bf16.msra.mxu0 %v1505
        %3067 = vmatprep.subr.bf16.mxu0 %v1510
        %3068 = vmatpush1.bf16.msra.mxu0 %v1509
        %3069 = vmatprep.subr.bf16.mxu0 %v1514
        %3070 = vmatpush1.bf16.msra.mxu0 %v1513
        %3071 = vmatprep.subr.bf16.mxu0 %v1518
        %3072 = vmatpush1.bf16.msra.mxu0 %v1517
        %3073 = vmatprep.subr.bf16.mxu0 %v1522
        %3074 = vmatpush1.bf16.msra.mxu0 %v1521
        %3075 = vmatprep.subr.bf16.mxu0 %v1526
        %3076 = vmatpush1.bf16.msra.mxu0 %v1525
        %3077 = vmatprep.subr.bf16.mxu0 %v1530
        %3078 = vmatpush1.bf16.msra.mxu0 %v1529
        %3079 = vmatprep.subr.bf16.mxu0 %v1534
        %3080 = vmatpush1.bf16.msra.mxu0 %v1533
        %3081 = vmatprep.subr.bf16.mxu0 %v1538
        %3082 = vmatpush1.bf16.msra.mxu0 %v1537
        %3083 = vmatprep.subr.bf16.mxu0 %v1542
        %3084 = vmatpush1.bf16.msra.mxu0 %v1541
        %3085 = vmatprep.mubr.bf16.mxu0 %v2723
        %3086 = vmatmul.mubr.bf16.gmra.mrb[0].mxu0 %v3052
        %v3087 = vpop.f32.mrb[0].mxu0
        %v3088 = vadd.f32 %v1001, %v3087
        %v3089 = vpop.f32.mrb[0].mxu0
        %v3090 = vadd.f32 %v1005, %v3089
        %v3091 = vpop.f32.mrb[0].mxu0
        %v3092 = vpop.f32.mrb[0].mxu0
        %3093 = vdwg.mxu0
        %3094 = vmatprep.subr.bf16.mxu0 %v1484
        %3095 = vmatpush1.bf16.msra.mxu0 %v1483
        %3096 = vmatprep.subr.bf16.mxu0 %v1488
        %3097 = vmatpush1.bf16.msra.mxu0 %v1487
        %3098 = vmatprep.subr.bf16.mxu0 %v1492
        %3099 = vmatpush1.bf16.msra.mxu0 %v1491
        %3100 = vmatprep.subr.bf16.mxu0 %v1496
        %3101 = vmatpush1.bf16.msra.mxu0 %v1495
        %3102 = vmatprep.subr.bf16.mxu0 %v1500
        %3103 = vmatpush1.bf16.msra.mxu0 %v1499
        %3104 = vmatprep.subr.bf16.mxu0 %v1504
        %3105 = vmatpush1.bf16.msra.mxu0 %v1503
        %3106 = vmatprep.subr.bf16.mxu0 %v1508
        %3107 = vmatpush1.bf16.msra.mxu0 %v1507
        %3108 = vmatprep.subr.bf16.mxu0 %v1512
        %3109 = vmatpush1.bf16.msra.mxu0 %v1511
        %3110 = vmatprep.subr.bf16.mxu0 %v1516
        %3111 = vmatpush1.bf16.msra.mxu0 %v1515
        %3112 = vmatprep.subr.bf16.mxu0 %v1520
        %3113 = vmatpush1.bf16.msra.mxu0 %v1519
        %3114 = vmatprep.subr.bf16.mxu0 %v1524
        %3115 = vmatpush1.bf16.msra.mxu0 %v1523
        %3116 = vmatprep.subr.bf16.mxu0 %v1528
        %3117 = vmatpush1.bf16.msra.mxu0 %v1527
        %3118 = vmatprep.subr.bf16.mxu0 %v1532
        %3119 = vmatpush1.bf16.msra.mxu0 %v1531
        %3120 = vmatprep.subr.bf16.mxu0 %v1536
        %3121 = vmatpush1.bf16.msra.mxu0 %v1535
        %3122 = vmatprep.subr.bf16.mxu0 %v1540
        %3123 = vmatpush1.bf16.msra.mxu0 %v1539
        %3124 = vmatprep.subr.bf16.mxu0 %v1544
        %3125 = vmatpush1.bf16.msra.mxu0 %v1543
        %3126 = vmatprep.mubr.bf16.mxu0 %v2723
        %3127 = vmatmul.mubr.bf16.gmra.mrb[0].mxu0 %v3052
        %v3128 = vpop.f32.mrb[0].mxu0
        %v3129 = vadd.f32 %v1009, %v3128
        %v3130 = vpop.f32.mrb[0].mxu0
        %v3131 = vadd.f32 %v1013, %v3130
        %v3132 = vpop.f32.mrb[0].mxu0
        %v3133 = vpop.f32.mrb[0].mxu0
        %3134 = vdwg.mxu0
        %v3135 = vxor.u32 %v3088, 2147483648
        %v3136 = vmul.f32 %v3135, 1.442695
        %v3137 = vpow.pop %v3136
        %v3138 = vadd.f32 %v3137, 1.0
        %v3139 = vrcp.pop %v3138
        %v3140 = vmul.f32 1.0, %v3139
        %v3141 = vxor.u32 %v3090, 2147483648
        %v3142 = vmul.f32 %v3141, 1.442695
        %v3143 = vpow.pop %v3142
        %v3144 = vadd.f32 %v3143, 1.0
        %v3145 = vrcp.pop %v3144
        %v3146 = vmul.f32 1.0, %v3145
        %v3147 = vtanh.pop %v3129
        %v3148 = vxor.u32 %v3131, 2147483648
        %v3149 = vmul.f32 %v3148, 1.442695
        %v3150 = vpow.pop %v3149
        %v3151 = vadd.f32 %v3150, 1.0
        %v3152 = vrcp.pop %v3151
        %v3153 = vmul.f32 1.0, %v3152
        %v3154 = vmul.f32 %v3146, %v2720
        %v3155 = vmul.f32 %v3140, %v3147
        %v3156 = vadd.f32 %v3154, %v3155
        %v3157 = vtanh.pop %v3156
        %v3158 = vmul.f32 %v3153, %v3157
        %v3159 = vpack.c.bf16 %v3158, %v3158
        %3160 = vmatprep.subr.bf16.mxu0 %v1115
        %3161 = vmatpush1.bf16.msra.mxu0 %v1114
        %3162 = vmatprep.subr.bf16.mxu0 %v1119
        %3163 = vmatpush1.bf16.msra.mxu0 %v1118
        %3164 = vmatprep.subr.bf16.mxu0 %v1123
        %3165 = vmatpush1.bf16.msra.mxu0 %v1122
        %3166 = vmatprep.subr.bf16.mxu0 %v1127
        %3167 = vmatpush1.bf16.msra.mxu0 %v1126
        %3168 = vmatprep.subr.bf16.mxu0 %v1131
        %3169 = vmatpush1.bf16.msra.mxu0 %v1130
        %3170 = vmatprep.subr.bf16.mxu0 %v1135
        %3171 = vmatpush1.bf16.msra.mxu0 %v1134
        %3172 = vmatprep.subr.bf16.mxu0 %v1139
        %3173 = vmatpush1.bf16.msra.mxu0 %v1138
        %3174 = vmatprep.subr.bf16.mxu0 %v1143
        %3175 = vmatpush1.bf16.msra.mxu0 %v1142
        %3176 = vmatprep.subr.bf16.mxu0 0
        %3177 = vmatpush1.bf16.msra.mxu0 0
        %3178 = vmatprep.subr.bf16.mxu0 0
        %3179 = vmatpush1.bf16.msra.mxu0 0
        %3180 = vmatprep.subr.bf16.mxu0 0
        %3181 = vmatpush1.bf16.msra.mxu0 0
        %3182 = vmatprep.subr.bf16.mxu0 0
        %3183 = vmatpush1.bf16.msra.mxu0 0
        %3184 = vmatprep.subr.bf16.mxu0 0
        %3185 = vmatpush1.bf16.msra.mxu0 0
        %3186 = vmatprep.subr.bf16.mxu0 0
        %3187 = vmatpush1.bf16.msra.mxu0 0
        %3188 = vmatprep.subr.bf16.mxu0 0
        %3189 = vmatpush1.bf16.msra.mxu0 0
        %3190 = vmatprep.subr.bf16.mxu0 0
        %3191 = vmatpush1.bf16.msra.mxu0 0
        %3192 = vmatprep.mubr.bf16.mxu0 0
        %3193 = vmatmul.mubr.bf16.gmra.mrb[0].mxu0 %v2834
        %v3194 = vpop.f32.mrb[0].mxu0
        %v3195 = vadd.f32 0.0, %v3194
        %v3196 = vpop.f32.mrb[0].mxu0
        %v3197 = vadd.f32 0.0, %v3196
        %v3198 = vpop.f32.mrb[0].mxu0
        %v3199 = vpop.f32.mrb[0].mxu0
        %3200 = vdwg.mxu0
        %3201 = vmatprep.subr.bf16.mxu0 %v1117
        %3202 = vmatpush1.bf16.msra.mxu0 %v1116
        %3203 = vmatprep.subr.bf16.mxu0 %v1121
        %3204 = vmatpush1.bf16.msra.mxu0 %v1120
        %3205 = vmatprep.subr.bf16.mxu0 %v1125
        %3206 = vmatpush1.bf16.msra.mxu0 %v1124
        %3207 = vmatprep.subr.bf16.mxu0 %v1129
        %3208 = vmatpush1.bf16.msra.mxu0 %v1128
        %3209 = vmatprep.subr.bf16.mxu0 %v1133
        %3210 = vmatpush1.bf16.msra.mxu0 %v1132
        %3211 = vmatprep.subr.bf16.mxu0 %v1137
        %3212 = vmatpush1.bf16.msra.mxu0 %v1136
        %3213 = vmatprep.subr.bf16.mxu0 %v1141
        %3214 = vmatpush1.bf16.msra.mxu0 %v1140
        %3215 = vmatprep.subr.bf16.mxu0 %v1145
        %3216 = vmatpush1.bf16.msra.mxu0 %v1144
        %3217 = vmatprep.subr.bf16.mxu0 0
        %3218 = vmatpush1.bf16.msra.mxu0 0
        %3219 = vmatprep.subr.bf16.mxu0 0
        %3220 = vmatpush1.bf16.msra.mxu0 0
        %3221 = vmatprep.subr.bf16.mxu0 0
        %3222 = vmatpush1.bf16.msra.mxu0 0
        %3223 = vmatprep.subr.bf16.mxu0 0
        %3224 = vmatpush1.bf16.msra.mxu0 0
        %3225 = vmatprep.subr.bf16.mxu0 0
        %3226 = vmatpush1.bf16.msra.mxu0 0
        %3227 = vmatprep.subr.bf16.mxu0 0
        %3228 = vmatpush1.bf16.msra.mxu0 0
        %3229 = vmatprep.subr.bf16.mxu0 0
        %3230 = vmatpush1.bf16.msra.mxu0 0
        %3231 = vmatprep.subr.bf16.mxu0 0
        %3232 = vmatpush1.bf16.msra.mxu0 0
        %3233 = vmatprep.mubr.bf16.mxu0 0
        %3234 = vmatmul.mubr.bf16.gmra.mrb[0].mxu0 %v2834
        %v3235 = vpop.f32.mrb[0].mxu0
        %v3236 = vadd.f32 0.0, %v3235
        %v3237 = vpop.f32.mrb[0].mxu0
        %v3238 = vadd.f32 0.0, %v3237
        %v3239 = vpop.f32.mrb[0].mxu0
        %v3240 = vpop.f32.mrb[0].mxu0
        %3241 = vdwg.mxu0
        %v3242 = vadd.f32 %v945, %v3195
        %v3243 = vadd.f32 %v947, %v3197
        %v3244 = vadd.f32 %v988, %v3236
        %v3245 = vadd.f32 %v990, %v3238
        %v3246 = vxor.u32 %v3242, 2147483648
        %v3247 = vmul.f32 %v3246, 1.442695
        %v3248 = vpow.pop %v3247
        %v3249 = vadd.f32 %v3248, 1.0
        %v3250 = vrcp.pop %v3249
        %v3251 = vmul.f32 1.0, %v3250
        %v3252 = vxor.u32 %v3243, 2147483648
        %v3253 = vmul.f32 %v3252, 1.442695
        %v3254 = vpow.pop %v3253
        %v3255 = vadd.f32 %v3254, 1.0
        %v3256 = vrcp.pop %v3255
        %v3257 = vmul.f32 1.0, %v3256
        %v3258 = vtanh.pop %v3244
        %v3259 = vxor.u32 %v3245, 2147483648
        %v3260 = vmul.f32 %v3259, 1.442695
        %v3261 = vpow.pop %v3260
        %v3262 = vadd.f32 %v3261, 1.0
        %v3263 = vrcp.pop %v3262
        %v3264 = vmul.f32 1.0, %v3263
        %v3265 = vmul.f32 %v3257, %v2831
        %v3266 = vmul.f32 %v3251, %v3258
        %v3267 = vadd.f32 %v3265, %v3266
        %v3268 = vtanh.pop %v3267
        %v3269 = vmul.f32 %v3264, %v3268
        %v3270 = vpack.c.bf16 %v3269, %v3269
        %3271 = vmatprep.subr.bf16.mxu0 %v1482
        %3272 = vmatpush1.bf16.msra.mxu0 %v1481
        %3273 = vmatprep.subr.bf16.mxu0 %v1486
        %3274 = vmatpush1.bf16.msra.mxu0 %v1485
        %3275 = vmatprep.subr.bf16.mxu0 %v1490
        %3276 = vmatpush1.bf16.msra.mxu0 %v1489
        %3277 = vmatprep.subr.bf16.mxu0 %v1494
        %3278 = vmatpush1.bf16.msra.mxu0 %v1493
        %3279 = vmatprep.subr.bf16.mxu0 %v1498
        %3280 = vmatpush1.bf16.msra.mxu0 %v1497
        %3281 = vmatprep.subr.bf16.mxu0 %v1502
        %3282 = vmatpush1.bf16.msra.mxu0 %v1501
        %3283 = vmatprep.subr.bf16.mxu0 %v1506
        %3284 = vmatpush1.bf16.msra.mxu0 %v1505
        %3285 = vmatprep.subr.bf16.mxu0 %v1510
        %3286 = vmatpush1.bf16.msra.mxu0 %v1509
        %3287 = vmatprep.subr.bf16.mxu0 %v1514
        %3288 = vmatpush1.bf16.msra.mxu0 %v1513
        %3289 = vmatprep.subr.bf16.mxu0 %v1518
        %3290 = vmatpush1.bf16.msra.mxu0 %v1517
        %3291 = vmatprep.subr.bf16.mxu0 %v1522
        %3292 = vmatpush1.bf16.msra.mxu0 %v1521
        %3293 = vmatprep.subr.bf16.mxu0 %v1526
        %3294 = vmatpush1.bf16.msra.mxu0 %v1525
        %3295 = vmatprep.subr.bf16.mxu0 %v1530
        %3296 = vmatpush1.bf16.msra.mxu0 %v1529
        %3297 = vmatprep.subr.bf16.mxu0 %v1534
        %3298 = vmatpush1.bf16.msra.mxu0 %v1533
        %3299 = vmatprep.subr.bf16.mxu0 %v1538
        %3300 = vmatpush1.bf16.msra.mxu0 %v1537
        %3301 = vmatprep.subr.bf16.mxu0 %v1542
        %3302 = vmatpush1.bf16.msra.mxu0 %v1541
        %3303 = vmatprep.mubr.bf16.mxu0 %v2941
        %3304 = vmatmul.mubr.bf16.gmra.mrb[0].mxu0 %v3270
        %v3305 = vpop.f32.mrb[0].mxu0
        %v3306 = vadd.f32 %v1001, %v3305
        %v3307 = vpop.f32.mrb[0].mxu0
        %v3308 = vadd.f32 %v1005, %v3307
        %v3309 = vpop.f32.mrb[0].mxu0
        %v3310 = vpop.f32.mrb[0].mxu0
        %3311 = vdwg.mxu0
        %3312 = vmatprep.subr.bf16.mxu0 %v1484
        %3313 = vmatpush1.bf16.msra.mxu0 %v1483
        %3314 = vmatprep.subr.bf16.mxu0 %v1488
        %3315 = vmatpush1.bf16.msra.mxu0 %v1487
        %3316 = vmatprep.subr.bf16.mxu0 %v1492
        %3317 = vmatpush1.bf16.msra.mxu0 %v1491
        %3318 = vmatprep.subr.bf16.mxu0 %v1496
        %3319 = vmatpush1.bf16.msra.mxu0 %v1495
        %3320 = vmatprep.subr.bf16.mxu0 %v1500
        %3321 = vmatpush1.bf16.msra.mxu0 %v1499
        %3322 = vmatprep.subr.bf16.mxu0 %v1504
        %3323 = vmatpush1.bf16.msra.mxu0 %v1503
        %3324 = vmatprep.subr.bf16.mxu0 %v1508
        %3325 = vmatpush1.bf16.msra.mxu0 %v1507
        %3326 = vmatprep.subr.bf16.mxu0 %v1512
        %3327 = vmatpush1.bf16.msra.mxu0 %v1511
        %3328 = vmatprep.subr.bf16.mxu0 %v1516
        %3329 = vmatpush1.bf16.msra.mxu0 %v1515
        %3330 = vmatprep.subr.bf16.mxu0 %v1520
        %3331 = vmatpush1.bf16.msra.mxu0 %v1519
        %3332 = vmatprep.subr.bf16.mxu0 %v1524
        %3333 = vmatpush1.bf16.msra.mxu0 %v1523
        %3334 = vmatprep.subr.bf16.mxu0 %v1528
        %3335 = vmatpush1.bf16.msra.mxu0 %v1527
        %3336 = vmatprep.subr.bf16.mxu0 %v1532
        %3337 = vmatpush1.bf16.msra.mxu0 %v1531
        %3338 = vmatprep.subr.bf16.mxu0 %v1536
        %3339 = vmatpush1.bf16.msra.mxu0 %v1535
        %3340 = vmatprep.subr.bf16.mxu0 %v1540
        %3341 = vmatpush1.bf16.msra.mxu0 %v1539
        %3342 = vmatprep.subr.bf16.mxu0 %v1544
        %3343 = vmatpush1.bf16.msra.mxu0 %v1543
        %3344 = vmatprep.mubr.bf16.mxu0 %v2941
        %3345 = vmatmul.mubr.bf16.gmra.mrb[0].mxu0 %v3270
        %v3346 = vpop.f32.mrb[0].mxu0
        %v3347 = vadd.f32 %v1009, %v3346
        %v3348 = vpop.f32.mrb[0].mxu0
        %v3349 = vadd.f32 %v1013, %v3348
        %v3350 = vpop.f32.mrb[0].mxu0
        %v3351 = vpop.f32.mrb[0].mxu0
        %3352 = vdwg.mxu0
        %v3353 = vxor.u32 %v3306, 2147483648
        %v3354 = vmul.f32 %v3353, 1.442695
        %v3355 = vpow.pop %v3354
        %v3356 = vadd.f32 %v3355, 1.0
        %v3357 = vrcp.pop %v3356
        %v3358 = vmul.f32 1.0, %v3357
        %v3359 = vxor.u32 %v3308, 2147483648
        %v3360 = vmul.f32 %v3359, 1.442695
        %v3361 = vpow.pop %v3360
        %v3362 = vadd.f32 %v3361, 1.0
        %v3363 = vrcp.pop %v3362
        %v3364 = vmul.f32 1.0, %v3363
        %v3365 = vtanh.pop %v3347
        %v3366 = vxor.u32 %v3349, 2147483648
        %v3367 = vmul.f32 %v3366, 1.442695
        %v3368 = vpow.pop %v3367
        %v3369 = vadd.f32 %v3368, 1.0
        %v3370 = vrcp.pop %v3369
        %v3371 = vmul.f32 1.0, %v3370
        %v3372 = vmul.f32 %v3364, %v2938
        %v3373 = vmul.f32 %v3358, %v3365
        %v3374 = vadd.f32 %v3372, %v3373
        %v3375 = vtanh.pop %v3374
        %v3376 = vmul.f32 %v3371, %v3375
        %v3377 = vpack.c.bf16 %v3376, %v3376
        %3378 = vmatprep.subr.bf16.mxu0 %v1115
        %3379 = vmatpush1.bf16.msra.mxu0 %v1114
        %3380 = vmatprep.subr.bf16.mxu0 %v1119
        %3381 = vmatpush1.bf16.msra.mxu0 %v1118
        %3382 = vmatprep.subr.bf16.mxu0 %v1123
        %3383 = vmatpush1.bf16.msra.mxu0 %v1122
        %3384 = vmatprep.subr.bf16.mxu0 %v1127
        %3385 = vmatpush1.bf16.msra.mxu0 %v1126
        %3386 = vmatprep.subr.bf16.mxu0 %v1131
        %3387 = vmatpush1.bf16.msra.mxu0 %v1130
        %3388 = vmatprep.subr.bf16.mxu0 %v1135
        %3389 = vmatpush1.bf16.msra.mxu0 %v1134
        %3390 = vmatprep.subr.bf16.mxu0 %v1139
        %3391 = vmatpush1.bf16.msra.mxu0 %v1138
        %3392 = vmatprep.subr.bf16.mxu0 %v1143
        %3393 = vmatpush1.bf16.msra.mxu0 %v1142
        %3394 = vmatprep.subr.bf16.mxu0 0
        %3395 = vmatpush1.bf16.msra.mxu0 0
        %3396 = vmatprep.subr.bf16.mxu0 0
        %3397 = vmatpush1.bf16.msra.mxu0 0
        %3398 = vmatprep.subr.bf16.mxu0 0
        %3399 = vmatpush1.bf16.msra.mxu0 0
        %3400 = vmatprep.subr.bf16.mxu0 0
        %3401 = vmatpush1.bf16.msra.mxu0 0
        %3402 = vmatprep.subr.bf16.mxu0 0
        %3403 = vmatpush1.bf16.msra.mxu0 0
        %3404 = vmatprep.subr.bf16.mxu0 0
        %3405 = vmatpush1.bf16.msra.mxu0 0
        %3406 = vmatprep.subr.bf16.mxu0 0
        %3407 = vmatpush1.bf16.msra.mxu0 0
        %3408 = vmatprep.subr.bf16.mxu0 0
        %3409 = vmatpush1.bf16.msra.mxu0 0
        %3410 = vmatprep.mubr.bf16.mxu0 0
        %3411 = vmatmul.mubr.bf16.gmra.mrb[0].mxu0 %v3052
        %v3412 = vpop.f32.mrb[0].mxu0
        %v3413 = vadd.f32 0.0, %v3412
        %v3414 = vpop.f32.mrb[0].mxu0
        %v3415 = vadd.f32 0.0, %v3414
        %v3416 = vpop.f32.mrb[0].mxu0
        %v3417 = vpop.f32.mrb[0].mxu0
        %3418 = vdwg.mxu0
        %3419 = vmatprep.subr.bf16.mxu0 %v1117
        %3420 = vmatpush1.bf16.msra.mxu0 %v1116
        %3421 = vmatprep.subr.bf16.mxu0 %v1121
        %3422 = vmatpush1.bf16.msra.mxu0 %v1120
        %3423 = vmatprep.subr.bf16.mxu0 %v1125
        %3424 = vmatpush1.bf16.msra.mxu0 %v1124
        %3425 = vmatprep.subr.bf16.mxu0 %v1129
        %3426 = vmatpush1.bf16.msra.mxu0 %v1128
        %3427 = vmatprep.subr.bf16.mxu0 %v1133
        %3428 = vmatpush1.bf16.msra.mxu0 %v1132
        %3429 = vmatprep.subr.bf16.mxu0 %v1137
        %3430 = vmatpush1.bf16.msra.mxu0 %v1136
        %3431 = vmatprep.subr.bf16.mxu0 %v1141
        %3432 = vmatpush1.bf16.msra.mxu0 %v1140
        %3433 = vmatprep.subr.bf16.mxu0 %v1145
        %3434 = vmatpush1.bf16.msra.mxu0 %v1144
        %3435 = vmatprep.subr.bf16.mxu0 0
        %3436 = vmatpush1.bf16.msra.mxu0 0
        %3437 = vmatprep.subr.bf16.mxu0 0
        %3438 = vmatpush1.bf16.msra.mxu0 0
        %3439 = vmatprep.subr.bf16.mxu0 0
        %3440 = vmatpush1.bf16.msra.mxu0 0
        %3441 = vmatprep.subr.bf16.mxu0 0
        %3442 = vmatpush1.bf16.msra.mxu0 0
        %3443 = vmatprep.subr.bf16.mxu0 0
        %3444 = vmatpush1.bf16.msra.mxu0 0
        %3445 = vmatprep.subr.bf16.mxu0 0
        %3446 = vmatpush1.bf16.msra.mxu0 0
        %3447 = vmatprep.subr.bf16.mxu0 0
        %3448 = vmatpush1.bf16.msra.mxu0 0
        %3449 = vmatprep.subr.bf16.mxu0 0
        %3450 = vmatpush1.bf16.msra.mxu0 0
        %3451 = vmatprep.mubr.bf16.mxu0 0
        %3452 = vmatmul.mubr.bf16.gmra.mrb[0].mxu0 %v3052
        %v3453 = vpop.f32.mrb[0].mxu0
        %v3454 = vadd.f32 0.0, %v3453
        %v3455 = vpop.f32.mrb[0].mxu0
        %v3456 = vadd.f32 0.0, %v3455
        %v3457 = vpop.f32.mrb[0].mxu0
        %v3458 = vpop.f32.mrb[0].mxu0
        %3459 = vdwg.mxu0
        %v3460 = vadd.f32 %v949, %v3413
        %v3461 = vadd.f32 %v951, %v3415
        %v3462 = vadd.f32 %v992, %v3454
        %v3463 = vadd.f32 %v994, %v3456
        %v3464 = vxor.u32 %v3460, 2147483648
        %v3465 = vmul.f32 %v3464, 1.442695
        %v3466 = vpow.pop %v3465
        %v3467 = vadd.f32 %v3466, 1.0
        %v3468 = vrcp.pop %v3467
        %v3469 = vmul.f32 1.0, %v3468
        %v3470 = vxor.u32 %v3461, 2147483648
        %v3471 = vmul.f32 %v3470, 1.442695
        %v3472 = vpow.pop %v3471
        %v3473 = vadd.f32 %v3472, 1.0
        %v3474 = vrcp.pop %v3473
        %v3475 = vmul.f32 1.0, %v3474
        %v3476 = vtanh.pop %v3462
        %v3477 = vxor.u32 %v3463, 2147483648
        %v3478 = vmul.f32 %v3477, 1.442695
        %v3479 = vpow.pop %v3478
        %v3480 = vadd.f32 %v3479, 1.0
        %v3481 = vrcp.pop %v3480
        %v3482 = vmul.f32 1.0, %v3481
        %v3483 = vmul.f32 %v3475, %v3049
        %v3484 = vmul.f32 %v3469, %v3476
        %v3485 = vadd.f32 %v3483, %v3484
        %v3486 = vtanh.pop %v3485
        %v3487 = vmul.f32 %v3482, %v3486
        %v3488 = vpack.c.bf16 %v3487, %v3487
        %3489 = vmatprep.subr.bf16.mxu0 %v1482
        %3490 = vmatpush1.bf16.msra.mxu0 %v1481
        %3491 = vmatprep.subr.bf16.mxu0 %v1486
        %3492 = vmatpush1.bf16.msra.mxu0 %v1485
        %3493 = vmatprep.subr.bf16.mxu0 %v1490
        %3494 = vmatpush1.bf16.msra.mxu0 %v1489
        %3495 = vmatprep.subr.bf16.mxu0 %v1494
        %3496 = vmatpush1.bf16.msra.mxu0 %v1493
        %3497 = vmatprep.subr.bf16.mxu0 %v1498
        %3498 = vmatpush1.bf16.msra.mxu0 %v1497
        %3499 = vmatprep.subr.bf16.mxu0 %v1502
        %3500 = vmatpush1.bf16.msra.mxu0 %v1501
        %3501 = vmatprep.subr.bf16.mxu0 %v1506
        %3502 = vmatpush1.bf16.msra.mxu0 %v1505
        %3503 = vmatprep.subr.bf16.mxu0 %v1510
        %3504 = vmatpush1.bf16.msra.mxu0 %v1509
        %3505 = vmatprep.subr.bf16.mxu0 %v1514
        %3506 = vmatpush1.bf16.msra.mxu0 %v1513
        %3507 = vmatprep.subr.bf16.mxu0 %v1518
        %3508 = vmatpush1.bf16.msra.mxu0 %v1517
        %3509 = vmatprep.subr.bf16.mxu0 %v1522
        %3510 = vmatpush1.bf16.msra.mxu0 %v1521
        %3511 = vmatprep.subr.bf16.mxu0 %v1526
        %3512 = vmatpush1.bf16.msra.mxu0 %v1525
        %3513 = vmatprep.subr.bf16.mxu0 %v1530
        %3514 = vmatpush1.bf16.msra.mxu0 %v1529
        %3515 = vmatprep.subr.bf16.mxu0 %v1534
        %3516 = vmatpush1.bf16.msra.mxu0 %v1533
        %3517 = vmatprep.subr.bf16.mxu0 %v1538
        %3518 = vmatpush1.bf16.msra.mxu0 %v1537
        %3519 = vmatprep.subr.bf16.mxu0 %v1542
        %3520 = vmatpush1.bf16.msra.mxu0 %v1541
        %3521 = vmatprep.mubr.bf16.mxu0 %v3159
        %3522 = vmatmul.mubr.bf16.gmra.mrb[0].mxu0 %v3488
        %v3523 = vpop.f32.mrb[0].mxu0
        %v3524 = vadd.f32 %v1001, %v3523
        %v3525 = vpop.f32.mrb[0].mxu0
        %v3526 = vadd.f32 %v1005, %v3525
        %v3527 = vpop.f32.mrb[0].mxu0
        %v3528 = vpop.f32.mrb[0].mxu0
        %3529 = vdwg.mxu0
        %3530 = vmatprep.subr.bf16.mxu0 %v1484
        %3531 = vmatpush1.bf16.msra.mxu0 %v1483
        %3532 = vmatprep.subr.bf16.mxu0 %v1488
        %3533 = vmatpush1.bf16.msra.mxu0 %v1487
        %3534 = vmatprep.subr.bf16.mxu0 %v1492
        %3535 = vmatpush1.bf16.msra.mxu0 %v1491
        %3536 = vmatprep.subr.bf16.mxu0 %v1496
        %3537 = vmatpush1.bf16.msra.mxu0 %v1495
        %3538 = vmatprep.subr.bf16.mxu0 %v1500
        %3539 = vmatpush1.bf16.msra.mxu0 %v1499
        %3540 = vmatprep.subr.bf16.mxu0 %v1504
        %3541 = vmatpush1.bf16.msra.mxu0 %v1503
        %3542 = vmatprep.subr.bf16.mxu0 %v1508
        %3543 = vmatpush1.bf16.msra.mxu0 %v1507
        %3544 = vmatprep.subr.bf16.mxu0 %v1512
        %3545 = vmatpush1.bf16.msra.mxu0 %v1511
        %3546 = vmatprep.subr.bf16.mxu0 %v1516
        %3547 = vmatpush1.bf16.msra.mxu0 %v1515
        %3548 = vmatprep.subr.bf16.mxu0 %v1520
        %3549 = vmatpush1.bf16.msra.mxu0 %v1519
        %3550 = vmatprep.subr.bf16.mxu0 %v1524
        %3551 = vmatpush1.bf16.msra.mxu0 %v1523
        %3552 = vmatprep.subr.bf16.mxu0 %v1528
        %3553 = vmatpush1.bf16.msra.mxu0 %v1527
        %3554 = vmatprep.subr.bf16.mxu0 %v1532
        %3555 = vmatpush1.bf16.msra.mxu0 %v1531
        %3556 = vmatprep.subr.bf16.mxu0 %v1536
        %3557 = vmatpush1.bf16.msra.mxu0 %v1535
        %3558 = vmatprep.subr.bf16.mxu0 %v1540
        %3559 = vmatpush1.bf16.msra.mxu0 %v1539
        %3560 = vmatprep.subr.bf16.mxu0 %v1544
        %3561 = vmatpush1.bf16.msra.mxu0 %v1543
        %3562 = vmatprep.mubr.bf16.mxu0 %v3159
        %3563 = vmatmul.mubr.bf16.gmra.mrb[0].mxu0 %v3488
        %v3564 = vpop.f32.mrb[0].mxu0
        %v3565 = vadd.f32 %v1009, %v3564
        %v3566 = vpop.f32.mrb[0].mxu0
        %v3567 = vadd.f32 %v1013, %v3566
        %v3568 = vpop.f32.mrb[0].mxu0
        %v3569 = vpop.f32.mrb[0].mxu0
        %3570 = vdwg.mxu0
        %v3571 = vxor.u32 %v3524, 2147483648
        %v3572 = vmul.f32 %v3571, 1.442695
        %v3573 = vpow.pop %v3572
        %v3574 = vadd.f32 %v3573, 1.0
        %v3575 = vrcp.pop %v3574
        %v3576 = vmul.f32 1.0, %v3575
        %v3577 = vxor.u32 %v3526, 2147483648
        %v3578 = vmul.f32 %v3577, 1.442695
        %v3579 = vpow.pop %v3578
        %v3580 = vadd.f32 %v3579, 1.0
        %v3581 = vrcp.pop %v3580
        %v3582 = vmul.f32 1.0, %v3581
        %v3583 = vtanh.pop %v3565
        %v3584 = vxor.u32 %v3567, 2147483648
        %v3585 = vmul.f32 %v3584, 1.442695
        %v3586 = vpow.pop %v3585
        %v3587 = vadd.f32 %v3586, 1.0
        %v3588 = vrcp.pop %v3587
        %v3589 = vmul.f32 1.0, %v3588
        %v3590 = vmul.f32 %v3582, %v3156
        %v3591 = vmul.f32 %v3576, %v3583
        %v3592 = vadd.f32 %v3590, %v3591
        %v3593 = vtanh.pop %v3592
        %v3594 = vmul.f32 %v3589, %v3593
        %v3595 = vpack.c.bf16 %v3594, %v3594
        %3596 = vmatprep.subr.bf16.mxu0 %v1115
        %3597 = vmatpush1.bf16.msra.mxu0 %v1114
        %3598 = vmatprep.subr.bf16.mxu0 %v1119
        %3599 = vmatpush1.bf16.msra.mxu0 %v1118
        %3600 = vmatprep.subr.bf16.mxu0 %v1123
        %3601 = vmatpush1.bf16.msra.mxu0 %v1122
        %3602 = vmatprep.subr.bf16.mxu0 %v1127
        %3603 = vmatpush1.bf16.msra.mxu0 %v1126
        %3604 = vmatprep.subr.bf16.mxu0 %v1131
        %3605 = vmatpush1.bf16.msra.mxu0 %v1130
        %3606 = vmatprep.subr.bf16.mxu0 %v1135
        %3607 = vmatpush1.bf16.msra.mxu0 %v1134
        %3608 = vmatprep.subr.bf16.mxu0 %v1139
        %3609 = vmatpush1.bf16.msra.mxu0 %v1138
        %3610 = vmatprep.subr.bf16.mxu0 %v1143
        %3611 = vmatpush1.bf16.msra.mxu0 %v1142
        %3612 = vmatprep.subr.bf16.mxu0 0
        %3613 = vmatpush1.bf16.msra.mxu0 0
        %3614 = vmatprep.subr.bf16.mxu0 0
        %3615 = vmatpush1.bf16.msra.mxu0 0
        %3616 = vmatprep.subr.bf16.mxu0 0
        %3617 = vmatpush1.bf16.msra.mxu0 0
        %3618 = vmatprep.subr.bf16.mxu0 0
        %3619 = vmatpush1.bf16.msra.mxu0 0
        %3620 = vmatprep.subr.bf16.mxu0 0
        %3621 = vmatpush1.bf16.msra.mxu0 0
        %3622 = vmatprep.subr.bf16.mxu0 0
        %3623 = vmatpush1.bf16.msra.mxu0 0
        %3624 = vmatprep.subr.bf16.mxu0 0
        %3625 = vmatpush1.bf16.msra.mxu0 0
        %3626 = vmatprep.subr.bf16.mxu0 0
        %3627 = vmatpush1.bf16.msra.mxu0 0
        %3628 = vmatprep.mubr.bf16.mxu0 0
        %3629 = vmatmul.mubr.bf16.gmra.mrb[0].mxu0 %v3270
        %v3630 = vpop.f32.mrb[0].mxu0
        %v3631 = vadd.f32 0.0, %v3630
        %v3632 = vpop.f32.mrb[0].mxu0
        %v3633 = vadd.f32 0.0, %v3632
        %v3634 = vpop.f32.mrb[0].mxu0
        %v3635 = vpop.f32.mrb[0].mxu0
        %3636 = vdwg.mxu0
        %3637 = vmatprep.subr.bf16.mxu0 %v1117
        %3638 = vmatpush1.bf16.msra.mxu0 %v1116
        %3639 = vmatprep.subr.bf16.mxu0 %v1121
        %3640 = vmatpush1.bf16.msra.mxu0 %v1120
        %3641 = vmatprep.subr.bf16.mxu0 %v1125
        %3642 = vmatpush1.bf16.msra.mxu0 %v1124
        %3643 = vmatprep.subr.bf16.mxu0 %v1129
        %3644 = vmatpush1.bf16.msra.mxu0 %v1128
        %3645 = vmatprep.subr.bf16.mxu0 %v1133
        %3646 = vmatpush1.bf16.msra.mxu0 %v1132
        %3647 = vmatprep.subr.bf16.mxu0 %v1137
        %3648 = vmatpush1.bf16.msra.mxu0 %v1136
        %3649 = vmatprep.subr.bf16.mxu0 %v1141
        %3650 = vmatpush1.bf16.msra.mxu0 %v1140
        %3651 = vmatprep.subr.bf16.mxu0 %v1145
        %3652 = vmatpush1.bf16.msra.mxu0 %v1144
        %3653 = vmatprep.subr.bf16.mxu0 0
        %3654 = vmatpush1.bf16.msra.mxu0 0
        %3655 = vmatprep.subr.bf16.mxu0 0
        %3656 = vmatpush1.bf16.msra.mxu0 0
        %3657 = vmatprep.subr.bf16.mxu0 0
        %3658 = vmatpush1.bf16.msra.mxu0 0
        %3659 = vmatprep.subr.bf16.mxu0 0
        %3660 = vmatpush1.bf16.msra.mxu0 0
        %3661 = vmatprep.subr.bf16.mxu0 0
        %3662 = vmatpush1.bf16.msra.mxu0 0
        %3663 = vmatprep.subr.bf16.mxu0 0
        %3664 = vmatpush1.bf16.msra.mxu0 0
        %3665 = vmatprep.subr.bf16.mxu0 0
        %3666 = vmatpush1.bf16.msra.mxu0 0
        %3667 = vmatprep.subr.bf16.mxu0 0
        %3668 = vmatpush1.bf16.msra.mxu0 0
        %3669 = vmatprep.mubr.bf16.mxu0 0
        %3670 = vmatmul.mubr.bf16.gmra.mrb[0].mxu0 %v3270
        %v3671 = vpop.f32.mrb[0].mxu0
        %v3672 = vadd.f32 0.0, %v3671
        %v3673 = vpop.f32.mrb[0].mxu0
        %v3674 = vadd.f32 0.0, %v3673
        %v3675 = vpop.f32.mrb[0].mxu0
        %v3676 = vpop.f32.mrb[0].mxu0
        %3677 = vdwg.mxu0
        %v3678 = vadd.f32 %v945, %v3631
        %v3679 = vadd.f32 %v947, %v3633
        %v3680 = vadd.f32 %v988, %v3672
        %v3681 = vadd.f32 %v990, %v3674
        %v3682 = vxor.u32 %v3678, 2147483648
        %v3683 = vmul.f32 %v3682, 1.442695
        %v3684 = vpow.pop %v3683
        %v3685 = vadd.f32 %v3684, 1.0
        %v3686 = vrcp.pop %v3685
        %v3687 = vmul.f32 1.0, %v3686
        %v3688 = vxor.u32 %v3679, 2147483648
        %v3689 = vmul.f32 %v3688, 1.442695
        %v3690 = vpow.pop %v3689
        %v3691 = vadd.f32 %v3690, 1.0
        %v3692 = vrcp.pop %v3691
        %v3693 = vmul.f32 1.0, %v3692
        %v3694 = vtanh.pop %v3680
        %v3695 = vxor.u32 %v3681, 2147483648
        %v3696 = vmul.f32 %v3695, 1.442695
        %v3697 = vpow.pop %v3696
        %v3698 = vadd.f32 %v3697, 1.0
        %v3699 = vrcp.pop %v3698
        %v3700 = vmul.f32 1.0, %v3699
        %v3701 = vmul.f32 %v3693, %v3267
        %v3702 = vmul.f32 %v3687, %v3694
        %v3703 = vadd.f32 %v3701, %v3702
        %v3704 = vtanh.pop %v3703
        %v3705 = vmul.f32 %v3700, %v3704
        %v3706 = vpack.c.bf16 %v3705, %v3705
        %3707 = vmatprep.subr.bf16.mxu0 %v1482
        %3708 = vmatpush1.bf16.msra.mxu0 %v1481
        %3709 = vmatprep.subr.bf16.mxu0 %v1486
        %3710 = vmatpush1.bf16.msra.mxu0 %v1485
        %3711 = vmatprep.subr.bf16.mxu0 %v1490
        %3712 = vmatpush1.bf16.msra.mxu0 %v1489
        %3713 = vmatprep.subr.bf16.mxu0 %v1494
        %3714 = vmatpush1.bf16.msra.mxu0 %v1493
        %3715 = vmatprep.subr.bf16.mxu0 %v1498
        %3716 = vmatpush1.bf16.msra.mxu0 %v1497
        %3717 = vmatprep.subr.bf16.mxu0 %v1502
        %3718 = vmatpush1.bf16.msra.mxu0 %v1501
        %3719 = vmatprep.subr.bf16.mxu0 %v1506
        %3720 = vmatpush1.bf16.msra.mxu0 %v1505
        %3721 = vmatprep.subr.bf16.mxu0 %v1510
        %3722 = vmatpush1.bf16.msra.mxu0 %v1509
        %3723 = vmatprep.subr.bf16.mxu0 %v1514
        %3724 = vmatpush1.bf16.msra.mxu0 %v1513
        %3725 = vmatprep.subr.bf16.mxu0 %v1518
        %3726 = vmatpush1.bf16.msra.mxu0 %v1517
        %3727 = vmatprep.subr.bf16.mxu0 %v1522
        %3728 = vmatpush1.bf16.msra.mxu0 %v1521
        %3729 = vmatprep.subr.bf16.mxu0 %v1526
        %3730 = vmatpush1.bf16.msra.mxu0 %v1525
        %3731 = vmatprep.subr.bf16.mxu0 %v1530
        %3732 = vmatpush1.bf16.msra.mxu0 %v1529
        %3733 = vmatprep.subr.bf16.mxu0 %v1534
        %3734 = vmatpush1.bf16.msra.mxu0 %v1533
        %3735 = vmatprep.subr.bf16.mxu0 %v1538
        %3736 = vmatpush1.bf16.msra.mxu0 %v1537
        %3737 = vmatprep.subr.bf16.mxu0 %v1542
        %3738 = vmatpush1.bf16.msra.mxu0 %v1541
        %3739 = vmatprep.mubr.bf16.mxu0 %v3377
        %3740 = vmatmul.mubr.bf16.gmra.mrb[0].mxu0 %v3706
        %v3741 = vpop.f32.mrb[0].mxu0
        %v3742 = vadd.f32 %v1001, %v3741
        %v3743 = vpop.f32.mrb[0].mxu0
        %v3744 = vadd.f32 %v1005, %v3743
        %v3745 = vpop.f32.mrb[0].mxu0
        %v3746 = vpop.f32.mrb[0].mxu0
        %3747 = vdwg.mxu0
        %3748 = vmatprep.subr.bf16.mxu0 %v1484
        %3749 = vmatpush1.bf16.msra.mxu0 %v1483
        %3750 = vmatprep.subr.bf16.mxu0 %v1488
        %3751 = vmatpush1.bf16.msra.mxu0 %v1487
        %3752 = vmatprep.subr.bf16.mxu0 %v1492
        %3753 = vmatpush1.bf16.msra.mxu0 %v1491
        %3754 = vmatprep.subr.bf16.mxu0 %v1496
        %3755 = vmatpush1.bf16.msra.mxu0 %v1495
        %3756 = vmatprep.subr.bf16.mxu0 %v1500
        %3757 = vmatpush1.bf16.msra.mxu0 %v1499
        %3758 = vmatprep.subr.bf16.mxu0 %v1504
        %3759 = vmatpush1.bf16.msra.mxu0 %v1503
        %3760 = vmatprep.subr.bf16.mxu0 %v1508
        %3761 = vmatpush1.bf16.msra.mxu0 %v1507
        %3762 = vmatprep.subr.bf16.mxu0 %v1512
        %3763 = vmatpush1.bf16.msra.mxu0 %v1511
        %3764 = vmatprep.subr.bf16.mxu0 %v1516
        %3765 = vmatpush1.bf16.msra.mxu0 %v1515
        %3766 = vmatprep.subr.bf16.mxu0 %v1520
        %3767 = vmatpush1.bf16.msra.mxu0 %v1519
        %3768 = vmatprep.subr.bf16.mxu0 %v1524
        %3769 = vmatpush1.bf16.msra.mxu0 %v1523
        %3770 = vmatprep.subr.bf16.mxu0 %v1528
        %3771 = vmatpush1.bf16.msra.mxu0 %v1527
        %3772 = vmatprep.subr.bf16.mxu0 %v1532
        %3773 = vmatpush1.bf16.msra.mxu0 %v1531
        %3774 = vmatprep.subr.bf16.mxu0 %v1536
        %3775 = vmatpush1.bf16.msra.mxu0 %v1535
        %3776 = vmatprep.subr.bf16.mxu0 %v1540
        %3777 = vmatpush1.bf16.msra.mxu0 %v1539
        %3778 = vmatprep.subr.bf16.mxu0 %v1544
        %3779 = vmatpush1.bf16.msra.mxu0 %v1543
        %3780 = vmatprep.mubr.bf16.mxu0 %v3377
        %3781 = vmatmul.mubr.bf16.gmra.mrb[0].mxu0 %v3706
        %v3782 = vpop.f32.mrb[0].mxu0
        %v3783 = vadd.f32 %v1009, %v3782
        %v3784 = vpop.f32.mrb[0].mxu0
        %v3785 = vadd.f32 %v1013, %v3784
        %v3786 = vpop.f32.mrb[0].mxu0
        %v3787 = vpop.f32.mrb[0].mxu0
        %3788 = vdwg.mxu0
        %v3789 = vxor.u32 %v3742, 2147483648
        %v3790 = vmul.f32 %v3789, 1.442695
        %v3791 = vpow.pop %v3790
        %v3792 = vadd.f32 %v3791, 1.0
        %v3793 = vrcp.pop %v3792
        %v3794 = vmul.f32 1.0, %v3793
        %v3795 = vxor.u32 %v3744, 2147483648
        %v3796 = vmul.f32 %v3795, 1.442695
        %v3797 = vpow.pop %v3796
        %v3798 = vadd.f32 %v3797, 1.0
        %v3799 = vrcp.pop %v3798
        %v3800 = vmul.f32 1.0, %v3799
        %v3801 = vtanh.pop %v3783
        %v3802 = vxor.u32 %v3785, 2147483648
        %v3803 = vmul.f32 %v3802, 1.442695
        %v3804 = vpow.pop %v3803
        %v3805 = vadd.f32 %v3804, 1.0
        %v3806 = vrcp.pop %v3805
        %v3807 = vmul.f32 1.0, %v3806
        %v3808 = vmul.f32 %v3800, %v3374
        %v3809 = vmul.f32 %v3794, %v3801
        %v3810 = vadd.f32 %v3808, %v3809
        %v3811 = vtanh.pop %v3810
        %v3812 = vmul.f32 %v3807, %v3811
        %v3813 = vpack.c.bf16 %v3812, %v3812
        %3814 = vmatprep.subr.bf16.mxu0 %v1115
        %3815 = vmatpush1.bf16.msra.mxu0 %v1114
        %3816 = vmatprep.subr.bf16.mxu0 %v1119
        %3817 = vmatpush1.bf16.msra.mxu0 %v1118
        %3818 = vmatprep.subr.bf16.mxu0 %v1123
        %3819 = vmatpush1.bf16.msra.mxu0 %v1122
        %3820 = vmatprep.subr.bf16.mxu0 %v1127
        %3821 = vmatpush1.bf16.msra.mxu0 %v1126
        %3822 = vmatprep.subr.bf16.mxu0 %v1131
        %3823 = vmatpush1.bf16.msra.mxu0 %v1130
        %3824 = vmatprep.subr.bf16.mxu0 %v1135
        %3825 = vmatpush1.bf16.msra.mxu0 %v1134
        %3826 = vmatprep.subr.bf16.mxu0 %v1139
        %3827 = vmatpush1.bf16.msra.mxu0 %v1138
        %3828 = vmatprep.subr.bf16.mxu0 %v1143
        %3829 = vmatpush1.bf16.msra.mxu0 %v1142
        %3830 = vmatprep.subr.bf16.mxu0 0
        %3831 = vmatpush1.bf16.msra.mxu0 0
        %3832 = vmatprep.subr.bf16.mxu0 0
        %3833 = vmatpush1.bf16.msra.mxu0 0
        %3834 = vmatprep.subr.bf16.mxu0 0
        %3835 = vmatpush1.bf16.msra.mxu0 0
        %3836 = vmatprep.subr.bf16.mxu0 0
        %3837 = vmatpush1.bf16.msra.mxu0 0
        %3838 = vmatprep.subr.bf16.mxu0 0
        %3839 = vmatpush1.bf16.msra.mxu0 0
        %3840 = vmatprep.subr.bf16.mxu0 0
        %3841 = vmatpush1.bf16.msra.mxu0 0
        %3842 = vmatprep.subr.bf16.mxu0 0
        %3843 = vmatpush1.bf16.msra.mxu0 0
        %3844 = vmatprep.subr.bf16.mxu0 0
        %3845 = vmatpush1.bf16.msra.mxu0 0
        %3846 = vmatprep.mubr.bf16.mxu0 0
        %3847 = vmatmul.mubr.bf16.gmra.mrb[0].mxu0 %v3488
        %v3848 = vpop.f32.mrb[0].mxu0
        %v3849 = vadd.f32 0.0, %v3848
        %v3850 = vpop.f32.mrb[0].mxu0
        %v3851 = vadd.f32 0.0, %v3850
        %v3852 = vpop.f32.mrb[0].mxu0
        %v3853 = vpop.f32.mrb[0].mxu0
        %3854 = vdwg.mxu0
        %3855 = vmatprep.subr.bf16.mxu0 %v1117
        %3856 = vmatpush1.bf16.msra.mxu0 %v1116
        %3857 = vmatprep.subr.bf16.mxu0 %v1121
        %3858 = vmatpush1.bf16.msra.mxu0 %v1120
        %3859 = vmatprep.subr.bf16.mxu0 %v1125
        %3860 = vmatpush1.bf16.msra.mxu0 %v1124
        %3861 = vmatprep.subr.bf16.mxu0 %v1129
        %3862 = vmatpush1.bf16.msra.mxu0 %v1128
        %3863 = vmatprep.subr.bf16.mxu0 %v1133
        %3864 = vmatpush1.bf16.msra.mxu0 %v1132
        %3865 = vmatprep.subr.bf16.mxu0 %v1137
        %3866 = vmatpush1.bf16.msra.mxu0 %v1136
        %3867 = vmatprep.subr.bf16.mxu0 %v1141
        %3868 = vmatpush1.bf16.msra.mxu0 %v1140
        %3869 = vmatprep.subr.bf16.mxu0 %v1145
        %3870 = vmatpush1.bf16.msra.mxu0 %v1144
        %3871 = vmatprep.subr.bf16.mxu0 0
        %3872 = vmatpush1.bf16.msra.mxu0 0
        %3873 = vmatprep.subr.bf16.mxu0 0
        %3874 = vmatpush1.bf16.msra.mxu0 0
        %3875 = vmatprep.subr.bf16.mxu0 0
        %3876 = vmatpush1.bf16.msra.mxu0 0
        %3877 = vmatprep.subr.bf16.mxu0 0
        %3878 = vmatpush1.bf16.msra.mxu0 0
        %3879 = vmatprep.subr.bf16.mxu0 0
        %3880 = vmatpush1.bf16.msra.mxu0 0
        %3881 = vmatprep.subr.bf16.mxu0 0
        %3882 = vmatpush1.bf16.msra.mxu0 0
        %3883 = vmatprep.subr.bf16.mxu0 0
        %3884 = vmatpush1.bf16.msra.mxu0 0
        %3885 = vmatprep.subr.bf16.mxu0 0
        %3886 = vmatpush1.bf16.msra.mxu0 0
        %3887 = vmatprep.mubr.bf16.mxu0 0
        %3888 = vmatmul.mubr.bf16.gmra.mrb[0].mxu0 %v3488
        %v3889 = vpop.f32.mrb[0].mxu0
        %v3890 = vadd.f32 0.0, %v3889
        %v3891 = vpop.f32.mrb[0].mxu0
        %v3892 = vadd.f32 0.0, %v3891
        %v3893 = vpop.f32.mrb[0].mxu0
        %v3894 = vpop.f32.mrb[0].mxu0
        %3895 = vdwg.mxu0
        %v3896 = vadd.f32 %v949, %v3849
        %v3897 = vadd.f32 %v951, %v3851
        %v3898 = vadd.f32 %v992, %v3890
        %v3899 = vadd.f32 %v994, %v3892
        %v3900 = vxor.u32 %v3896, 2147483648
        %v3901 = vmul.f32 %v3900, 1.442695
        %v3902 = vpow.pop %v3901
        %v3903 = vadd.f32 %v3902, 1.0
        %v3904 = vrcp.pop %v3903
        %v3905 = vmul.f32 1.0, %v3904
        %v3906 = vxor.u32 %v3897, 2147483648
        %v3907 = vmul.f32 %v3906, 1.442695
        %v3908 = vpow.pop %v3907
        %v3909 = vadd.f32 %v3908, 1.0
        %v3910 = vrcp.pop %v3909
        %v3911 = vmul.f32 1.0, %v3910
        %v3912 = vtanh.pop %v3898
        %v3913 = vxor.u32 %v3899, 2147483648
        %v3914 = vmul.f32 %v3913, 1.442695
        %v3915 = vpow.pop %v3914
        %v3916 = vadd.f32 %v3915, 1.0
        %v3917 = vrcp.pop %v3916
        %v3918 = vmul.f32 1.0, %v3917
        %v3919 = vmul.f32 %v3911, %v3485
        %v3920 = vmul.f32 %v3905, %v3912
        %v3921 = vadd.f32 %v3919, %v3920
        %v3922 = vtanh.pop %v3921
        %v3923 = vmul.f32 %v3918, %v3922
        %v3924 = vpack.c.bf16 %v3923, %v3923
        %3925 = vmatprep.subr.bf16.mxu0 %v1482
        %3926 = vmatpush1.bf16.msra.mxu0 %v1481
        %3927 = vmatprep.subr.bf16.mxu0 %v1486
        %3928 = vmatpush1.bf16.msra.mxu0 %v1485
        %3929 = vmatprep.subr.bf16.mxu0 %v1490
        %3930 = vmatpush1.bf16.msra.mxu0 %v1489
        %3931 = vmatprep.subr.bf16.mxu0 %v1494
        %3932 = vmatpush1.bf16.msra.mxu0 %v1493
        %3933 = vmatprep.subr.bf16.mxu0 %v1498
        %3934 = vmatpush1.bf16.msra.mxu0 %v1497
        %3935 = vmatprep.subr.bf16.mxu0 %v1502
        %3936 = vmatpush1.bf16.msra.mxu0 %v1501
        %3937 = vmatprep.subr.bf16.mxu0 %v1506
        %3938 = vmatpush1.bf16.msra.mxu0 %v1505
        %3939 = vmatprep.subr.bf16.mxu0 %v1510
        %3940 = vmatpush1.bf16.msra.mxu0 %v1509
        %3941 = vmatprep.subr.bf16.mxu0 %v1514
        %3942 = vmatpush1.bf16.msra.mxu0 %v1513
        %3943 = vmatprep.subr.bf16.mxu0 %v1518
        %3944 = vmatpush1.bf16.msra.mxu0 %v1517
        %3945 = vmatprep.subr.bf16.mxu0 %v1522
        %3946 = vmatpush1.bf16.msra.mxu0 %v1521
        %3947 = vmatprep.subr.bf16.mxu0 %v1526
        %3948 = vmatpush1.bf16.msra.mxu0 %v1525
        %3949 = vmatprep.subr.bf16.mxu0 %v1530
        %3950 = vmatpush1.bf16.msra.mxu0 %v1529
        %3951 = vmatprep.subr.bf16.mxu0 %v1534
        %3952 = vmatpush1.bf16.msra.mxu0 %v1533
        %3953 = vmatprep.subr.bf16.mxu0 %v1538
        %3954 = vmatpush1.bf16.msra.mxu0 %v1537
        %3955 = vmatprep.subr.bf16.mxu0 %v1542
        %3956 = vmatpush1.bf16.msra.mxu0 %v1541
        %3957 = vmatprep.mubr.bf16.mxu0 %v3595
        %3958 = vmatmul.mubr.bf16.gmra.mrb[0].mxu0 %v3924
        %v3959 = vpop.f32.mrb[0].mxu0
        %v3960 = vadd.f32 %v1001, %v3959
        %v3961 = vpop.f32.mrb[0].mxu0
        %v3962 = vadd.f32 %v1005, %v3961
        %v3963 = vpop.f32.mrb[0].mxu0
        %v3964 = vpop.f32.mrb[0].mxu0
        %3965 = vdwg.mxu0
        %3966 = vmatprep.subr.bf16.mxu0 %v1484
        %3967 = vmatpush1.bf16.msra.mxu0 %v1483
        %3968 = vmatprep.subr.bf16.mxu0 %v1488
        %3969 = vmatpush1.bf16.msra.mxu0 %v1487
        %3970 = vmatprep.subr.bf16.mxu0 %v1492
        %3971 = vmatpush1.bf16.msra.mxu0 %v1491
        %3972 = vmatprep.subr.bf16.mxu0 %v1496
        %3973 = vmatpush1.bf16.msra.mxu0 %v1495
        %3974 = vmatprep.subr.bf16.mxu0 %v1500
        %3975 = vmatpush1.bf16.msra.mxu0 %v1499
        %3976 = vmatprep.subr.bf16.mxu0 %v1504
        %3977 = vmatpush1.bf16.msra.mxu0 %v1503
        %3978 = vmatprep.subr.bf16.mxu0 %v1508
        %3979 = vmatpush1.bf16.msra.mxu0 %v1507
        %3980 = vmatprep.subr.bf16.mxu0 %v1512
        %3981 = vmatpush1.bf16.msra.mxu0 %v1511
        %3982 = vmatprep.subr.bf16.mxu0 %v1516
        %3983 = vmatpush1.bf16.msra.mxu0 %v1515
        %3984 = vmatprep.subr.bf16.mxu0 %v1520
        %3985 = vmatpush1.bf16.msra.mxu0 %v1519
        %3986 = vmatprep.subr.bf16.mxu0 %v1524
        %3987 = vmatpush1.bf16.msra.mxu0 %v1523
        %3988 = vmatprep.subr.bf16.mxu0 %v1528
        %3989 = vmatpush1.bf16.msra.mxu0 %v1527
        %3990 = vmatprep.subr.bf16.mxu0 %v1532
        %3991 = vmatpush1.bf16.msra.mxu0 %v1531
        %3992 = vmatprep.subr.bf16.mxu0 %v1536
        %3993 = vmatpush1.bf16.msra.mxu0 %v1535
        %3994 = vmatprep.subr.bf16.mxu0 %v1540
        %3995 = vmatpush1.bf16.msra.mxu0 %v1539
        %3996 = vmatprep.subr.bf16.mxu0 %v1544
        %3997 = vmatpush1.bf16.msra.mxu0 %v1543
        %3998 = vmatprep.mubr.bf16.mxu0 %v3595
        %3999 = vmatmul.mubr.bf16.gmra.mrb[0].mxu0 %v3924
        %v4000 = vpop.f32.mrb[0].mxu0
        %v4001 = vadd.f32 %v1009, %v4000
        %v4002 = vpop.f32.mrb[0].mxu0
        %v4003 = vadd.f32 %v1013, %v4002
        %v4004 = vpop.f32.mrb[0].mxu0
        %v4005 = vpop.f32.mrb[0].mxu0
        %4006 = vdwg.mxu0
        %v4007 = vxor.u32 %v3960, 2147483648
        %v4008 = vmul.f32 %v4007, 1.442695
        %v4009 = vpow.pop %v4008
        %v4010 = vadd.f32 %v4009, 1.0
        %v4011 = vrcp.pop %v4010
        %v4012 = vmul.f32 1.0, %v4011
        %v4013 = vxor.u32 %v3962, 2147483648
        %v4014 = vmul.f32 %v4013, 1.442695
        %v4015 = vpow.pop %v4014
        %v4016 = vadd.f32 %v4015, 1.0
        %v4017 = vrcp.pop %v4016
        %v4018 = vmul.f32 1.0, %v4017
        %v4019 = vtanh.pop %v4001
        %v4020 = vxor.u32 %v4003, 2147483648
        %v4021 = vmul.f32 %v4020, 1.442695
        %v4022 = vpow.pop %v4021
        %v4023 = vadd.f32 %v4022, 1.0
        %v4024 = vrcp.pop %v4023
        %v4025 = vmul.f32 1.0, %v4024
        %v4026 = vmul.f32 %v4018, %v3592
        %v4027 = vmul.f32 %v4012, %v4019
        %v4028 = vadd.f32 %v4026, %v4027
        %v4029 = vtanh.pop %v4028
        %v4030 = vmul.f32 %v4025, %v4029
        %v4031 = vpack.c.bf16 %v4030, %v4030
        %4032 = vmatprep.subr.bf16.mxu0 %v1115
        %4033 = vmatpush1.bf16.msra.mxu0 %v1114
        %4034 = vmatprep.subr.bf16.mxu0 %v1119
        %4035 = vmatpush1.bf16.msra.mxu0 %v1118
        %4036 = vmatprep.subr.bf16.mxu0 %v1123
        %4037 = vmatpush1.bf16.msra.mxu0 %v1122
        %4038 = vmatprep.subr.bf16.mxu0 %v1127
        %4039 = vmatpush1.bf16.msra.mxu0 %v1126
        %4040 = vmatprep.subr.bf16.mxu0 %v1131
        %4041 = vmatpush1.bf16.msra.mxu0 %v1130
        %4042 = vmatprep.subr.bf16.mxu0 %v1135
        %4043 = vmatpush1.bf16.msra.mxu0 %v1134
        %4044 = vmatprep.subr.bf16.mxu0 %v1139
        %4045 = vmatpush1.bf16.msra.mxu0 %v1138
        %4046 = vmatprep.subr.bf16.mxu0 %v1143
        %4047 = vmatpush1.bf16.msra.mxu0 %v1142
        %4048 = vmatprep.subr.bf16.mxu0 0
        %4049 = vmatpush1.bf16.msra.mxu0 0
        %4050 = vmatprep.subr.bf16.mxu0 0
        %4051 = vmatpush1.bf16.msra.mxu0 0
        %4052 = vmatprep.subr.bf16.mxu0 0
        %4053 = vmatpush1.bf16.msra.mxu0 0
        %4054 = vmatprep.subr.bf16.mxu0 0
        %4055 = vmatpush1.bf16.msra.mxu0 0
        %4056 = vmatprep.subr.bf16.mxu0 0
        %4057 = vmatpush1.bf16.msra.mxu0 0
        %4058 = vmatprep.subr.bf16.mxu0 0
        %4059 = vmatpush1.bf16.msra.mxu0 0
        %4060 = vmatprep.subr.bf16.mxu0 0
        %4061 = vmatpush1.bf16.msra.mxu0 0
        %4062 = vmatprep.subr.bf16.mxu0 0
        %4063 = vmatpush1.bf16.msra.mxu0 0
        %4064 = vmatprep.mubr.bf16.mxu0 0
        %4065 = vmatmul.mubr.bf16.gmra.mrb[0].mxu0 %v3706
        %v4066 = vpop.f32.mrb[0].mxu0
        %v4067 = vadd.f32 0.0, %v4066
        %v4068 = vpop.f32.mrb[0].mxu0
        %v4069 = vadd.f32 0.0, %v4068
        %v4070 = vpop.f32.mrb[0].mxu0
        %v4071 = vpop.f32.mrb[0].mxu0
        %4072 = vdwg.mxu0
        %4073 = vmatprep.subr.bf16.mxu0 %v1117
        %4074 = vmatpush1.bf16.msra.mxu0 %v1116
        %4075 = vmatprep.subr.bf16.mxu0 %v1121
        %4076 = vmatpush1.bf16.msra.mxu0 %v1120
        %4077 = vmatprep.subr.bf16.mxu0 %v1125
        %4078 = vmatpush1.bf16.msra.mxu0 %v1124
        %4079 = vmatprep.subr.bf16.mxu0 %v1129
        %4080 = vmatpush1.bf16.msra.mxu0 %v1128
        %4081 = vmatprep.subr.bf16.mxu0 %v1133
        %4082 = vmatpush1.bf16.msra.mxu0 %v1132
        %4083 = vmatprep.subr.bf16.mxu0 %v1137
        %4084 = vmatpush1.bf16.msra.mxu0 %v1136
        %4085 = vmatprep.subr.bf16.mxu0 %v1141
        %4086 = vmatpush1.bf16.msra.mxu0 %v1140
        %4087 = vmatprep.subr.bf16.mxu0 %v1145
        %4088 = vmatpush1.bf16.msra.mxu0 %v1144
        %4089 = vmatprep.subr.bf16.mxu0 0
        %4090 = vmatpush1.bf16.msra.mxu0 0
        %4091 = vmatprep.subr.bf16.mxu0 0
        %4092 = vmatpush1.bf16.msra.mxu0 0
        %4093 = vmatprep.subr.bf16.mxu0 0
        %4094 = vmatpush1.bf16.msra.mxu0 0
        %4095 = vmatprep.subr.bf16.mxu0 0
        %4096 = vmatpush1.bf16.msra.mxu0 0
        %4097 = vmatprep.subr.bf16.mxu0 0
        %4098 = vmatpush1.bf16.msra.mxu0 0
        %4099 = vmatprep.subr.bf16.mxu0 0
        %4100 = vmatpush1.bf16.msra.mxu0 0
        %4101 = vmatprep.subr.bf16.mxu0 0
        %4102 = vmatpush1.bf16.msra.mxu0 0
        %4103 = vmatprep.subr.bf16.mxu0 0
        %4104 = vmatpush1.bf16.msra.mxu0 0
        %4105 = vmatprep.mubr.bf16.mxu0 0
        %4106 = vmatmul.mubr.bf16.gmra.mrb[0].mxu0 %v3706
        %v4107 = vpop.f32.mrb[0].mxu0
        %v4108 = vadd.f32 0.0, %v4107
        %v4109 = vpop.f32.mrb[0].mxu0
        %v4110 = vadd.f32 0.0, %v4109
        %v4111 = vpop.f32.mrb[0].mxu0
        %v4112 = vpop.f32.mrb[0].mxu0
        %4113 = vdwg.mxu0
        %v4114 = vadd.f32 %v945, %v4067
        %v4115 = vadd.f32 %v947, %v4069
        %v4116 = vadd.f32 %v988, %v4108
        %v4117 = vadd.f32 %v990, %v4110
        %v4118 = vxor.u32 %v4114, 2147483648
        %v4119 = vmul.f32 %v4118, 1.442695
        %v4120 = vpow.pop %v4119
        %v4121 = vadd.f32 %v4120, 1.0
        %v4122 = vrcp.pop %v4121
        %v4123 = vmul.f32 1.0, %v4122
        %v4124 = vxor.u32 %v4115, 2147483648
        %v4125 = vmul.f32 %v4124, 1.442695
        %v4126 = vpow.pop %v4125
        %v4127 = vadd.f32 %v4126, 1.0
        %v4128 = vrcp.pop %v4127
        %v4129 = vmul.f32 1.0, %v4128
        %v4130 = vtanh.pop %v4116
        %v4131 = vxor.u32 %v4117, 2147483648
        %v4132 = vmul.f32 %v4131, 1.442695
        %v4133 = vpow.pop %v4132
        %v4134 = vadd.f32 %v4133, 1.0
        %v4135 = vrcp.pop %v4134
        %v4136 = vmul.f32 1.0, %v4135
        %v4137 = vmul.f32 %v4129, %v3703
        %v4138 = vmul.f32 %v4123, %v4130
        %v4139 = vadd.f32 %v4137, %v4138
        %v4140 = vtanh.pop %v4139
        %v4141 = vmul.f32 %v4136, %v4140
        %v4142 = vpack.c.bf16 %v4141, %v4141
        %4143 = vmatprep.subr.bf16.mxu0 %v1482
        %4144 = vmatpush1.bf16.msra.mxu0 %v1481
        %4145 = vmatprep.subr.bf16.mxu0 %v1486
        %4146 = vmatpush1.bf16.msra.mxu0 %v1485
        %4147 = vmatprep.subr.bf16.mxu0 %v1490
        %4148 = vmatpush1.bf16.msra.mxu0 %v1489
        %4149 = vmatprep.subr.bf16.mxu0 %v1494
        %4150 = vmatpush1.bf16.msra.mxu0 %v1493
        %4151 = vmatprep.subr.bf16.mxu0 %v1498
        %4152 = vmatpush1.bf16.msra.mxu0 %v1497
        %4153 = vmatprep.subr.bf16.mxu0 %v1502
        %4154 = vmatpush1.bf16.msra.mxu0 %v1501
        %4155 = vmatprep.subr.bf16.mxu0 %v1506
        %4156 = vmatpush1.bf16.msra.mxu0 %v1505
        %4157 = vmatprep.subr.bf16.mxu0 %v1510
        %4158 = vmatpush1.bf16.msra.mxu0 %v1509
        %4159 = vmatprep.subr.bf16.mxu0 %v1514
        %4160 = vmatpush1.bf16.msra.mxu0 %v1513
        %4161 = vmatprep.subr.bf16.mxu0 %v1518
        %4162 = vmatpush1.bf16.msra.mxu0 %v1517
        %4163 = vmatprep.subr.bf16.mxu0 %v1522
        %4164 = vmatpush1.bf16.msra.mxu0 %v1521
        %4165 = vmatprep.subr.bf16.mxu0 %v1526
        %4166 = vmatpush1.bf16.msra.mxu0 %v1525
        %4167 = vmatprep.subr.bf16.mxu0 %v1530
        %4168 = vmatpush1.bf16.msra.mxu0 %v1529
        %4169 = vmatprep.subr.bf16.mxu0 %v1534
        %4170 = vmatpush1.bf16.msra.mxu0 %v1533
        %4171 = vmatprep.subr.bf16.mxu0 %v1538
        %4172 = vmatpush1.bf16.msra.mxu0 %v1537
        %4173 = vmatprep.subr.bf16.mxu0 %v1542
        %4174 = vmatpush1.bf16.msra.mxu0 %v1541
        %4175 = vmatprep.mubr.bf16.mxu0 %v3813
        %4176 = vmatmul.mubr.bf16.gmra.mrb[0].mxu0 %v4142
        %v4177 = vpop.f32.mrb[0].mxu0
        %v4178 = vadd.f32 %v1001, %v4177
        %v4179 = vpop.f32.mrb[0].mxu0
        %v4180 = vadd.f32 %v1005, %v4179
        %v4181 = vpop.f32.mrb[0].mxu0
        %v4182 = vpop.f32.mrb[0].mxu0
        %4183 = vdwg.mxu0
        %4184 = vmatprep.subr.bf16.mxu0 %v1484
        %4185 = vmatpush1.bf16.msra.mxu0 %v1483
        %4186 = vmatprep.subr.bf16.mxu0 %v1488
        %4187 = vmatpush1.bf16.msra.mxu0 %v1487
        %4188 = vmatprep.subr.bf16.mxu0 %v1492
        %4189 = vmatpush1.bf16.msra.mxu0 %v1491
        %4190 = vmatprep.subr.bf16.mxu0 %v1496
        %4191 = vmatpush1.bf16.msra.mxu0 %v1495
        %4192 = vmatprep.subr.bf16.mxu0 %v1500
        %4193 = vmatpush1.bf16.msra.mxu0 %v1499
        %4194 = vmatprep.subr.bf16.mxu0 %v1504
        %4195 = vmatpush1.bf16.msra.mxu0 %v1503
        %4196 = vmatprep.subr.bf16.mxu0 %v1508
        %4197 = vmatpush1.bf16.msra.mxu0 %v1507
        %4198 = vmatprep.subr.bf16.mxu0 %v1512
        %4199 = vmatpush1.bf16.msra.mxu0 %v1511
        %4200 = vmatprep.subr.bf16.mxu0 %v1516
        %4201 = vmatpush1.bf16.msra.mxu0 %v1515
        %4202 = vmatprep.subr.bf16.mxu0 %v1520
        %4203 = vmatpush1.bf16.msra.mxu0 %v1519
        %4204 = vmatprep.subr.bf16.mxu0 %v1524
        %4205 = vmatpush1.bf16.msra.mxu0 %v1523
        %4206 = vmatprep.subr.bf16.mxu0 %v1528
        %4207 = vmatpush1.bf16.msra.mxu0 %v1527
        %4208 = vmatprep.subr.bf16.mxu0 %v1532
        %4209 = vmatpush1.bf16.msra.mxu0 %v1531
        %4210 = vmatprep.subr.bf16.mxu0 %v1536
        %4211 = vmatpush1.bf16.msra.mxu0 %v1535
        %4212 = vmatprep.subr.bf16.mxu0 %v1540
        %4213 = vmatpush1.bf16.msra.mxu0 %v1539
        %4214 = vmatprep.subr.bf16.mxu0 %v1544
        %4215 = vmatpush1.bf16.msra.mxu0 %v1543
        %4216 = vmatprep.mubr.bf16.mxu0 %v3813
        %4217 = vmatmul.mubr.bf16.gmra.mrb[0].mxu0 %v4142
        %v4218 = vpop.f32.mrb[0].mxu0
        %v4219 = vadd.f32 %v1009, %v4218
        %v4220 = vpop.f32.mrb[0].mxu0
        %v4221 = vadd.f32 %v1013, %v4220
        %v4222 = vpop.f32.mrb[0].mxu0
        %v4223 = vpop.f32.mrb[0].mxu0
        %4224 = vdwg.mxu0
        %v4225 = vxor.u32 %v4178, 2147483648
        %v4226 = vmul.f32 %v4225, 1.442695
        %v4227 = vpow.pop %v4226
        %v4228 = vadd.f32 %v4227, 1.0
        %v4229 = vrcp.pop %v4228
        %v4230 = vmul.f32 1.0, %v4229
        %v4231 = vxor.u32 %v4180, 2147483648
        %v4232 = vmul.f32 %v4231, 1.442695
        %v4233 = vpow.pop %v4232
        %v4234 = vadd.f32 %v4233, 1.0
        %v4235 = vrcp.pop %v4234
        %v4236 = vmul.f32 1.0, %v4235
        %v4237 = vtanh.pop %v4219
        %v4238 = vxor.u32 %v4221, 2147483648
        %v4239 = vmul.f32 %v4238, 1.442695
        %v4240 = vpow.pop %v4239
        %v4241 = vadd.f32 %v4240, 1.0
        %v4242 = vrcp.pop %v4241
        %v4243 = vmul.f32 1.0, %v4242
        %v4244 = vmul.f32 %v4236, %v3810
        %v4245 = vmul.f32 %v4230, %v4237
        %v4246 = vadd.f32 %v4244, %v4245
        %v4247 = vtanh.pop %v4246
        %v4248 = vmul.f32 %v4243, %v4247
        %v4249 = vpack.c.bf16 %v4248, %v4248
        %4250 = vmatprep.subr.bf16.mxu0 %v1115
        %4251 = vmatpush1.bf16.msra.mxu0 %v1114
        %4252 = vmatprep.subr.bf16.mxu0 %v1119
        %4253 = vmatpush1.bf16.msra.mxu0 %v1118
        %4254 = vmatprep.subr.bf16.mxu0 %v1123
        %4255 = vmatpush1.bf16.msra.mxu0 %v1122
        %4256 = vmatprep.subr.bf16.mxu0 %v1127
        %4257 = vmatpush1.bf16.msra.mxu0 %v1126
        %4258 = vmatprep.subr.bf16.mxu0 %v1131
        %4259 = vmatpush1.bf16.msra.mxu0 %v1130
        %4260 = vmatprep.subr.bf16.mxu0 %v1135
        %4261 = vmatpush1.bf16.msra.mxu0 %v1134
        %4262 = vmatprep.subr.bf16.mxu0 %v1139
        %4263 = vmatpush1.bf16.msra.mxu0 %v1138
        %4264 = vmatprep.subr.bf16.mxu0 %v1143
        %4265 = vmatpush1.bf16.msra.mxu0 %v1142
        %4266 = vmatprep.subr.bf16.mxu0 0
        %4267 = vmatpush1.bf16.msra.mxu0 0
        %4268 = vmatprep.subr.bf16.mxu0 0
        %4269 = vmatpush1.bf16.msra.mxu0 0
        %4270 = vmatprep.subr.bf16.mxu0 0
        %4271 = vmatpush1.bf16.msra.mxu0 0
        %4272 = vmatprep.subr.bf16.mxu0 0
        %4273 = vmatpush1.bf16.msra.mxu0 0
        %4274 = vmatprep.subr.bf16.mxu0 0
        %4275 = vmatpush1.bf16.msra.mxu0 0
        %4276 = vmatprep.subr.bf16.mxu0 0
        %4277 = vmatpush1.bf16.msra.mxu0 0
        %4278 = vmatprep.subr.bf16.mxu0 0
        %4279 = vmatpush1.bf16.msra.mxu0 0
        %4280 = vmatprep.subr.bf16.mxu0 0
        %4281 = vmatpush1.bf16.msra.mxu0 0
        %4282 = vmatprep.mubr.bf16.mxu0 0
        %4283 = vmatmul.mubr.bf16.gmra.mrb[0].mxu0 %v3924
        %v4284 = vpop.f32.mrb[0].mxu0
        %v4285 = vadd.f32 0.0, %v4284
        %v4286 = vpop.f32.mrb[0].mxu0
        %v4287 = vadd.f32 0.0, %v4286
        %v4288 = vpop.f32.mrb[0].mxu0
        %v4289 = vpop.f32.mrb[0].mxu0
        %4290 = vdwg.mxu0
        %4291 = vmatprep.subr.bf16.mxu0 %v1117
        %4292 = vmatpush1.bf16.msra.mxu0 %v1116
        %4293 = vmatprep.subr.bf16.mxu0 %v1121
        %4294 = vmatpush1.bf16.msra.mxu0 %v1120
        %4295 = vmatprep.subr.bf16.mxu0 %v1125
        %4296 = vmatpush1.bf16.msra.mxu0 %v1124
        %4297 = vmatprep.subr.bf16.mxu0 %v1129
        %4298 = vmatpush1.bf16.msra.mxu0 %v1128
        %4299 = vmatprep.subr.bf16.mxu0 %v1133
        %4300 = vmatpush1.bf16.msra.mxu0 %v1132
        %4301 = vmatprep.subr.bf16.mxu0 %v1137
        %4302 = vmatpush1.bf16.msra.mxu0 %v1136
        %4303 = vmatprep.subr.bf16.mxu0 %v1141
        %4304 = vmatpush1.bf16.msra.mxu0 %v1140
        %4305 = vmatprep.subr.bf16.mxu0 %v1145
        %4306 = vmatpush1.bf16.msra.mxu0 %v1144
        %4307 = vmatprep.subr.bf16.mxu0 0
        %4308 = vmatpush1.bf16.msra.mxu0 0
        %4309 = vmatprep.subr.bf16.mxu0 0
        %4310 = vmatpush1.bf16.msra.mxu0 0
        %4311 = vmatprep.subr.bf16.mxu0 0
        %4312 = vmatpush1.bf16.msra.mxu0 0
        %4313 = vmatprep.subr.bf16.mxu0 0
        %4314 = vmatpush1.bf16.msra.mxu0 0
        %4315 = vmatprep.subr.bf16.mxu0 0
        %4316 = vmatpush1.bf16.msra.mxu0 0
        %4317 = vmatprep.subr.bf16.mxu0 0
        %4318 = vmatpush1.bf16.msra.mxu0 0
        %4319 = vmatprep.subr.bf16.mxu0 0
        %4320 = vmatpush1.bf16.msra.mxu0 0
        %4321 = vmatprep.subr.bf16.mxu0 0
        %4322 = vmatpush1.bf16.msra.mxu0 0
        %4323 = vmatprep.mubr.bf16.mxu0 0
        %4324 = vmatmul.mubr.bf16.gmra.mrb[0].mxu0 %v3924
        %v4325 = vpop.f32.mrb[0].mxu0
        %v4326 = vadd.f32 0.0, %v4325
        %v4327 = vpop.f32.mrb[0].mxu0
        %v4328 = vadd.f32 0.0, %v4327
        %v4329 = vpop.f32.mrb[0].mxu0
        %v4330 = vpop.f32.mrb[0].mxu0
        %4331 = vdwg.mxu0
        %v4332 = vadd.f32 %v949, %v4285
        %v4333 = vadd.f32 %v951, %v4287
        %v4334 = vadd.f32 %v992, %v4326
        %v4335 = vadd.f32 %v994, %v4328
        %v4336 = vxor.u32 %v4332, 2147483648
        %v4337 = vmul.f32 %v4336, 1.442695
        %v4338 = vpow.pop %v4337
        %v4339 = vadd.f32 %v4338, 1.0
        %v4340 = vrcp.pop %v4339
        %v4341 = vmul.f32 1.0, %v4340
        %v4342 = vxor.u32 %v4333, 2147483648
        %v4343 = vmul.f32 %v4342, 1.442695
        %v4344 = vpow.pop %v4343
        %v4345 = vadd.f32 %v4344, 1.0
        %v4346 = vrcp.pop %v4345
        %v4347 = vmul.f32 1.0, %v4346
        %v4348 = vtanh.pop %v4334
        %v4349 = vxor.u32 %v4335, 2147483648
        %v4350 = vmul.f32 %v4349, 1.442695
        %v4351 = vpow.pop %v4350
        %v4352 = vadd.f32 %v4351, 1.0
        %v4353 = vrcp.pop %v4352
        %v4354 = vmul.f32 1.0, %v4353
        %v4355 = vmul.f32 %v4347, %v3921
        %v4356 = vmul.f32 %v4341, %v4348
        %v4357 = vadd.f32 %v4355, %v4356
        %v4358 = vtanh.pop %v4357
        %v4359 = vmul.f32 %v4354, %v4358
        %v4360 = vpack.c.bf16 %v4359, %v4359
        %4361 = vmatprep.subr.bf16.mxu0 %v1482
        %4362 = vmatpush1.bf16.msra.mxu0 %v1481
        %4363 = vmatprep.subr.bf16.mxu0 %v1486
        %4364 = vmatpush1.bf16.msra.mxu0 %v1485
        %4365 = vmatprep.subr.bf16.mxu0 %v1490
        %4366 = vmatpush1.bf16.msra.mxu0 %v1489
        %4367 = vmatprep.subr.bf16.mxu0 %v1494
        %4368 = vmatpush1.bf16.msra.mxu0 %v1493
        %4369 = vmatprep.subr.bf16.mxu0 %v1498
        %4370 = vmatpush1.bf16.msra.mxu0 %v1497
        %4371 = vmatprep.subr.bf16.mxu0 %v1502
        %4372 = vmatpush1.bf16.msra.mxu0 %v1501
        %4373 = vmatprep.subr.bf16.mxu0 %v1506
        %4374 = vmatpush1.bf16.msra.mxu0 %v1505
        %4375 = vmatprep.subr.bf16.mxu0 %v1510
        %4376 = vmatpush1.bf16.msra.mxu0 %v1509
        %4377 = vmatprep.subr.bf16.mxu0 %v1514
        %4378 = vmatpush1.bf16.msra.mxu0 %v1513
        %4379 = vmatprep.subr.bf16.mxu0 %v1518
        %4380 = vmatpush1.bf16.msra.mxu0 %v1517
        %4381 = vmatprep.subr.bf16.mxu0 %v1522
        %4382 = vmatpush1.bf16.msra.mxu0 %v1521
        %4383 = vmatprep.subr.bf16.mxu0 %v1526
        %4384 = vmatpush1.bf16.msra.mxu0 %v1525
        %4385 = vmatprep.subr.bf16.mxu0 %v1530
        %4386 = vmatpush1.bf16.msra.mxu0 %v1529
        %4387 = vmatprep.subr.bf16.mxu0 %v1534
        %4388 = vmatpush1.bf16.msra.mxu0 %v1533
        %4389 = vmatprep.subr.bf16.mxu0 %v1538
        %4390 = vmatpush1.bf16.msra.mxu0 %v1537
        %4391 = vmatprep.subr.bf16.mxu0 %v1542
        %4392 = vmatpush1.bf16.msra.mxu0 %v1541
        %4393 = vmatprep.mubr.bf16.mxu0 %v4031
        %4394 = vmatmul.mubr.bf16.gmra.mrb[0].mxu0 %v4360
        %v4395 = vpop.f32.mrb[0].mxu0
        %v4396 = vadd.f32 %v1001, %v4395
        %v4397 = vpop.f32.mrb[0].mxu0
        %v4398 = vadd.f32 %v1005, %v4397
        %v4399 = vpop.f32.mrb[0].mxu0
        %v4400 = vpop.f32.mrb[0].mxu0
        %4401 = vdwg.mxu0
        %4402 = vmatprep.subr.bf16.mxu0 %v1484
        %4403 = vmatpush1.bf16.msra.mxu0 %v1483
        %4404 = vmatprep.subr.bf16.mxu0 %v1488
        %4405 = vmatpush1.bf16.msra.mxu0 %v1487
        %4406 = vmatprep.subr.bf16.mxu0 %v1492
        %4407 = vmatpush1.bf16.msra.mxu0 %v1491
        %4408 = vmatprep.subr.bf16.mxu0 %v1496
        %4409 = vmatpush1.bf16.msra.mxu0 %v1495
        %4410 = vmatprep.subr.bf16.mxu0 %v1500
        %4411 = vmatpush1.bf16.msra.mxu0 %v1499
        %4412 = vmatprep.subr.bf16.mxu0 %v1504
        %4413 = vmatpush1.bf16.msra.mxu0 %v1503
        %4414 = vmatprep.subr.bf16.mxu0 %v1508
        %4415 = vmatpush1.bf16.msra.mxu0 %v1507
        %4416 = vmatprep.subr.bf16.mxu0 %v1512
        %4417 = vmatpush1.bf16.msra.mxu0 %v1511
        %4418 = vmatprep.subr.bf16.mxu0 %v1516
        %4419 = vmatpush1.bf16.msra.mxu0 %v1515
        %4420 = vmatprep.subr.bf16.mxu0 %v1520
        %4421 = vmatpush1.bf16.msra.mxu0 %v1519
        %4422 = vmatprep.subr.bf16.mxu0 %v1524
        %4423 = vmatpush1.bf16.msra.mxu0 %v1523
        %4424 = vmatprep.subr.bf16.mxu0 %v1528
        %4425 = vmatpush1.bf16.msra.mxu0 %v1527
        %4426 = vmatprep.subr.bf16.mxu0 %v1532
        %4427 = vmatpush1.bf16.msra.mxu0 %v1531
        %4428 = vmatprep.subr.bf16.mxu0 %v1536
        %4429 = vmatpush1.bf16.msra.mxu0 %v1535
        %4430 = vmatprep.subr.bf16.mxu0 %v1540
        %4431 = vmatpush1.bf16.msra.mxu0 %v1539
        %4432 = vmatprep.subr.bf16.mxu0 %v1544
        %4433 = vmatpush1.bf16.msra.mxu0 %v1543
        %4434 = vmatprep.mubr.bf16.mxu0 %v4031
        %4435 = vmatmul.mubr.bf16.gmra.mrb[0].mxu0 %v4360
        %v4436 = vpop.f32.mrb[0].mxu0
        %v4437 = vadd.f32 %v1009, %v4436
        %v4438 = vpop.f32.mrb[0].mxu0
        %v4439 = vadd.f32 %v1013, %v4438
        %v4440 = vpop.f32.mrb[0].mxu0
        %v4441 = vpop.f32.mrb[0].mxu0
        %4442 = vdwg.mxu0
        %v4443 = vxor.u32 %v4396, 2147483648
        %v4444 = vmul.f32 %v4443, 1.442695
        %v4445 = vpow.pop %v4444
        %v4446 = vadd.f32 %v4445, 1.0
        %v4447 = vrcp.pop %v4446
        %v4448 = vmul.f32 1.0, %v4447
        %v4449 = vxor.u32 %v4398, 2147483648
        %v4450 = vmul.f32 %v4449, 1.442695
        %v4451 = vpow.pop %v4450
        %v4452 = vadd.f32 %v4451, 1.0
        %v4453 = vrcp.pop %v4452
        %v4454 = vmul.f32 1.0, %v4453
        %v4455 = vtanh.pop %v4437
        %v4456 = vxor.u32 %v4439, 2147483648
        %v4457 = vmul.f32 %v4456, 1.442695
        %v4458 = vpow.pop %v4457
        %v4459 = vadd.f32 %v4458, 1.0
        %v4460 = vrcp.pop %v4459
        %v4461 = vmul.f32 1.0, %v4460
        %v4462 = vmul.f32 %v4454, %v4028
        %v4463 = vmul.f32 %v4448, %v4455
        %v4464 = vadd.f32 %v4462, %v4463
        %v4465 = vtanh.pop %v4464
        %v4466 = vmul.f32 %v4461, %v4465
        %v4467 = vpack.c.bf16 %v4466, %v4466
        %v4469 = vrot.slane %v1851, 4
        %v4471 = vrot.slane %v2287, 4
        %v4473 = vrot.slane %v2723, 4
        %v4475 = vrot.slane %v3159, 4
        %v4477 = vrot.slane %v3595, 4
        %v4479 = vrot.slane %v4031, 4
        %v4481 = vrot.slane %v4467, 4
        %vm4482 = vcmask 1043456
        %v4485 = vsel %vm4482, %v1715, %v4469
        %v4489 = vsel %vm4482, %v2069, %v4471
        %v4493 = vsel %vm4482, %v2505, %v4473
        %v4497 = vsel %vm4482, %v2941, %v4475
        %v4501 = vsel %vm4482, %v3377, %v4477
        %v4505 = vsel %vm4482, %v3813, %v4479
        %v4509 = vsel %vm4482, %v4249, %v4481
        %v4511 = vld [vmem:[%s7] sm:$0x1]
        %v4513 = vlaneseq
        %v4514 = vshrl.u32 %v4513, 7
        %v4515 = vsub.s32 0, %v4514
        %v4516 = vrot.slane %v4511, %v4515
        %v4534 = vunpack.c.l.b16 %v546
        %v4535 = vunpack.c.l.b16 %v547
        %v4536 = vunpack.c.l.b16 %v548
        %v4537 = vunpack.c.l.b16 %v549
        %v4538 = vunpack.c.l.b16 %v550
        %v4539 = vunpack.c.l.b16 %v551
        %v4540 = vunpack.c.l.b16 %v552
        %v4541 = vunpack.c.l.b16 %v553
        %v4542 = vunpack.c.l.b16 %v554
        %v4543 = vunpack.c.l.b16 %v555
        %v4544 = vunpack.c.l.b16 %v556
        %v4545 = vunpack.c.l.b16 %v557
        %v4546 = vunpack.c.l.b16 %v558
        %v4547 = vunpack.c.l.b16 %v559
        %v4548 = vunpack.c.l.b16 %v560
        %v4549 = vunpack.c.l.b16 %v561
        %v4550 = vpack.c.b16 %v4535, %v4534
        %v4551 = vpack.c.b16 %v4537, %v4536
        %v4552 = vpack.c.b16 %v4539, %v4538
        %v4553 = vpack.c.b16 %v4541, %v4540
        %v4554 = vpack.c.b16 %v4543, %v4542
        %v4555 = vpack.c.b16 %v4545, %v4544
        %v4556 = vpack.c.b16 %v4547, %v4546
        %v4557 = vpack.c.b16 %v4549, %v4548
        %4566 = vmatprep.subr.bf16.mxu0 0
        %4567 = vmatpush1.bf16.msra.mxu0 %v4550
        %4568 = vmatprep.subr.bf16.mxu0 0
        %4569 = vmatpush1.bf16.msra.mxu0 %v4551
        %4570 = vmatprep.subr.bf16.mxu0 0
        %4571 = vmatpush1.bf16.msra.mxu0 %v4552
        %4572 = vmatprep.subr.bf16.mxu0 0
        %4573 = vmatpush1.bf16.msra.mxu0 %v4553
        %4574 = vmatprep.subr.bf16.mxu0 0
        %4575 = vmatpush1.bf16.msra.mxu0 %v4554
        %4576 = vmatprep.subr.bf16.mxu0 0
        %4577 = vmatpush1.bf16.msra.mxu0 %v4555
        %4578 = vmatprep.subr.bf16.mxu0 0
        %4579 = vmatpush1.bf16.msra.mxu0 %v4556
        %4580 = vmatprep.subr.bf16.mxu0 0
        %4581 = vmatpush1.bf16.msra.mxu0 %v4557
        %4582 = vmatprep.subr.bf16.mxu0 0
        %4583 = vmatpush1.bf16.msra.mxu0 0
        %4584 = vmatprep.subr.bf16.mxu0 0
        %4585 = vmatpush1.bf16.msra.mxu0 0
        %4586 = vmatprep.subr.bf16.mxu0 0
        %4587 = vmatpush1.bf16.msra.mxu0 0
        %4588 = vmatprep.subr.bf16.mxu0 0
        %4589 = vmatpush1.bf16.msra.mxu0 0
        %4590 = vmatprep.subr.bf16.mxu0 0
        %4591 = vmatpush1.bf16.msra.mxu0 0
        %4592 = vmatprep.subr.bf16.mxu0 0
        %4593 = vmatpush1.bf16.msra.mxu0 0
        %4594 = vmatprep.subr.bf16.mxu0 0
        %4595 = vmatpush1.bf16.msra.mxu0 0
        %4596 = vmatprep.subr.bf16.mxu0 0
        %4597 = vmatpush1.bf16.msra.mxu0 0
        %4598 = vmatprep.mubr.bf16.mxu0 0
        %4599 = vmatmul.mubr.bf16.gmra.mrb[0].mxu0 %v4485
        %v4600 = vpop.f32.mrb[0].mxu0
        %v4601 = vadd.f32 %v4516, %v4600
        %v4602 = vpop.f32.mrb[0].mxu0
        %v4603 = vpop.f32.mrb[0].mxu0
        %v4604 = vadd.f32 %v4516, %v4603
        %v4605 = vpop.f32.mrb[0].mxu0
        %4606 = vmatprep.mubr.bf16.mxu0 0
        %4607 = vmatmul.mubr.bf16.gmra.mrb[0].mxu0 %v4489
        %v4608 = vpop.f32.mrb[0].mxu0
        %v4609 = vadd.f32 %v4516, %v4608
        %v4610 = vpop.f32.mrb[0].mxu0
        %v4611 = vpop.f32.mrb[0].mxu0
        %v4612 = vadd.f32 %v4516, %v4611
        %v4613 = vpop.f32.mrb[0].mxu0
        %4614 = vmatprep.mubr.bf16.mxu0 0
        %4615 = vmatmul.mubr.bf16.gmra.mrb[0].mxu0 %v4493
        %v4616 = vpop.f32.mrb[0].mxu0
        %v4617 = vadd.f32 %v4516, %v4616
        %v4618 = vpop.f32.mrb[0].mxu0
        %v4619 = vpop.f32.mrb[0].mxu0
        %v4620 = vadd.f32 %v4516, %v4619
        %v4621 = vpop.f32.mrb[0].mxu0
        %4622 = vmatprep.mubr.bf16.mxu0 0
        %4623 = vmatmul.mubr.bf16.gmra.mrb[0].mxu0 %v4497
        %v4624 = vpop.f32.mrb[0].mxu0
        %v4625 = vadd.f32 %v4516, %v4624
        %v4626 = vpop.f32.mrb[0].mxu0
        %v4627 = vpop.f32.mrb[0].mxu0
        %v4628 = vadd.f32 %v4516, %v4627
        %v4629 = vpop.f32.mrb[0].mxu0
        %4630 = vmatprep.mubr.bf16.mxu0 0
        %4631 = vmatmul.mubr.bf16.gmra.mrb[0].mxu0 %v4501
        %v4632 = vpop.f32.mrb[0].mxu0
        %v4633 = vadd.f32 %v4516, %v4632
        %v4634 = vpop.f32.mrb[0].mxu0
        %v4635 = vpop.f32.mrb[0].mxu0
        %v4636 = vadd.f32 %v4516, %v4635
        %v4637 = vpop.f32.mrb[0].mxu0
        %4638 = vmatprep.mubr.bf16.mxu0 0
        %4639 = vmatmul.mubr.bf16.gmra.mrb[0].mxu0 %v4505
        %v4640 = vpop.f32.mrb[0].mxu0
        %v4641 = vadd.f32 %v4516, %v4640
        %v4642 = vpop.f32.mrb[0].mxu0
        %v4643 = vpop.f32.mrb[0].mxu0
        %v4644 = vadd.f32 %v4516, %v4643
        %v4645 = vpop.f32.mrb[0].mxu0
        %4646 = vmatprep.mubr.bf16.mxu0 0
        %4647 = vmatmul.mubr.bf16.gmra.mrb[0].mxu0 %v4509
        %v4648 = vpop.f32.mrb[0].mxu0
        %v4649 = vadd.f32 %v4516, %v4648
        %v4650 = vpop.f32.mrb[0].mxu0
        %v4651 = vpop.f32.mrb[0].mxu0
        %v4652 = vadd.f32 %v4516, %v4651
        %v4653 = vpop.f32.mrb[0].mxu0
        %4654 = vdwg.mxu0
        %4655 = vst [vmem:[%s382] sm:$0xff] %v4601
        %4656 = vst [vmem:[%s382 + $0x8] sm:$0xff] %v4604
        %4657 = vst [vmem:[%s382 + $0x10] sm:$0xff] %v4609
        %4658 = vst [vmem:[%s382 + $0x18] sm:$0xff] %v4612
        %4659 = vst [vmem:[%s382 + $0x20] sm:$0xff] %v4617
        %4660 = vst [vmem:[%s382 + $0x28] sm:$0xff] %v4620
        %4661 = vst [vmem:[%s382 + $0x30] sm:$0xff] %v4625
        %4662 = vst [vmem:[%s382 + $0x38] sm:$0xff] %v4628
        %4663 = vst [vmem:[%s382 + $0x40] sm:$0xff] %v4633
        %4664 = vst [vmem:[%s382 + $0x48] sm:$0xff] %v4636
        %4665 = vst [vmem:[%s382 + $0x50] sm:$0xff] %v4641
        %4666 = vst [vmem:[%s382 + $0x58] sm:$0xff] %v4644
        %4667 = vst [vmem:[%s382 + $0x60] sm:$0xff] %v4649
        %4668 = vst [vmem:[%s382 + $0x68] sm:$0xff] %v4652
        %s4669 = sand.u32 %s208, 1
        %s4670 = scalar_lea.sflag [#allocation4], %s4669
        %s4671 = sand.u32 %s208, 1
        %s4672 = smul.addr %s4671, 112
        %s4673 = scalar_lea.vmem [#allocation11], %s4672
        // Predicated region
        $region73: #{tpu_custom_call.1} parent=51 // pred_check
          %p4674 = pneg %p218
        $region74: #{tpu_custom_call.1} parent=51 // pred_check_branch
          %4676 = sbr.rel (%p4674) target = $region76
        $region75: #{tpu_custom_call.1} parent=51 // pred_region
          #allocation13 [shape = 'u32[6]{0}', space=smem, size = 0x18, scoped, tag = 'DMA stride descriptor']
          %s4677 = smul.u32 2, %s27
          %s4679 = ssub.s32 1792, 1792
          %4680 = vsyncadd %s4670, %s4679
          %s4681 = smul.addr %s4677, 128
          %s4682 = scalar_lea.hbm %s8, %s4681
          %s4684 = sshll.u32 1, 14
          %s4685 = sxor.u32 4294967295, %s4684
          %s4688 = sshll.u32 7, 18
          %s4689 = sxor.u32 4294967295, %s4688
          %s4690 = sand.u32 0, %s4689
          %s4692 = sor.u32 %s4690, 0
          %s4694 = sshll.u32 3, 24
          %s4695 = sxor.u32 4294967295, %s4694
          %s4696 = sand.u32 %s4692, %s4695
          %s4698 = sor.u32 %s4696, 0
          %s4699 = sshll.u32 %s4673, 4
          %s4700 = int_to_ptr.vmem [resolvable:$true] %s4699
          %4706 = sst [smem:[#allocation13]] 256
          %s4707 = scalar_lea.smem [#allocation13], 1
          %4708 = sst [smem:[%s4707]] 512
          %s4709 = scalar_lea.smem [#allocation13], 2
          %4710 = sst [smem:[%s4709]] 2
          %s4711 = scalar_lea.smem [#allocation13], 3
          %4712 = sst [smem:[%s4711]] 128
          %s4713 = scalar_lea.smem [#allocation13], 4
          %4714 = sst [smem:[%s4713]] 128
          %s4715 = scalar_lea.smem [#allocation13], 5
          %4716 = sst [smem:[%s4715]] 8
          %4718 = dma.general %s4700, 1792, %s4682, %s4670, [#allocation12], [#allocation13], %s4698, 0
        $region76: #{tpu_custom_call.1} parent=51 // pred_fallthru
          _
      $region52: #{tpu_custom_call.1} parent=5 // pred_fallthru
        _
      %p4719 = scmp.le.s32.totalorder 2, %s22
      // Predicated region
      $region77: #{tpu_custom_call.1} parent=5 // pred_check
        %p4720 = pneg %p4719
      $region78: #{tpu_custom_call.1} parent=5 // pred_check_branch
        %4722 = sbr.rel (%p4720) target = $region80
      $region79: #{tpu_custom_call.1} parent=5 // pred_region
        %s4723 = ssub.s32 %s22, 2
        // Predicated region
        $region81: #{tpu_custom_call.1} parent=79 // pred_check
          %p4724 = pneg %p224
        $region82: #{tpu_custom_call.1} parent=79 // pred_check_branch
          %4726 = sbr.rel (%p4724) target = $region84
        $region83: #{tpu_custom_call.1} parent=79 // pred_region
          %s4727 = sand.u32 %s209, 1
          %s4728 = scalar_lea.sflag [#allocation4], %s4727
          %s4729 = sand.u32 %s209, 1
          %s4730 = smul.addr %s4729, 112
          %s4731 = scalar_lea.vmem [#allocation11], %s4730
          %4732 = dma.done %s4728, 1792
        $region84: #{tpu_custom_call.1} parent=79 // pred_fallthru
          _
      $region80: #{tpu_custom_call.1} parent=5 // pred_fallthru
        _
    $region6: #{tpu_custom_call.1} parent=1 // loop_footer
      %s26 = sadd.s32 1, %s22
    $region7: #{tpu_custom_call.1} parent=1 // loop_footer_branch
      %21 = sbr.rel target = $region3
    $region8: #{tpu_custom_call.1} parent=1 // loop_exit
      _
    %4733 = vsyncpa [#allocation3], 1
    %s4734 = scalar_lea.sflag [#allocation3], 1
    %4735 = vsyncpa %s4734, 1
    %4736 = vsyncpa [#allocation6], 1
    %4737 = vsyncpa [#allocation9], 1
    %4738 = vsyncpa [#allocation4], 1
    %s4739 = scalar_lea.sflag [#allocation4], 1
    %4740 = vsyncpa %s4739, 1

</llo_original>
